<compile_context>
chip_gen: v7x
topology: tpu7x:2x2x1
jax: 0.10.0
libtpu: 0.0.40
codegen_flags: <defaults>
</compile_context>

<pallas_src>
import functools

import jax
import jax.numpy as jnp
from jax.experimental import pallas as pl
from jax.experimental.pallas import tpu as pltpu


# ----------------------------------------------------------------------------
# Single-layer LSTM (PyTorch gate order), tiled over time chunks.
# ----------------------------------------------------------------------------
def _lstm_kernel(x_ref, wih_ref, whh_ref, b_ref, out_ref, h_ref, c_ref, gx_ref):
    Tc, B, D = x_ref.shape
    H = whh_ref.shape[0]

    # Zero initial state on the first time-chunk.
    @pl.when(pl.program_id(0) == 0)
    def _():
        h_ref[...] = jnp.zeros_like(h_ref)
        c_ref[...] = jnp.zeros_like(c_ref)

    # Hoisted input projection for this chunk: one MXU matmul (bf16 in, f32 acc).
    x_flat = x_ref[...].reshape(Tc * B, D)
    gx = jnp.dot(x_flat, wih_ref[...], preferred_element_type=jnp.float32)
    gx_ref[...] = (gx + b_ref[...]).reshape(Tc, B, 4 * H)

    whh = whh_ref[...]                                     # (H, 4H) bf16, resident

    def step(t, carry):
        h, c = carry
        gates = gx_ref[t] + jnp.dot(h.astype(whh.dtype), whh,
                                    preferred_element_type=jnp.float32)
        i_g = jax.nn.sigmoid(gates[:, 0 * H:1 * H])
        f_g = jax.nn.sigmoid(gates[:, 1 * H:2 * H])
        g_g = jnp.tanh(gates[:, 2 * H:3 * H])
        o_g = jax.nn.sigmoid(gates[:, 3 * H:4 * H])
        c_new = f_g * c + i_g * g_g
        h_new = o_g * jnp.tanh(c_new)
        out_ref[t] = h_new.astype(out_ref.dtype)
        return h_new, c_new

    h, c = jax.lax.fori_loop(0, Tc, step, (h_ref[...], c_ref[...]), unroll=True)
    h_ref[...] = h                                         # carry to next chunk
    c_ref[...] = c


def lstm_forward(x, w_ih, w_hh, bias, *, tc=4):
    T, B, D = x.shape
    H = w_hh.shape[0]
    assert T % tc == 0 and B % 8 == 0
    return pl.pallas_call(
        _lstm_kernel,
        out_shape=jax.ShapeDtypeStruct((T, B, H), jnp.float32),
        grid_spec=pltpu.PrefetchScalarGridSpec(
            num_scalar_prefetch=0,
            grid=(T // tc,),
            in_specs=[
                pl.BlockSpec((tc, B, D), lambda t: (t, 0, 0)),     # x chunk
                pl.BlockSpec((D, 4 * H), lambda t: (0, 0)),        # W_ih resident
                pl.BlockSpec((H, 4 * H), lambda t: (0, 0)),        # W_hh resident
                pl.BlockSpec((1, 4 * H), lambda t: (0, 0)),        # bias resident
            ],
            out_specs=pl.BlockSpec((tc, B, H), lambda t: (t, 0, 0)),
            scratch_shapes=[
                pltpu.VMEM((B, H), jnp.float32),                   # h carry
                pltpu.VMEM((B, H), jnp.float32),                   # c carry
                pltpu.VMEM((tc, B, 4 * H), jnp.float32),           # per-chunk gates
            ]),
        compiler_params=pltpu.CompilerParams(
            dimension_semantics=("arbitrary",),          # T chunks are sequential
            vmem_limit_bytes=32 * 1024 * 1024),
    )(x, w_ih, w_hh, bias)


# ----------------------------------------------------------------------------
# Normalized Bahdanau attention, tiled over batch; key-chunked score loop.
# Consumes/produces time-major (T, B, H); encoder-context add fused per tile.
# ----------------------------------------------------------------------------
def _attention_kernel(len_ref, q_ref, c0_ref, c1_ref, wq_ref, wk_ref,
                      nbias_ref, v_ref, out_ref, s_ref, *, tkc):
    Tq, Bb, H = q_ref.shape
    Tk = c0_ref.shape[0]
    N = wq_ref.shape[1]
    b0 = pl.program_id(0) * Bb

    # Fused encoder-context add (out0 = input0 + input1); never leaves VMEM.
    keys_tm = c0_ref[...] + c1_ref[...]                    # (Tk, Bb, H) f32

    # Small per-tile relayout to batch-first.
    q_b = jnp.transpose(q_ref[...], (1, 0, 2))             # (Bb, Tq, H)
    k_b = jnp.transpose(keys_tm, (1, 0, 2))                # (Bb, Tk, H)

    # Projections: bf16 MXU operands, f32 accumulation.
    pq = jnp.dot(q_b.reshape(Bb * Tq, H).astype(jnp.bfloat16), wq_ref[...],
                 preferred_element_type=jnp.float32).reshape(Bb, Tq, N)
    pk = jnp.dot(k_b.reshape(Bb * Tk, H).astype(jnp.bfloat16), wk_ref[...],
                 preferred_element_type=jnp.float32).reshape(Bb, Tk, N)
    pk = pk + nbias_ref[...]           # fold normalize_bias here (Tq x cheaper)

    v = v_ref[...]                                          # (1, N) f32

    # Longest sequence in this batch tile (SMEM scalar reads) -> chunk skipping.
    tile_max_len = len_ref[b0]
    for i in range(1, Bb):
        tile_max_len = jnp.maximum(tile_max_len, len_ref[b0 + i])

    # Score computation chunked over keys so the 4D tanh intermediate is
    # bounded to (Bb, Tq, tkc, N) regardless of Tk.
    s_ref[...] = jnp.zeros_like(s_ref)
    for c in range(Tk // tkc):
        lo = c * tkc

        @pl.when(lo < tile_max_len)
        def _():
            pk_c = pk[:, lo:lo + tkc, :]                    # (Bb, tkc, N)
            # TODO(synk): run this tanh/reduce in bf16 on v6e/v7x (keep f32 on v5e).
            u = jnp.tanh(pq[:, :, None, :] + pk_c[:, None, :, :])
            s_ref[:, :, lo:lo + tkc] = jnp.sum(u * v, axis=-1)

    scores = s_ref[...]                                     # (Bb, Tq, Tk)

    # Per-row length mask (PyTorch fills with -65504).
    row = jax.lax.broadcasted_iota(jnp.int32, (Bb, 1, 1), 0)
    lens = jnp.zeros((Bb, 1, 1), jnp.int32)
    for i in range(Bb):
        lens = jnp.where(row == i, len_ref[b0 + i], lens)
    k_idx = jax.lax.broadcasted_iota(jnp.int32, (Bb, Tq, Tk), 2)
    scores = jnp.where(k_idx >= lens, jnp.float32(-65504.0), scores)

    # Softmax over the key axis (exact division for reference parity).
    scores = scores - jnp.max(scores, axis=-1, keepdims=True)
    e = jnp.exp(scores)
    p = e / jnp.sum(e, axis=-1, keepdims=True)

    # context[b,q,:] = p[b,q,:] @ keys[b,:,:]   (bf16 MXU, f32 accumulate)
    ctx_b = jnp.einsum('bqk,bkh->bqh', p.astype(jnp.bfloat16),
                       k_b.astype(jnp.bfloat16),
                       preferred_element_type=jnp.float32)  # (Bb, Tq, H)
    out_ref[...] = jnp.transpose(ctx_b, (1, 0, 2)).astype(out_ref.dtype)


def attention_forward(lengths, q_tm, ctx0_tm, ctx1_tm, wq, wk, nbias, v,
                      *, bb=8, tkc=8):
    Tq, B, H = q_tm.shape
    Tk = ctx0_tm.shape[0]
    N = wq.shape[1]
    assert B % bb == 0 and bb % 8 == 0 and Tk % tkc == 0
    kernel = functools.partial(_attention_kernel, tkc=tkc)
    return pl.pallas_call(
        kernel,
        out_shape=jax.ShapeDtypeStruct((Tq, B, H), jnp.float32),
        grid_spec=pltpu.PrefetchScalarGridSpec(
            num_scalar_prefetch=1,                 # lengths -> SMEM
            grid=(B // bb,),
            in_specs=[
                pl.BlockSpec((Tq, bb, H), lambda b, lens: (0, b, 0)),  # query
                pl.BlockSpec((Tk, bb, H), lambda b, lens: (0, b, 0)),  # ctx part 0
                pl.BlockSpec((Tk, bb, H), lambda b, lens: (0, b, 0)),  # ctx part 1
                pl.BlockSpec((H, N), lambda b, lens: (0, 0)),          # Wq resident
                pl.BlockSpec((H, N), lambda b, lens: (0, 0)),          # Wk resident
                pl.BlockSpec((1, N), lambda b, lens: (0, 0)),          # norm bias
                pl.BlockSpec((1, N), lambda b, lens: (0, 0)),          # v (normalized)
            ],
            out_specs=pl.BlockSpec((Tq, bb, H), lambda b, lens: (0, b, 0)),
            scratch_shapes=[pltpu.VMEM((bb, Tq, Tk), jnp.float32)],    # scores
        ),
        compiler_params=pltpu.CompilerParams(
            dimension_semantics=("parallel",),     # batch tiles independent (v7x)
            vmem_limit_bytes=32 * 1024 * 1024),
    )(lengths, q_tm, ctx0_tm, ctx1_tm, wq, wk, nbias, v)


# ----------------------------------------------------------------------------
# Parameter init (deterministic, GNMT-style uniform(-0.1, 0.1))
# ----------------------------------------------------------------------------
def init_params(key, vocab, hidden):
    ks = jax.random.split(key, 8)
    s = 0.1
    emb = jax.random.uniform(ks[0], (vocab, hidden), jnp.float32, -s, s)
    emb = emb.at[0].set(0.0)                               # padding_idx = 0
    w_ih = jax.random.uniform(ks[1], (hidden, 4 * hidden), jnp.float32, -s, s)
    w_hh = jax.random.uniform(ks[2], (hidden, 4 * hidden), jnp.float32, -s, s)
    b_ih = jax.random.uniform(ks[3], (4 * hidden,), jnp.float32, -s, s)
    b_hh = jax.random.uniform(ks[4], (4 * hidden,), jnp.float32, -s, s)
    wq = jax.random.uniform(ks[5], (hidden, hidden), jnp.float32, -s, s)
    wk = jax.random.uniform(ks[6], (hidden, hidden), jnp.float32, -s, s)
    lin_att = jax.random.uniform(ks[7], (hidden,), jnp.float32, -s, s)
    return dict(
        embedding=emb,
        w_ih=w_ih, w_hh=w_hh, b=(b_ih + b_hh)[None, :],
        wq=wq, wk=wk, linear_att=lin_att,
        normalize_scalar=jnp.float32(1.0 / jnp.sqrt(hidden)),
        normalize_bias=jnp.zeros((hidden,), jnp.float32),
    )


# ----------------------------------------------------------------------------
# Stage5 forward (glue)
# ----------------------------------------------------------------------------
def stage5_forward(params, input1, input0, input2, input3):
    # out8 = Embedding(out3): table gather left to plain-JAX indexing.
    # TODO(synk): fuse the gather into the LSTM kernel to save the HBM round trip.
    emb = params["embedding"][input3]                      # (Tq, B, H)

    # LSTM with hidden=None (zero initial state). bf16 MXU operands, f32 math.
    rnn_out = lstm_forward(emb.astype(jnp.bfloat16),
                           params["w_ih"].astype(jnp.bfloat16),
                           params["w_hh"].astype(jnp.bfloat16),
                           params["b"])

    # Normalized attention vector: v / ||v|| * g.
    v = params["linear_att"]
    v = v / jnp.linalg.norm(v) * params["normalize_scalar"]

    lengths = input2.astype(jnp.int32)                     # (B,) -> SMEM prefetch
    attn_out = attention_forward(
        lengths, rnn_out, input0, input1,
        params["wq"].astype(jnp.bfloat16), params["wk"].astype(jnp.bfloat16),
        params["normalize_bias"][None, :], v[None, :])

    # Dropout is identity in eval mode.
    return rnn_out, attn_out                               # (out12, out11)


if __name__ == "__main__":
    key = jax.random.PRNGKey(0)
    VOCAB, H = 512, 128          # shrunk from (32320, 1024)
    B, TQ, TK = 8, 8, 16         # batch, decoder steps, encoder steps

    k1, k2, k3, k4, kp = jax.random.split(key, 5)
    params = init_params(kp, VOCAB, H)

    input1 = jax.random.normal(k1, (TK, B, H), jnp.float32)   # context part 1
    input0 = jax.random.normal(k2, (TK, B, H), jnp.float32)   # context part 2
    input2 = jax.random.randint(k3, (B,), 2, TK + 1, dtype=jnp.int32)    # lengths
    input3 = jax.random.randint(k4, (TQ, B), 0, VOCAB, dtype=jnp.int32)  # tokens

    fwd = jax.jit(stage5_forward)
    rnn_out, attn_out = fwd(params, input1, input0, input2, input3)
    jax.block_until_ready((rnn_out, attn_out))

    assert rnn_out.shape == (TQ, B, H)
    assert attn_out.shape == (TQ, B, H)
    assert bool(jnp.all(jnp.isfinite(rnn_out)))
    assert bool(jnp.all(jnp.isfinite(attn_out)))
    print("KERNEL_OK")
</pallas_src>

<mosaic_0001>
module attributes {stable_mosaic.version = 11 : i64} {
  func.func @_lstm_kernel(%arg0: i32, %arg1: memref<4x8x128xbf16, #tpu.memory_space<vmem>>, %arg2: memref<128x512xbf16, #tpu.memory_space<vmem>>, %arg3: memref<128x512xbf16, #tpu.memory_space<vmem>>, %arg4: memref<1x512xf32, #tpu.memory_space<vmem>>, %arg5: memref<4x8x128xf32, #tpu.memory_space<vmem>>, %arg6: memref<8x128xf32, #tpu.memory_space<vmem>>, %arg7: memref<8x128xf32, #tpu.memory_space<vmem>>, %arg8: memref<4x8x512xf32, #tpu.memory_space<vmem>>) attributes {dimension_semantics = [#tpu.dimension_semantics<arbitrary>], iteration_bounds = array<i64: 2>, scalar_prefetch = 0 : i64, scratch_operands = 3 : i64, tpu.core_type = #tpu.core_type<tc>, window_params = [{transform_indices = @transform_0, window_bounds = array<i64: 4, 8, 128>}, {pipeline_mode = #tpu.pipeline_mode<synchronous>, transform_indices = @transform_1, window_bounds = array<i64: 128, 512>}, {pipeline_mode = #tpu.pipeline_mode<synchronous>, transform_indices = @transform_2, window_bounds = array<i64: 128, 512>}, {pipeline_mode = #tpu.pipeline_mode<synchronous>, transform_indices = @transform_3, window_bounds = array<i64: 1, 512>}, {transform_indices = @transform_4, window_bounds = array<i64: 4, 8, 128>}]} {
    %c0_i32 = arith.constant 0 : i32
    %0 = arith.cmpi eq, %arg0, %c0_i32 : i32
    %1 = arith.extui %0 : i1 to i32
    %c0_i32_0 = arith.constant 0 : i32
    %2 = arith.cmpi ne, %1, %c0_i32_0 : i32
    scf.if %2 {
      %cst_53 = arith.constant 0.000000e+00 : f32
      %157 = vector.broadcast %cst_53 : f32 to vector<8x128xf32>
      %c0_54 = arith.constant 0 : index
      %c0_55 = arith.constant 0 : index
      %158 = vector.load %arg6[%c0_54, %c0_55] : memref<8x128xf32, #tpu.memory_space<vmem>>, vector<8x128xf32>
      tpu.vector_store %arg6[%c0_54, %c0_55], %157 {strides = array<i32>} : memref<8x128xf32, #tpu.memory_space<vmem>>, vector<8x128xf32>,
      %cst_56 = arith.constant 0.000000e+00 : f32
      %159 = vector.broadcast %cst_56 : f32 to vector<8x128xf32>
      %c0_57 = arith.constant 0 : index
      %c0_58 = arith.constant 0 : index
      %160 = vector.load %arg7[%c0_57, %c0_58] : memref<8x128xf32, #tpu.memory_space<vmem>>, vector<8x128xf32>
      tpu.vector_store %arg7[%c0_57, %c0_58], %159 {strides = array<i32>} : memref<8x128xf32, #tpu.memory_space<vmem>>, vector<8x128xf32>,
    } else {
    }
    %c0 = arith.constant 0 : index
    %c0_1 = arith.constant 0 : index
    %c0_2 = arith.constant 0 : index
    %3 = vector.load %arg1[%c0, %c0_1, %c0_2] : memref<4x8x128xbf16, #tpu.memory_space<vmem>>, vector<4x8x128xbf16>
    %4 = vector.shape_cast %3 : vector<4x8x128xbf16> to vector<32x128xbf16>
    %c0_3 = arith.constant 0 : index
    %c0_4 = arith.constant 0 : index
    %5 = vector.load %arg2[%c0_3, %c0_4] : memref<128x512xbf16, #tpu.memory_space<vmem>>, vector<128x512xbf16>
    %cst = arith.constant dense<0.000000e+00> : vector<32x512xf32>
    %6 = tpu.matmul %4, %5, %cst {dimension_numbers = #tpu.dot_dimension_numbers<[1], [0], [0], [1], [0, 0, 1, 1], [], []>} : vector<32x128xbf16>, vector<128x512xbf16>, vector<32x512xf32> -> vector<32x512xf32>
    %c0_5 = arith.constant 0 : index
    %c0_6 = arith.constant 0 : index
    %7 = vector.load %arg4[%c0_5, %c0_6] : memref<1x512xf32, #tpu.memory_space<vmem>>, vector<1x512xf32>
    %8 = vector.broadcast %7 : vector<1x512xf32> to vector<32x512xf32>
    %9 = arith.addf %6, %8 : vector<32x512xf32>
    %10 = vector.shape_cast %9 : vector<32x512xf32> to vector<4x8x512xf32>
    %c0_7 = arith.constant 0 : index
    %c0_8 = arith.constant 0 : index
    %c0_9 = arith.constant 0 : index
    %11 = vector.load %arg8[%c0_7, %c0_8, %c0_9] : memref<4x8x512xf32, #tpu.memory_space<vmem>>, vector<4x8x512xf32>
    tpu.vector_store %arg8[%c0_7, %c0_8, %c0_9], %10 {strides = array<i32>} : memref<4x8x512xf32, #tpu.memory_space<vmem>>, vector<4x8x512xf32>,
    %c0_10 = arith.constant 0 : index
    %c0_11 = arith.constant 0 : index
    %12 = vector.load %arg3[%c0_10, %c0_11] : memref<128x512xbf16, #tpu.memory_space<vmem>>, vector<128x512xbf16>
    %c0_12 = arith.constant 0 : index
    %c0_13 = arith.constant 0 : index
    %13 = vector.load %arg6[%c0_12, %c0_13] : memref<8x128xf32, #tpu.memory_space<vmem>>, vector<8x128xf32>
    %c0_14 = arith.constant 0 : index
    %c0_15 = arith.constant 0 : index
    %14 = vector.load %arg7[%c0_14, %c0_15] : memref<8x128xf32, #tpu.memory_space<vmem>>, vector<8x128xf32>
    %c0_i32_16 = arith.constant 0 : i32
    %15 = arith.index_cast %c0_i32_16 : i32 to index
    %c0_17 = arith.constant 0 : index
    %c0_18 = arith.constant 0 : index
    %16 = vector.load %arg8[%15, %c0_17, %c0_18] : memref<4x8x512xf32, #tpu.memory_space<vmem>>, vector<1x8x512xf32>
    %17 = vector.shape_cast %16 : vector<1x8x512xf32> to vector<8x512xf32>
    %18 = arith.truncf %13 : vector<8x128xf32> to vector<8x128xbf16>
    %cst_19 = arith.constant dense<0.000000e+00> : vector<8x512xf32>
    %19 = tpu.matmul %18, %12, %cst_19 {dimension_numbers = #tpu.dot_dimension_numbers<[1], [0], [0], [1], [0, 0, 1, 1], [], []>} : vector<8x128xbf16>, vector<128x512xbf16>, vector<8x512xf32> -> vector<8x512xf32>
    %20 = arith.addf %17, %19 : vector<8x512xf32>
    %21 = vector.extract_strided_slice %20 {offsets = [0, 0], sizes = [8, 128], strides = [1, 1]} : vector<8x512xf32> to vector<8x128xf32>
    %22 = arith.negf %21 : vector<8x128xf32>
    %23 = math.exp %22 : vector<8x128xf32>
    %cst_20 = arith.constant 1.000000e+00 : f32
    %24 = vector.broadcast %cst_20 : f32 to vector<8x128xf32>
    %25 = arith.addf %24, %23 : vector<8x128xf32>
    %26 = arith.divf %24, %25 : vector<8x128xf32>
    %27 = vector.extract_strided_slice %20 {offsets = [0, 128], sizes = [8, 128], strides = [1, 1]} : vector<8x512xf32> to vector<8x128xf32>
    %28 = arith.negf %27 : vector<8x128xf32>
    %29 = math.exp %28 : vector<8x128xf32>
    %cst_21 = arith.constant 1.000000e+00 : f32
    %30 = vector.broadcast %cst_21 : f32 to vector<8x128xf32>
    %31 = arith.addf %30, %29 : vector<8x128xf32>
    %32 = arith.divf %30, %31 : vector<8x128xf32>
    %33 = vector.extract_strided_slice %20 {offsets = [0, 256], sizes = [8, 128], strides = [1, 1]} : vector<8x512xf32> to vector<8x128xf32>
    %34 = math.tanh %33 : vector<8x128xf32>
    %35 = vector.extract_strided_slice %20 {offsets = [0, 384], sizes = [8, 128], strides = [1, 1]} : vector<8x512xf32> to vector<8x128xf32>
    %36 = arith.negf %35 : vector<8x128xf32>
    %37 = math.exp %36 : vector<8x128xf32>
    %cst_22 = arith.constant 1.000000e+00 : f32
    %38 = vector.broadcast %cst_22 : f32 to vector<8x128xf32>
    %39 = arith.addf %38, %37 : vector<8x128xf32>
    %40 = arith.divf %38, %39 : vector<8x128xf32>
    %41 = arith.mulf %32, %14 : vector<8x128xf32>
    %42 = arith.mulf %26, %34 : vector<8x128xf32>
    %43 = arith.addf %41, %42 : vector<8x128xf32>
    %44 = math.tanh %43 : vector<8x128xf32>
    %45 = arith.mulf %40, %44 : vector<8x128xf32>
    %46 = arith.index_cast %c0_i32_16 : i32 to index
    %c0_23 = arith.constant 0 : index
    %c0_24 = arith.constant 0 : index
    %47 = vector.load %arg5[%46, %c0_23, %c0_24] : memref<4x8x128xf32, #tpu.memory_space<vmem>>, vector<1x8x128xf32>
    %48 = vector.shape_cast %47 : vector<1x8x128xf32> to vector<8x128xf32>
    %49 = vector.shape_cast %45 : vector<8x128xf32> to vector<1x8x128xf32>
    tpu.vector_store %arg5[%46, %c0_23, %c0_24], %49 {strides = array<i32>} : memref<4x8x128xf32, #tpu.memory_space<vmem>>, vector<1x8x128xf32>,
    %c1_i32 = arith.constant 1 : i32
    %50 = arith.index_cast %c1_i32 : i32 to index
    %c0_25 = arith.constant 0 : index
    %c0_26 = arith.constant 0 : index
    %51 = vector.load %arg8[%50, %c0_25, %c0_26] : memref<4x8x512xf32, #tpu.memory_space<vmem>>, vector<1x8x512xf32>
    %52 = vector.shape_cast %51 : vector<1x8x512xf32> to vector<8x512xf32>
    %53 = arith.truncf %45 : vector<8x128xf32> to vector<8x128xbf16>
    %cst_27 = arith.constant dense<0.000000e+00> : vector<8x512xf32>
    %54 = tpu.matmul %53, %12, %cst_27 {dimension_numbers = #tpu.dot_dimension_numbers<[1], [0], [0], [1], [0, 0, 1, 1], [], []>} : vector<8x128xbf16>, vector<128x512xbf16>, vector<8x512xf32> -> vector<8x512xf32>
    %55 = arith.addf %52, %54 : vector<8x512xf32>
    %56 = vector.extract_strided_slice %55 {offsets = [0, 0], sizes = [8, 128], strides = [1, 1]} : vector<8x512xf32> to vector<8x128xf32>
    %57 = arith.negf %56 : vector<8x128xf32>
    %58 = math.exp %57 : vector<8x128xf32>
    %cst_28 = arith.constant 1.000000e+00 : f32
    %59 = vector.broadcast %cst_28 : f32 to vector<8x128xf32>
    %60 = arith.addf %59, %58 : vector<8x128xf32>
    %61 = arith.divf %59, %60 : vector<8x128xf32>
    %62 = vector.extract_strided_slice %55 {offsets = [0, 128], sizes = [8, 128], strides = [1, 1]} : vector<8x512xf32> to vector<8x128xf32>
    %63 = arith.negf %62 : vector<8x128xf32>
    %64 = math.exp %63 : vector<8x128xf32>
    %cst_29 = arith.constant 1.000000e+00 : f32
    %65 = vector.broadcast %cst_29 : f32 to vector<8x128xf32>
    %66 = arith.addf %65, %64 : vector<8x128xf32>
    %67 = arith.divf %65, %66 : vector<8x128xf32>
    %68 = vector.extract_strided_slice %55 {offsets = [0, 256], sizes = [8, 128], strides = [1, 1]} : vector<8x512xf32> to vector<8x128xf32>
    %69 = math.tanh %68 : vector<8x128xf32>
    %70 = vector.extract_strided_slice %55 {offsets = [0, 384], sizes = [8, 128], strides = [1, 1]} : vector<8x512xf32> to vector<8x128xf32>
    %71 = arith.negf %70 : vector<8x128xf32>
    %72 = math.exp %71 : vector<8x128xf32>
    %cst_30 = arith.constant 1.000000e+00 : f32
    %73 = vector.broadcast %cst_30 : f32 to vector<8x128xf32>
    %74 = arith.addf %73, %72 : vector<8x128xf32>
    %75 = arith.divf %73, %74 : vector<8x128xf32>
    %76 = arith.mulf %67, %43 : vector<8x128xf32>
    %77 = arith.mulf %61, %69 : vector<8x128xf32>
    %78 = arith.addf %76, %77 : vector<8x128xf32>
    %79 = math.tanh %78 : vector<8x128xf32>
    %80 = arith.mulf %75, %79 : vector<8x128xf32>
    %81 = arith.index_cast %c1_i32 : i32 to index
    %c0_31 = arith.constant 0 : index
    %c0_32 = arith.constant 0 : index
    %82 = vector.load %arg5[%81, %c0_31, %c0_32] : memref<4x8x128xf32, #tpu.memory_space<vmem>>, vector<1x8x128xf32>
    %83 = vector.shape_cast %82 : vector<1x8x128xf32> to vector<8x128xf32>
    %84 = vector.shape_cast %80 : vector<8x128xf32> to vector<1x8x128xf32>
    tpu.vector_store %arg5[%81, %c0_31, %c0_32], %84 {strides = array<i32>} : memref<4x8x128xf32, #tpu.memory_space<vmem>>, vector<1x8x128xf32>,
    %c2_i32 = arith.constant 2 : i32
    %85 = arith.index_cast %c2_i32 : i32 to index
    %c0_33 = arith.constant 0 : index
    %c0_34 = arith.constant 0 : index
    %86 = vector.load %arg8[%85, %c0_33, %c0_34] : memref<4x8x512xf32, #tpu.memory_space<vmem>>, vector<1x8x512xf32>
    %87 = vector.shape_cast %86 : vector<1x8x512xf32> to vector<8x512xf32>
    %88 = arith.truncf %80 : vector<8x128xf32> to vector<8x128xbf16>
    %cst_35 = arith.constant dense<0.000000e+00> : vector<8x512xf32>
    %89 = tpu.matmul %88, %12, %cst_35 {dimension_numbers = #tpu.dot_dimension_numbers<[1], [0], [0], [1], [0, 0, 1, 1], [], []>} : vector<8x128xbf16>, vector<128x512xbf16>, vector<8x512xf32> -> vector<8x512xf32>
    %90 = arith.addf %87, %89 : vector<8x512xf32>
    %91 = vector.extract_strided_slice %90 {offsets = [0, 0], sizes = [8, 128], strides = [1, 1]} : vector<8x512xf32> to vector<8x128xf32>
    %92 = arith.negf %91 : vector<8x128xf32>
    %93 = math.exp %92 : vector<8x128xf32>
    %cst_36 = arith.constant 1.000000e+00 : f32
    %94 = vector.broadcast %cst_36 : f32 to vector<8x128xf32>
    %95 = arith.addf %94, %93 : vector<8x128xf32>
    %96 = arith.divf %94, %95 : vector<8x128xf32>
    %97 = vector.extract_strided_slice %90 {offsets = [0, 128], sizes = [8, 128], strides = [1, 1]} : vector<8x512xf32> to vector<8x128xf32>
    %98 = arith.negf %97 : vector<8x128xf32>
    %99 = math.exp %98 : vector<8x128xf32>
    %cst_37 = arith.constant 1.000000e+00 : f32
    %100 = vector.broadcast %cst_37 : f32 to vector<8x128xf32>
    %101 = arith.addf %100, %99 : vector<8x128xf32>
    %102 = arith.divf %100, %101 : vector<8x128xf32>
    %103 = vector.extract_strided_slice %90 {offsets = [0, 256], sizes = [8, 128], strides = [1, 1]} : vector<8x512xf32> to vector<8x128xf32>
    %104 = math.tanh %103 : vector<8x128xf32>
    %105 = vector.extract_strided_slice %90 {offsets = [0, 384], sizes = [8, 128], strides = [1, 1]} : vector<8x512xf32> to vector<8x128xf32>
    %106 = arith.negf %105 : vector<8x128xf32>
    %107 = math.exp %106 : vector<8x128xf32>
    %cst_38 = arith.constant 1.000000e+00 : f32
    %108 = vector.broadcast %cst_38 : f32 to vector<8x128xf32>
    %109 = arith.addf %108, %107 : vector<8x128xf32>
    %110 = arith.divf %108, %109 : vector<8x128xf32>
    %111 = arith.mulf %102, %78 : vector<8x128xf32>
    %112 = arith.mulf %96, %104 : vector<8x128xf32>
    %113 = arith.addf %111, %112 : vector<8x128xf32>
    %114 = math.tanh %113 : vector<8x128xf32>
    %115 = arith.mulf %110, %114 : vector<8x128xf32>
    %116 = arith.index_cast %c2_i32 : i32 to index
    %c0_39 = arith.constant 0 : index
    %c0_40 = arith.constant 0 : index
    %117 = vector.load %arg5[%116, %c0_39, %c0_40] : memref<4x8x128xf32, #tpu.memory_space<vmem>>, vector<1x8x128xf32>
    %118 = vector.shape_cast %117 : vector<1x8x128xf32> to vector<8x128xf32>
    %119 = vector.shape_cast %115 : vector<8x128xf32> to vector<1x8x128xf32>
    tpu.vector_store %arg5[%116, %c0_39, %c0_40], %119 {strides = array<i32>} : memref<4x8x128xf32, #tpu.memory_space<vmem>>, vector<1x8x128xf32>,
    %c3_i32 = arith.constant 3 : i32
    %120 = arith.index_cast %c3_i32 : i32 to index
    %c0_41 = arith.constant 0 : index
    %c0_42 = arith.constant 0 : index
    %121 = vector.load %arg8[%120, %c0_41, %c0_42] : memref<4x8x512xf32, #tpu.memory_space<vmem>>, vector<1x8x512xf32>
    %122 = vector.shape_cast %121 : vector<1x8x512xf32> to vector<8x512xf32>
    %123 = arith.truncf %115 : vector<8x128xf32> to vector<8x128xbf16>
    %cst_43 = arith.constant dense<0.000000e+00> : vector<8x512xf32>
    %124 = tpu.matmul %123, %12, %cst_43 {dimension_numbers = #tpu.dot_dimension_numbers<[1], [0], [0], [1], [0, 0, 1, 1], [], []>} : vector<8x128xbf16>, vector<128x512xbf16>, vector<8x512xf32> -> vector<8x512xf32>
    %125 = arith.addf %122, %124 : vector<8x512xf32>
    %126 = vector.extract_strided_slice %125 {offsets = [0, 0], sizes = [8, 128], strides = [1, 1]} : vector<8x512xf32> to vector<8x128xf32>
    %127 = arith.negf %126 : vector<8x128xf32>
    %128 = math.exp %127 : vector<8x128xf32>
    %cst_44 = arith.constant 1.000000e+00 : f32
    %129 = vector.broadcast %cst_44 : f32 to vector<8x128xf32>
    %130 = arith.addf %129, %128 : vector<8x128xf32>
    %131 = arith.divf %129, %130 : vector<8x128xf32>
    %132 = vector.extract_strided_slice %125 {offsets = [0, 128], sizes = [8, 128], strides = [1, 1]} : vector<8x512xf32> to vector<8x128xf32>
    %133 = arith.negf %132 : vector<8x128xf32>
    %134 = math.exp %133 : vector<8x128xf32>
    %cst_45 = arith.constant 1.000000e+00 : f32
    %135 = vector.broadcast %cst_45 : f32 to vector<8x128xf32>
    %136 = arith.addf %135, %134 : vector<8x128xf32>
    %137 = arith.divf %135, %136 : vector<8x128xf32>
    %138 = vector.extract_strided_slice %125 {offsets = [0, 256], sizes = [8, 128], strides = [1, 1]} : vector<8x512xf32> to vector<8x128xf32>
    %139 = math.tanh %138 : vector<8x128xf32>
    %140 = vector.extract_strided_slice %125 {offsets = [0, 384], sizes = [8, 128], strides = [1, 1]} : vector<8x512xf32> to vector<8x128xf32>
    %141 = arith.negf %140 : vector<8x128xf32>
    %142 = math.exp %141 : vector<8x128xf32>
    %cst_46 = arith.constant 1.000000e+00 : f32
    %143 = vector.broadcast %cst_46 : f32 to vector<8x128xf32>
    %144 = arith.addf %143, %142 : vector<8x128xf32>
    %145 = arith.divf %143, %144 : vector<8x128xf32>
    %146 = arith.mulf %137, %113 : vector<8x128xf32>
    %147 = arith.mulf %131, %139 : vector<8x128xf32>
    %148 = arith.addf %146, %147 : vector<8x128xf32>
    %149 = math.tanh %148 : vector<8x128xf32>
    %150 = arith.mulf %145, %149 : vector<8x128xf32>
    %151 = arith.index_cast %c3_i32 : i32 to index
    %c0_47 = arith.constant 0 : index
    %c0_48 = arith.constant 0 : index
    %152 = vector.load %arg5[%151, %c0_47, %c0_48] : memref<4x8x128xf32, #tpu.memory_space<vmem>>, vector<1x8x128xf32>
    %153 = vector.shape_cast %152 : vector<1x8x128xf32> to vector<8x128xf32>
    %154 = vector.shape_cast %150 : vector<8x128xf32> to vector<1x8x128xf32>
    tpu.vector_store %arg5[%151, %c0_47, %c0_48], %154 {strides = array<i32>} : memref<4x8x128xf32, #tpu.memory_space<vmem>>, vector<1x8x128xf32>,
    %c4_i32 = arith.constant 4 : i32
    %c0_49 = arith.constant 0 : index
    %c0_50 = arith.constant 0 : index
    %155 = vector.load %arg6[%c0_49, %c0_50] : memref<8x128xf32, #tpu.memory_space<vmem>>, vector<8x128xf32>
    tpu.vector_store %arg6[%c0_49, %c0_50], %150 {strides = array<i32>} : memref<8x128xf32, #tpu.memory_space<vmem>>, vector<8x128xf32>,
    %c0_51 = arith.constant 0 : index
    %c0_52 = arith.constant 0 : index
    %156 = vector.load %arg7[%c0_51, %c0_52] : memref<8x128xf32, #tpu.memory_space<vmem>>, vector<8x128xf32>
    tpu.vector_store %arg7[%c0_51, %c0_52], %148 {strides = array<i32>} : memref<8x128xf32, #tpu.memory_space<vmem>>, vector<8x128xf32>,
    return
  }
  func.func @transform_0(%arg0: i32) -> (i32, i32, i32) {
    %c0_i32 = arith.constant 0 : i32
    %c0_i32_0 = arith.constant 0 : i32
    %c0_i32_1 = arith.constant 0 : i32
    return %arg0, %c0_i32, %c0_i32_0 : i32, i32, i32
  }
  func.func @transform_1(%arg0: i32) -> (i32, i32) {
    %c0_i32 = arith.constant 0 : i32
    %c0_i32_0 = arith.constant 0 : i32
    %c0_i32_1 = arith.constant 0 : i32
    return %c0_i32, %c0_i32_0 : i32, i32
  }
  func.func @transform_2(%arg0: i32) -> (i32, i32) {
    %c0_i32 = arith.constant 0 : i32
    %c0_i32_0 = arith.constant 0 : i32
    %c0_i32_1 = arith.constant 0 : i32
    return %c0_i32, %c0_i32_0 : i32, i32
  }
  func.func @transform_3(%arg0: i32) -> (i32, i32) {
    %c0_i32 = arith.constant 0 : i32
    %c0_i32_0 = arith.constant 0 : i32
    %c0_i32_1 = arith.constant 0 : i32
    return %c0_i32, %c0_i32_0 : i32, i32
  }
  func.func @transform_4(%arg0: i32) -> (i32, i32, i32) {
    %c0_i32 = arith.constant 0 : i32
    %c0_i32_0 = arith.constant 0 : i32
    %c0_i32_1 = arith.constant 0 : i32
    return %arg0, %c0_i32, %c0_i32_0 : i32, i32, i32
  }
}

module attributes {stable_mosaic.version = 11 : i64} {
  func.func @_attention_kernel(%arg0: i32, %arg1: memref<8xi32, #tpu.memory_space<smem>>, %arg2: memref<8x8x128xf32, #tpu.memory_space<vmem>>, %arg3: memref<16x8x128xf32, #tpu.memory_space<vmem>>, %arg4: memref<16x8x128xf32, #tpu.memory_space<vmem>>, %arg5: memref<128x128xbf16, #tpu.memory_space<vmem>>, %arg6: memref<128x128xbf16, #tpu.memory_space<vmem>>, %arg7: memref<1x128xf32, #tpu.memory_space<vmem>>, %arg8: memref<1x128xf32, #tpu.memory_space<vmem>>, %arg9: memref<8x8x128xf32, #tpu.memory_space<vmem>>, %arg10: memref<8x8x16xf32, #tpu.memory_space<vmem>>) attributes {dimension_semantics = [#tpu.dimension_semantics<parallel>], iteration_bounds = array<i64: 1>, scalar_prefetch = 1 : i64, scratch_operands = 1 : i64, tpu.core_type = #tpu.core_type<tc>, window_params = [{transform_indices = @transform_0, window_bounds = array<i64: 8, 8, 128>}, {transform_indices = @transform_1, window_bounds = array<i64: 16, 8, 128>}, {transform_indices = @transform_2, window_bounds = array<i64: 16, 8, 128>}, {pipeline_mode = #tpu.pipeline_mode<synchronous>, transform_indices = @transform_3, window_bounds = array<i64: 128, 128>}, {pipeline_mode = #tpu.pipeline_mode<synchronous>, transform_indices = @transform_4, window_bounds = array<i64: 128, 128>}, {pipeline_mode = #tpu.pipeline_mode<synchronous>, transform_indices = @transform_5, window_bounds = array<i64: 1, 128>}, {pipeline_mode = #tpu.pipeline_mode<synchronous>, transform_indices = @transform_6, window_bounds = array<i64: 1, 128>}, {transform_indices = @transform_7, window_bounds = array<i64: 8, 8, 128>}]} {
    %c8_i32 = arith.constant 8 : i32
    %0 = arith.muli %arg0, %c8_i32 : i32
    %c0 = arith.constant 0 : index
    %c0_0 = arith.constant 0 : index
    %c0_1 = arith.constant 0 : index
    %1 = vector.load %arg3[%c0, %c0_0, %c0_1] : memref<16x8x128xf32, #tpu.memory_space<vmem>>, vector<16x8x128xf32>
    %c0_2 = arith.constant 0 : index
    %c0_3 = arith.constant 0 : index
    %c0_4 = arith.constant 0 : index
    %2 = vector.load %arg4[%c0_2, %c0_3, %c0_4] : memref<16x8x128xf32, #tpu.memory_space<vmem>>, vector<16x8x128xf32>
    %3 = arith.addf %1, %2 : vector<16x8x128xf32>
    %c0_5 = arith.constant 0 : index
    %c0_6 = arith.constant 0 : index
    %c0_7 = arith.constant 0 : index
    %4 = vector.load %arg2[%c0_5, %c0_6, %c0_7] : memref<8x8x128xf32, #tpu.memory_space<vmem>>, vector<8x8x128xf32>
    %5 = tpu.transpose %4, [1, 0, 2] : vector<8x8x128xf32> -> vector<8x8x128xf32>
    %6 = tpu.transpose %3, [1, 0, 2] : vector<16x8x128xf32> -> vector<8x16x128xf32>
    %7 = vector.shape_cast %5 : vector<8x8x128xf32> to vector<64x128xf32>
    %8 = arith.truncf %7 : vector<64x128xf32> to vector<64x128xbf16>
    %c0_8 = arith.constant 0 : index
    %c0_9 = arith.constant 0 : index
    %9 = vector.load %arg5[%c0_8, %c0_9] : memref<128x128xbf16, #tpu.memory_space<vmem>>, vector<128x128xbf16>
    %cst = arith.constant dense<0.000000e+00> : vector<64x128xf32>
    %10 = tpu.matmul %8, %9, %cst {dimension_numbers = #tpu.dot_dimension_numbers<[1], [0], [0], [1], [0, 0, 1, 1], [], []>} : vector<64x128xbf16>, vector<128x128xbf16>, vector<64x128xf32> -> vector<64x128xf32>
    %11 = vector.shape_cast %10 : vector<64x128xf32> to vector<8x8x128xf32>
    %12 = vector.shape_cast %6 : vector<8x16x128xf32> to vector<128x128xf32>
    %13 = arith.truncf %12 : vector<128x128xf32> to vector<128x128xbf16>
    %c0_10 = arith.constant 0 : index
    %c0_11 = arith.constant 0 : index
    %14 = vector.load %arg6[%c0_10, %c0_11] : memref<128x128xbf16, #tpu.memory_space<vmem>>, vector<128x128xbf16>
    %cst_12 = arith.constant dense<0.000000e+00> : vector<128x128xf32>
    %15 = tpu.matmul %13, %14, %cst_12 {dimension_numbers = #tpu.dot_dimension_numbers<[1], [0], [0], [1], [0, 0, 1, 1], [], []>} : vector<128x128xbf16>, vector<128x128xbf16>, vector<128x128xf32> -> vector<128x128xf32>
    %16 = vector.shape_cast %15 : vector<128x128xf32> to vector<8x16x128xf32>
    %c0_13 = arith.constant 0 : index
    %c0_14 = arith.constant 0 : index
    %17 = vector.load %arg7[%c0_13, %c0_14] : memref<1x128xf32, #tpu.memory_space<vmem>>, vector<1x128xf32>
    %18 = vector.shape_cast %17 : vector<1x128xf32> to vector<1x1x128xf32>
    %19 = vector.broadcast %18 : vector<1x1x128xf32> to vector<8x16x128xf32>
    %20 = arith.addf %16, %19 : vector<8x16x128xf32>
    %c0_15 = arith.constant 0 : index
    %c0_16 = arith.constant 0 : index
    %21 = vector.load %arg8[%c0_15, %c0_16] : memref<1x128xf32, #tpu.memory_space<vmem>>, vector<1x128xf32>
    %22 = arith.index_cast %0 : i32 to index
    %23 = memref.load %arg1[%22] : memref<8xi32, #tpu.memory_space<smem>>
    %c1_i32 = arith.constant 1 : i32
    %24 = arith.addi %0, %c1_i32 : i32
    %25 = arith.index_cast %24 : i32 to index
    %26 = memref.load %arg1[%25] : memref<8xi32, #tpu.memory_space<smem>>
    %27 = arith.maxsi %23, %26 : i32
    %c2_i32 = arith.constant 2 : i32
    %28 = arith.addi %0, %c2_i32 : i32
    %29 = arith.index_cast %28 : i32 to index
    %30 = memref.load %arg1[%29] : memref<8xi32, #tpu.memory_space<smem>>
    %31 = arith.maxsi %27, %30 : i32
    %c3_i32 = arith.constant 3 : i32
    %32 = arith.addi %0, %c3_i32 : i32
    %33 = arith.index_cast %32 : i32 to index
    %34 = memref.load %arg1[%33] : memref<8xi32, #tpu.memory_space<smem>>
    %35 = arith.maxsi %31, %34 : i32
    %c4_i32 = arith.constant 4 : i32
    %36 = arith.addi %0, %c4_i32 : i32
    %37 = arith.index_cast %36 : i32 to index
    %38 = memref.load %arg1[%37] : memref<8xi32, #tpu.memory_space<smem>>
    %39 = arith.maxsi %35, %38 : i32
    %c5_i32 = arith.constant 5 : i32
    %40 = arith.addi %0, %c5_i32 : i32
    %41 = arith.index_cast %40 : i32 to index
    %42 = memref.load %arg1[%41] : memref<8xi32, #tpu.memory_space<smem>>
    %43 = arith.maxsi %39, %42 : i32
    %c6_i32 = arith.constant 6 : i32
    %44 = arith.addi %0, %c6_i32 : i32
    %45 = arith.index_cast %44 : i32 to index
    %46 = memref.load %arg1[%45] : memref<8xi32, #tpu.memory_space<smem>>
    %47 = arith.maxsi %43, %46 : i32
    %c7_i32 = arith.constant 7 : i32
    %48 = arith.addi %0, %c7_i32 : i32
    %49 = arith.index_cast %48 : i32 to index
    %50 = memref.load %arg1[%49] : memref<8xi32, #tpu.memory_space<smem>>
    %51 = arith.maxsi %47, %50 : i32
    %cst_17 = arith.constant 0.000000e+00 : f32
    %52 = vector.broadcast %cst_17 : f32 to vector<8x8x16xf32>
    %c0_18 = arith.constant 0 : index
    %c0_19 = arith.constant 0 : index
    %c0_20 = arith.constant 0 : index
    %53 = vector.load %arg10[%c0_18, %c0_19, %c0_20] : memref<8x8x16xf32, #tpu.memory_space<vmem>>, vector<8x8x16xf32>
    tpu.vector_store %arg10[%c0_18, %c0_19, %c0_20], %52 {strides = array<i32>} : memref<8x8x16xf32, #tpu.memory_space<vmem>>, vector<8x8x16xf32>,
    %c0_i32 = arith.constant 0 : i32
    %54 = arith.cmpi sgt, %51, %c0_i32 : i32
    %55 = arith.extui %54 : i1 to i32
    %c0_i32_21 = arith.constant 0 : i32
    %56 = arith.cmpi ne, %55, %c0_i32_21 : i32
    scf.if %56 {
      %138 = vector.extract_strided_slice %20 {offsets = [0, 0, 0], sizes = [8, 8, 128], strides = [1, 1, 1]} : vector<8x16x128xf32> to vector<8x8x128xf32>
      %139 = vector.shape_cast %11 : vector<8x8x128xf32> to vector<8x8x1x128xf32>
      %140 = vector.shape_cast %138 : vector<8x8x128xf32> to vector<8x1x8x128xf32>
      %141 = vector.broadcast %139 : vector<8x8x1x128xf32> to vector<8x8x8x128xf32>
      %142 = vector.broadcast %140 : vector<8x1x8x128xf32> to vector<8x8x8x128xf32>
      %143 = arith.addf %141, %142 : vector<8x8x8x128xf32>
      %144 = math.tanh %143 : vector<8x8x8x128xf32>
      %145 = vector.shape_cast %21 : vector<1x128xf32> to vector<1x1x1x128xf32>
      %146 = vector.broadcast %145 : vector<1x1x1x128xf32> to vector<8x8x8x128xf32>
      %147 = arith.mulf %144, %146 : vector<8x8x8x128xf32>
      %cst_51 = arith.constant dense<0.000000e+00> : vector<8x8x8xf32>
      %148 = vector.multi_reduction <add>, %147, %cst_51 [3] : vector<8x8x8x128xf32> to vector<8x8x8xf32>
      %c0_52 = arith.constant 0 : index
      %c0_53 = arith.constant 0 : index
      %c0_54 = arith.constant 0 : index
      %149 = vector.load %arg10[%c0_52, %c0_53, %c0_54] : memref<8x8x16xf32, #tpu.memory_space<vmem>>, vector<8x8x8xf32>
      tpu.vector_store %arg10[%c0_52, %c0_53, %c0_54], %148 {strides = array<i32>} : memref<8x8x16xf32, #tpu.memory_space<vmem>>, vector<8x8x8xf32>,
    } else {
    }
    %c8_i32_22 = arith.constant 8 : i32
    %57 = arith.cmpi sgt, %51, %c8_i32_22 : i32
    %58 = arith.extui %57 : i1 to i32
    %c0_i32_23 = arith.constant 0 : i32
    %59 = arith.cmpi ne, %58, %c0_i32_23 : i32
    scf.if %59 {
      %138 = vector.extract_strided_slice %20 {offsets = [0, 8, 0], sizes = [8, 8, 128], strides = [1, 1, 1]} : vector<8x16x128xf32> to vector<8x8x128xf32>
      %139 = vector.shape_cast %11 : vector<8x8x128xf32> to vector<8x8x1x128xf32>
      %140 = vector.shape_cast %138 : vector<8x8x128xf32> to vector<8x1x8x128xf32>
      %141 = vector.broadcast %139 : vector<8x8x1x128xf32> to vector<8x8x8x128xf32>
      %142 = vector.broadcast %140 : vector<8x1x8x128xf32> to vector<8x8x8x128xf32>
      %143 = arith.addf %141, %142 : vector<8x8x8x128xf32>
      %144 = math.tanh %143 : vector<8x8x8x128xf32>
      %145 = vector.shape_cast %21 : vector<1x128xf32> to vector<1x1x1x128xf32>
      %146 = vector.broadcast %145 : vector<1x1x1x128xf32> to vector<8x8x8x128xf32>
      %147 = arith.mulf %144, %146 : vector<8x8x8x128xf32>
      %cst_51 = arith.constant dense<0.000000e+00> : vector<8x8x8xf32>
      %148 = vector.multi_reduction <add>, %147, %cst_51 [3] : vector<8x8x8x128xf32> to vector<8x8x8xf32>
      %c0_52 = arith.constant 0 : index
      %c0_53 = arith.constant 0 : index
      %c8 = arith.constant 8 : index
      %149 = vector.load %arg10[%c0_52, %c0_53, %c8] : memref<8x8x16xf32, #tpu.memory_space<vmem>>, vector<8x8x8xf32>
      tpu.vector_store %arg10[%c0_52, %c0_53, %c8], %148 {strides = array<i32>} : memref<8x8x16xf32, #tpu.memory_space<vmem>>, vector<8x8x8xf32>,
    } else {
    }
    %c0_24 = arith.constant 0 : index
    %c0_25 = arith.constant 0 : index
    %c0_26 = arith.constant 0 : index
    %60 = vector.load %arg10[%c0_24, %c0_25, %c0_26] : memref<8x8x16xf32, #tpu.memory_space<vmem>>, vector<8x8x16xf32>
    %61 = tpu.iota {dimensions = array<i32: 0>} : vector<8x1x1xi32>
    %c0_i32_27 = arith.constant 0 : i32
    %62 = vector.broadcast %c0_i32_27 : i32 to vector<8x1x1xi32>
    %c0_i32_28 = arith.constant 0 : i32
    %63 = vector.broadcast %c0_i32_28 : i32 to vector<8x1x1xi32>
    %64 = arith.cmpi eq, %61, %63 : vector<8x1x1xi32>
    %c0_i32_29 = arith.constant 0 : i32
    %65 = arith.addi %0, %c0_i32_29 : i32
    %66 = arith.index_cast %65 : i32 to index
    %67 = memref.load %arg1[%66] : memref<8xi32, #tpu.memory_space<smem>>
    %68 = vector.broadcast %67 : i32 to vector<8x1x1xi32>
    %69 = arith.select %64, %68, %62 : vector<8x1x1xi1>, vector<8x1x1xi32>
    %c1_i32_30 = arith.constant 1 : i32
    %70 = vector.broadcast %c1_i32_30 : i32 to vector<8x1x1xi32>
    %71 = arith.cmpi eq, %61, %70 : vector<8x1x1xi32>
    %c1_i32_31 = arith.constant 1 : i32
    %72 = arith.addi %0, %c1_i32_31 : i32
    %73 = arith.index_cast %72 : i32 to index
    %74 = memref.load %arg1[%73] : memref<8xi32, #tpu.memory_space<smem>>
    %75 = vector.broadcast %74 : i32 to vector<8x1x1xi32>
    %76 = arith.select %71, %75, %69 : vector<8x1x1xi1>, vector<8x1x1xi32>
    %c2_i32_32 = arith.constant 2 : i32
    %77 = vector.broadcast %c2_i32_32 : i32 to vector<8x1x1xi32>
    %78 = arith.cmpi eq, %61, %77 : vector<8x1x1xi32>
    %c2_i32_33 = arith.constant 2 : i32
    %79 = arith.addi %0, %c2_i32_33 : i32
    %80 = arith.index_cast %79 : i32 to index
    %81 = memref.load %arg1[%80] : memref<8xi32, #tpu.memory_space<smem>>
    %82 = vector.broadcast %81 : i32 to vector<8x1x1xi32>
    %83 = arith.select %78, %82, %76 : vector<8x1x1xi1>, vector<8x1x1xi32>
    %c3_i32_34 = arith.constant 3 : i32
    %84 = vector.broadcast %c3_i32_34 : i32 to vector<8x1x1xi32>
    %85 = arith.cmpi eq, %61, %84 : vector<8x1x1xi32>
    %c3_i32_35 = arith.constant 3 : i32
    %86 = arith.addi %0, %c3_i32_35 : i32
    %87 = arith.index_cast %86 : i32 to index
    %88 = memref.load %arg1[%87] : memref<8xi32, #tpu.memory_space<smem>>
    %89 = vector.broadcast %88 : i32 to vector<8x1x1xi32>
    %90 = arith.select %85, %89, %83 : vector<8x1x1xi1>, vector<8x1x1xi32>
    %c4_i32_36 = arith.constant 4 : i32
    %91 = vector.broadcast %c4_i32_36 : i32 to vector<8x1x1xi32>
    %92 = arith.cmpi eq, %61, %91 : vector<8x1x1xi32>
    %c4_i32_37 = arith.constant 4 : i32
    %93 = arith.addi %0, %c4_i32_37 : i32
    %94 = arith.index_cast %93 : i32 to index
    %95 = memref.load %arg1[%94] : memref<8xi32, #tpu.memory_space<smem>>
    %96 = vector.broadcast %95 : i32 to vector<8x1x1xi32>
    %97 = arith.select %92, %96, %90 : vector<8x1x1xi1>, vector<8x1x1xi32>
    %c5_i32_38 = arith.constant 5 : i32
    %98 = vector.broadcast %c5_i32_38 : i32 to vector<8x1x1xi32>
    %99 = arith.cmpi eq, %61, %98 : vector<8x1x1xi32>
    %c5_i32_39 = arith.constant 5 : i32
    %100 = arith.addi %0, %c5_i32_39 : i32
    %101 = arith.index_cast %100 : i32 to index
    %102 = memref.load %arg1[%101] : memref<8xi32, #tpu.memory_space<smem>>
    %103 = vector.broadcast %102 : i32 to vector<8x1x1xi32>
    %104 = arith.select %99, %103, %97 : vector<8x1x1xi1>, vector<8x1x1xi32>
    %c6_i32_40 = arith.constant 6 : i32
    %105 = vector.broadcast %c6_i32_40 : i32 to vector<8x1x1xi32>
    %106 = arith.cmpi eq, %61, %105 : vector<8x1x1xi32>
    %c6_i32_41 = arith.constant 6 : i32
    %107 = arith.addi %0, %c6_i32_41 : i32
    %108 = arith.index_cast %107 : i32 to index
    %109 = memref.load %arg1[%108] : memref<8xi32, #tpu.memory_space<smem>>
    %110 = vector.broadcast %109 : i32 to vector<8x1x1xi32>
    %111 = arith.select %106, %110, %104 : vector<8x1x1xi1>, vector<8x1x1xi32>
    %c7_i32_42 = arith.constant 7 : i32
    %112 = vector.broadcast %c7_i32_42 : i32 to vector<8x1x1xi32>
    %113 = arith.cmpi eq, %61, %112 : vector<8x1x1xi32>
    %c7_i32_43 = arith.constant 7 : i32
    %114 = arith.addi %0, %c7_i32_43 : i32
    %115 = arith.index_cast %114 : i32 to index
    %116 = memref.load %arg1[%115] : memref<8xi32, #tpu.memory_space<smem>>
    %117 = vector.broadcast %116 : i32 to vector<8x1x1xi32>
    %118 = arith.select %113, %117, %111 : vector<8x1x1xi1>, vector<8x1x1xi32>
    %119 = tpu.iota {dimensions = array<i32: 2>} : vector<8x8x16xi32>
    %120 = vector.broadcast %118 : vector<8x1x1xi32> to vector<8x8x16xi32>
    %121 = arith.cmpi sge, %119, %120 : vector<8x8x16xi32>
    %cst_44 = arith.constant -6.550400e+04 : f32
    %122 = vector.broadcast %cst_44 : f32 to vector<8x8x16xf32>
    %123 = arith.select %121, %122, %60 : vector<8x8x16xi1>, vector<8x8x16xf32>
    %cst_45 = arith.constant dense<0xFF800000> : vector<8x8xf32>
    %124 = vector.multi_reduction <maximumf>, %123, %cst_45 [2] : vector<8x8x16xf32> to vector<8x8xf32>
    %125 = vector.shape_cast %124 : vector<8x8xf32> to vector<8x8x1xf32>
    %126 = vector.broadcast %125 : vector<8x8x1xf32> to vector<8x8x16xf32>
    %127 = arith.subf %123, %126 : vector<8x8x16xf32>
    %128 = math.exp %127 : vector<8x8x16xf32>
    %cst_46 = arith.constant dense<0.000000e+00> : vector<8x8xf32>
    %129 = vector.multi_reduction <add>, %128, %cst_46 [2] : vector<8x8x16xf32> to vector<8x8xf32>
    %130 = vector.shape_cast %129 : vector<8x8xf32> to vector<8x8x1xf32>
    %131 = vector.broadcast %130 : vector<8x8x1xf32> to vector<8x8x16xf32>
    %132 = arith.divf %128, %131 : vector<8x8x16xf32>
    %133 = arith.truncf %132 : vector<8x8x16xf32> to vector<8x8x16xbf16>
    %134 = arith.truncf %6 : vector<8x16x128xf32> to vector<8x16x128xbf16>
    "tpu.trace_start"() <{level = 10 : i32, message = "bqk,bkh->bqh"}> : () -> ()
    %cst_47 = arith.constant dense<0.000000e+00> : vector<8x8x128xf32>
    %135 = tpu.matmul %133, %134, %cst_47 {dimension_numbers = #tpu.dot_dimension_numbers<[2], [1], [1], [2], [0, 0, 0, 1, 1, 2], [0], [0]>} : vector<8x8x16xbf16>, vector<8x16x128xbf16>, vector<8x8x128xf32> -> vector<8x8x128xf32>
    "tpu.trace_stop"() : () -> ()
    %136 = tpu.transpose %135, [1, 0, 2] : vector<8x8x128xf32> -> vector<8x8x128xf32>
    %c0_48 = arith.constant 0 : index
    %c0_49 = arith.constant 0 : index
    %c0_50 = arith.constant 0 : index
    %137 = vector.load %arg9[%c0_48, %c0_49, %c0_50] : memref<8x8x128xf32, #tpu.memory_space<vmem>>, vector<8x8x128xf32>
    tpu.vector_store %arg9[%c0_48, %c0_49, %c0_50], %136 {strides = array<i32>} : memref<8x8x128xf32, #tpu.memory_space<vmem>>, vector<8x8x128xf32>,
    return
  }
  func.func @transform_0(%arg0: i32, %arg1: memref<8xi32, #tpu.memory_space<smem>>) -> (i32, i32, i32) {
    %c0_i32 = arith.constant 0 : i32
    %c0_i32_0 = arith.constant 0 : i32
    %c0_i32_1 = arith.constant 0 : i32
    return %c0_i32, %arg0, %c0_i32_0 : i32, i32, i32
  }
  func.func @transform_1(%arg0: i32, %arg1: memref<8xi32, #tpu.memory_space<smem>>) -> (i32, i32, i32) {
    %c0_i32 = arith.constant 0 : i32
    %c0_i32_0 = arith.constant 0 : i32
    %c0_i32_1 = arith.constant 0 : i32
    return %c0_i32, %arg0, %c0_i32_0 : i32, i32, i32
  }
  func.func @transform_2(%arg0: i32, %arg1: memref<8xi32, #tpu.memory_space<smem>>) -> (i32, i32, i32) {
    %c0_i32 = arith.constant 0 : i32
    %c0_i32_0 = arith.constant 0 : i32
    %c0_i32_1 = arith.constant 0 : i32
    return %c0_i32, %arg0, %c0_i32_0 : i32, i32, i32
  }
  func.func @transform_3(%arg0: i32, %arg1: memref<8xi32, #tpu.memory_space<smem>>) -> (i32, i32) {
    %c0_i32 = arith.constant 0 : i32
    %c0_i32_0 = arith.constant 0 : i32
    %c0_i32_1 = arith.constant 0 : i32
    return %c0_i32, %c0_i32_0 : i32, i32
  }
  func.func @transform_4(%arg0: i32, %arg1: memref<8xi32, #tpu.memory_space<smem>>) -> (i32, i32) {
    %c0_i32 = arith.constant 0 : i32
    %c0_i32_0 = arith.constant 0 : i32
    %c0_i32_1 = arith.constant 0 : i32
    return %c0_i32, %c0_i32_0 : i32, i32
  }
  func.func @transform_5(%arg0: i32, %arg1: memref<8xi32, #tpu.memory_space<smem>>) -> (i32, i32) {
    %c0_i32 = arith.constant 0 : i32
    %c0_i32_0 = arith.constant 0 : i32
    %c0_i32_1 = arith.constant 0 : i32
    return %c0_i32, %c0_i32_0 : i32, i32
  }
  func.func @transform_6(%arg0: i32, %arg1: memref<8xi32, #tpu.memory_space<smem>>) -> (i32, i32) {
    %c0_i32 = arith.constant 0 : i32
    %c0_i32_0 = arith.constant 0 : i32
    %c0_i32_1 = arith.constant 0 : i32
    return %c0_i32, %c0_i32_0 : i32, i32
  }
  func.func @transform_7(%arg0: i32, %arg1: memref<8xi32, #tpu.memory_space<smem>>) -> (i32, i32, i32) {
    %c0_i32 = arith.constant 0 : i32
    %c0_i32_0 = arith.constant 0 : i32
    %c0_i32_1 = arith.constant 0 : i32
    return %c0_i32, %arg0, %c0_i32_0 : i32, i32, i32
  }
}

</mosaic_0001>

<llo_original>
// kernel: stage5_forward.2
$region0: #{stage5_forward.2}
  #allocation0 [shape = 'u32[]', space=smem, size = 0x4, offset = 0x4, fixed_abs, tag = 'smem constant byte address 0x4 - core index']
  #allocation1 [shape = 'u32[144,128]{1,0:T(1,128)}', space=vmem, size = 0x12000, scoped, tag = 'internal scratch']
  #allocation2 [shape = 'f32[8,128]{1,0:T(8,128)}', space=vmem, size = 0x1000, scoped, tag = 'scratch operand']
  #allocation3 [shape = 'f32[8,128]{1,0:T(8,128)}', space=vmem, size = 0x1000, scoped, tag = 'scratch operand']
  #allocation4 [shape = 'f32[4,8,512]{2,1,0:T(8,128)}', space=vmem, size = 0x10000, scoped, tag = 'scratch operand']
  %s0 = inlined_call_operand.vmem [shape: bf16[8,8,128], index: 0, kind: input, shape index: {}]
  %s1 = inlined_call_operand.vmem [shape: bf16[128,512], index: 1, kind: input, shape index: {}]
  %s2 = inlined_call_operand.vmem [shape: bf16[128,512], index: 2, kind: input, shape index: {}]
  %s3 = inlined_call_operand.vmem [shape: f32[1,512], index: 3, kind: input, shape index: {}]
  %s4 = inlined_call_operand.vmem [shape: f32[8,8,128], index: 4, kind: output, shape index: {}]
  %s5 = sld [smem:[#allocation0]]
  $region53: #{stage5_forward.2} parent=0
    _
  %s7 = ssub.s32 1, %s5
  %s8 = scalar_select 0, %s7, %s5
  loop: start=0, step=1, limit=4
  $region2: #{stage5_forward.2} parent=0 // loop_pre_header
    _
  $region3: #{stage5_forward.2} parent=0 // loop_header
    %s10 = sphi 0, %s14
    %p11 = scmp.ge.s32.totalorder %s10, 4
    %s20 = sphi 0, %s22
    %s23 = sphi 0, %s20
    %s24 = sphi 0, %s23
    %s40 = sphi 0, %s24
    %s44 = sphi 0, %s44
    %s46 = sphi 0, %s44
    %s47 = sphi 0, %s46
    %s61 = sphi 0, %s47
    %s65 = sphi 0, %s65
    %s67 = sphi 0, %s65
    %s68 = sphi 0, %s67
    %s82 = sphi 0, %s68
    %s86 = sphi 0, %s86
    %s88 = sphi 0, %s86
    %s89 = sphi 0, %s88
    %s103 = sphi 0, %s89
    %s109 = sphi 0, %s111
    %s112 = sphi 0, %s109
    %s113 = sphi 0, %s112
    %s129 = sphi 0, %s113
  $region4: #{stage5_forward.2} parent=0 // loop_header_branch
    %13 = sbr.rel (%p11) target = $region8
  $region5: #{stage5_forward.2} parent=0 // loop_body
    %s15 = ssub.s32 %s10, 1
    %s16 = ssub.s32 %s10, 2
    %s17 = sadd.s32 %s10, 1
    %s18 = ssub.s32 %s10, %s17
    %p19 = scmp.eq.s32.totalorder %s18, 0
    %s21 = sadd.s32 %s20, 1
    %s22 = scalar_select %p19, %s20, %s21
    %p25 = pneg %p19
    %p26 = scmp.eq.s32.totalorder %s10, 1
    %p27 = por %p25, %p26
    %p28 = scmp.ne.s32.totalorder %s20, %s23
    %p29 = scmp.eq.s32.totalorder %s10, 0
    %p30 = por %p28, %p29
    %p31 = scmp.ne.s32.totalorder %s20, %s23
    %p32 = scmp.eq.s32.totalorder %s15, 1
    %p33 = por %p31, %p32
    %p34 = scmp.ne.s32.totalorder %s23, %s24
    %p35 = scmp.eq.s32.totalorder %s15, 0
    %p36 = por %p34, %p35
    %p37 = scmp.ne.s32.totalorder %s23, %s24
    %p38 = scmp.eq.s32.totalorder %s16, 1
    %p39 = por %p37, %p38
    %p41 = scmp.ne.s32.totalorder %s24, %s40
    %p42 = scmp.eq.s32.totalorder %s16, 0
    %p43 = por %p41, %p42
    %s45 = sadd.s32 %s44, 1
    %p48 = scmp.eq.s32.totalorder %s10, 1
    %p49 = scmp.ne.s32.totalorder %s44, %s46
    %p50 = scmp.eq.s32.totalorder %s10, 0
    %p51 = por %p49, %p50
    %p52 = scmp.ne.s32.totalorder %s44, %s46
    %p53 = scmp.eq.s32.totalorder %s15, 1
    %p54 = por %p52, %p53
    %p55 = scmp.ne.s32.totalorder %s46, %s47
    %p56 = scmp.eq.s32.totalorder %s15, 0
    %p57 = por %p55, %p56
    %p58 = scmp.ne.s32.totalorder %s46, %s47
    %p59 = scmp.eq.s32.totalorder %s16, 1
    %p60 = por %p58, %p59
    %p62 = scmp.ne.s32.totalorder %s47, %s61
    %p63 = scmp.eq.s32.totalorder %s16, 0
    %p64 = por %p62, %p63
    %s66 = sadd.s32 %s65, 1
    %p69 = scmp.eq.s32.totalorder %s10, 1
    %p70 = scmp.ne.s32.totalorder %s65, %s67
    %p71 = scmp.eq.s32.totalorder %s10, 0
    %p72 = por %p70, %p71
    %p73 = scmp.ne.s32.totalorder %s65, %s67
    %p74 = scmp.eq.s32.totalorder %s15, 1
    %p75 = por %p73, %p74
    %p76 = scmp.ne.s32.totalorder %s67, %s68
    %p77 = scmp.eq.s32.totalorder %s15, 0
    %p78 = por %p76, %p77
    %p79 = scmp.ne.s32.totalorder %s67, %s68
    %p80 = scmp.eq.s32.totalorder %s16, 1
    %p81 = por %p79, %p80
    %p83 = scmp.ne.s32.totalorder %s68, %s82
    %p84 = scmp.eq.s32.totalorder %s16, 0
    %p85 = por %p83, %p84
    %s87 = sadd.s32 %s86, 1
    %p90 = scmp.eq.s32.totalorder %s10, 1
    %p91 = scmp.ne.s32.totalorder %s86, %s88
    %p92 = scmp.eq.s32.totalorder %s10, 0
    %p93 = por %p91, %p92
    %p94 = scmp.ne.s32.totalorder %s86, %s88
    %p95 = scmp.eq.s32.totalorder %s15, 1
    %p96 = por %p94, %p95
    %p97 = scmp.ne.s32.totalorder %s88, %s89
    %p98 = scmp.eq.s32.totalorder %s15, 0
    %p99 = por %p97, %p98
    %p100 = scmp.ne.s32.totalorder %s88, %s89
    %p101 = scmp.eq.s32.totalorder %s16, 1
    %p102 = por %p100, %p101
    %p104 = scmp.ne.s32.totalorder %s89, %s103
    %p105 = scmp.eq.s32.totalorder %s16, 0
    %p106 = por %p104, %p105
    %s107 = ssub.s32 %s10, %s17
    %p108 = scmp.eq.s32.totalorder %s107, 0
    %s110 = sadd.s32 %s109, 1
    %s111 = scalar_select %p108, %s109, %s110
    %p114 = pneg %p108
    %p115 = scmp.eq.s32.totalorder %s10, 1
    %p116 = por %p114, %p115
    %p117 = scmp.ne.s32.totalorder %s109, %s112
    %p118 = scmp.eq.s32.totalorder %s10, 0
    %p119 = por %p117, %p118
    %p120 = scmp.ne.s32.totalorder %s109, %s112
    %p121 = scmp.eq.s32.totalorder %s15, 1
    %p122 = por %p120, %p121
    %p123 = scmp.ne.s32.totalorder %s112, %s113
    %p124 = scmp.eq.s32.totalorder %s15, 0
    %p125 = por %p123, %p124
    %p126 = scmp.ne.s32.totalorder %s112, %s113
    %p127 = scmp.eq.s32.totalorder %s16, 1
    %p128 = por %p126, %p127
    %p130 = scmp.ne.s32.totalorder %s113, %s129
    %p131 = scmp.eq.s32.totalorder %s16, 0
    %p132 = por %p130, %p131
    %p133 = scmp.le.s32.totalorder 1, %s10
    %p134 = scmp.lt.s32.totalorder %s10, 3
    %p135 = pnand %p133, %p134
    %p136 = pneg %p135
    // Predicated region
    $region9: #{stage5_forward.2} parent=5 // pred_check
      _
    $region10: #{stage5_forward.2} parent=5 // pred_check_branch
      %138 = sbr.rel (%p135) target = $region12
    $region11: #{stage5_forward.2} parent=5 // pred_region
      %s139 = ssub.s32 %s10, 1
      // Predicated region
      $region13: #{stage5_forward.2} parent=11 // pred_check
        %p140 = pneg %p57
      $region14: #{stage5_forward.2} parent=11 // pred_check_branch
        %142 = sbr.rel (%p140) target = $region16
      $region15: #{stage5_forward.2} parent=11 // pred_region
        _
      $region16: #{stage5_forward.2} parent=11 // pred_fallthru
        _
      // Predicated region
      $region17: #{stage5_forward.2} parent=11 // pred_check
        %p143 = pneg %p78
      $region18: #{stage5_forward.2} parent=11 // pred_check_branch
        %145 = sbr.rel (%p143) target = $region20
      $region19: #{stage5_forward.2} parent=11 // pred_region
        _
      $region20: #{stage5_forward.2} parent=11 // pred_fallthru
        _
      // Predicated region
      $region21: #{stage5_forward.2} parent=11 // pred_check
        %p146 = pneg %p99
      $region22: #{stage5_forward.2} parent=11 // pred_check_branch
        %148 = sbr.rel (%p146) target = $region24
      $region23: #{stage5_forward.2} parent=11 // pred_region
        _
      $region24: #{stage5_forward.2} parent=11 // pred_fallthru
        _
    $region12: #{stage5_forward.2} parent=5 // pred_fallthru
      _
    %p149 = scmp.lt.s32.totalorder %s10, 2
    // Predicated region
    $region25: #{stage5_forward.2} parent=5 // pred_check
      %p150 = pneg %p149
    $region26: #{stage5_forward.2} parent=5 // pred_check_branch
      %152 = sbr.rel (%p150) target = $region28
    $region27: #{stage5_forward.2} parent=5 // pred_region
      // Predicated region
      $region29: #{stage5_forward.2} parent=27 // pred_check
        %p153 = pneg %p30
      $region30: #{stage5_forward.2} parent=27 // pred_check_branch
        %155 = sbr.rel (%p153) target = $region32
      $region31: #{stage5_forward.2} parent=27 // pred_region
        %s156 = smul.u32 4, %s10
        %p157 = scmp.lt.s32.totalorder %s156, 7
        %s158 = scalar_select %p157, %s156, 7
        %s159 = smul.addr %s158, 4
        %s160 = scalar_lea.vmem %s0, %s159
        %s161 = smul.u32 4, %s10
      $region32: #{stage5_forward.2} parent=27 // pred_fallthru
        _
    $region28: #{stage5_forward.2} parent=5 // pred_fallthru
      _
    %p162 = scmp.le.s32.totalorder 1, %s10
    %p163 = scmp.lt.s32.totalorder %s10, 3
    %p164 = pnand %p162, %p163
    %p165 = pneg %p164
    // Predicated region
    $region33: #{stage5_forward.2} parent=5 // pred_check
      _
    $region34: #{stage5_forward.2} parent=5 // pred_check_branch
      %167 = sbr.rel (%p164) target = $region36
    $region35: #{stage5_forward.2} parent=5 // pred_region
      %s168 = ssub.s32 %s10, 1
      %s169 = smul.u32 4, %s15
      %p170 = scmp.lt.s32.totalorder %s169, 7
      %s171 = scalar_select %p170, %s169, 7
      %s172 = smul.addr %s171, 4
      %s173 = scalar_lea.vmem %s0, %s172
      %p174 = pneg %p36
      %p175 = pneg %p33
      %p176 = pneg %p57
      %p177 = pneg %p54
      %p178 = pneg %p78
      %p179 = pneg %p75
      %p180 = pneg %p99
      %p181 = pneg %p96
      %p182 = pneg %p125
      %p183 = pneg %p122
      %s184 = smul.u32 4, %s15
      %p185 = scmp.lt.s32.totalorder %s184, 7
      %s186 = scalar_select %p185, %s184, 7
      %s187 = smul.addr %s186, 8
      %s188 = scalar_lea.vmem %s4, %s187
      %s189 = smul.u32 4, %s15
      %p190 = scmp.lt.s32.totalorder %s189, 7
      %s191 = scalar_select %p190, %s189, 7
      %s192 = smul.addr %s191, 4
      %s193 = scalar_lea.vmem %s0, %s192
      %s194 = smul.u32 4, %s15
      %s195 = smul.u32 4, %s15
      %p196 = scmp.lt.s32.totalorder %s195, 7
      %s197 = scalar_select %p196, %s195, 7
      %s198 = smul.addr %s197, 8
      %s199 = scalar_lea.vmem %s4, %s198
      %s200 = smul.u32 4, %s15
      %p202 = scmp.eq.s32.totalorder %s15, 0
      // Predicated region
      $region37: #{stage5_forward.2} parent=35 // pred_check
        %p203 = pneg %p202
      $region38: #{stage5_forward.2} parent=35 // pred_check_branch
        %205 = sbr.rel (%p203) target = $region40
      $region39: #{stage5_forward.2} parent=35 // pred_region
        %206 = vst [vmem:[#allocation2] sm:$0xff] 0.0
        %207 = vst [vmem:[#allocation3] sm:$0xff] 0.0
      $region40: #{stage5_forward.2} parent=35 // pred_fallthru
        _
      %v208 = vld [vmem:[%s193] sm:$0xf]
      %v209 = vld [vmem:[%s193 + $0x4] sm:$0xf]
      %v210 = vld [vmem:[%s193 + $0x8] sm:$0xf]
      %v211 = vld [vmem:[%s193 + $0xc] sm:$0xf]
      %v212 = vld [vmem:[%s1] sm:$0xff]
      %v213 = vld [vmem:[%s1 + $0x8] sm:$0xff]
      %v214 = vld [vmem:[%s1 + $0x10] sm:$0xff]
      %v215 = vld [vmem:[%s1 + $0x18] sm:$0xff]
      %v216 = vld [vmem:[%s1 + $0x20] sm:$0xff]
      %v217 = vld [vmem:[%s1 + $0x28] sm:$0xff]
      %v218 = vld [vmem:[%s1 + $0x30] sm:$0xff]
      %v219 = vld [vmem:[%s1 + $0x38] sm:$0xff]
      %v220 = vld [vmem:[%s1 + $0x40] sm:$0xff]
      %v221 = vld [vmem:[%s1 + $0x48] sm:$0xff]
      %v222 = vld [vmem:[%s1 + $0x50] sm:$0xff]
      %v223 = vld [vmem:[%s1 + $0x58] sm:$0xff]
      %v224 = vld [vmem:[%s1 + $0x60] sm:$0xff]
      %v225 = vld [vmem:[%s1 + $0x68] sm:$0xff]
      %v226 = vld [vmem:[%s1 + $0x70] sm:$0xff]
      %v227 = vld [vmem:[%s1 + $0x78] sm:$0xff]
      %v228 = vld [vmem:[%s1 + $0x80] sm:$0xff]
      %v229 = vld [vmem:[%s1 + $0x88] sm:$0xff]
      %v230 = vld [vmem:[%s1 + $0x90] sm:$0xff]
      %v231 = vld [vmem:[%s1 + $0x98] sm:$0xff]
      %v232 = vld [vmem:[%s1 + $0xa0] sm:$0xff]
      %v233 = vld [vmem:[%s1 + $0xa8] sm:$0xff]
      %v234 = vld [vmem:[%s1 + $0xb0] sm:$0xff]
      %v235 = vld [vmem:[%s1 + $0xb8] sm:$0xff]
      %v236 = vld [vmem:[%s1 + $0xc0] sm:$0xff]
      %v237 = vld [vmem:[%s1 + $0xc8] sm:$0xff]
      %v238 = vld [vmem:[%s1 + $0xd0] sm:$0xff]
      %v239 = vld [vmem:[%s1 + $0xd8] sm:$0xff]
      %v240 = vld [vmem:[%s1 + $0xe0] sm:$0xff]
      %v241 = vld [vmem:[%s1 + $0xe8] sm:$0xff]
      %v242 = vld [vmem:[%s1 + $0xf0] sm:$0xff]
      %v243 = vld [vmem:[%s1 + $0xf8] sm:$0xff]
      %v244 = vld [vmem:[%s3] sm:$0xf]
      %v246 = vlaneseq
      %v247 = vshrl.u32 %v246, 7
      %v248 = vsub.s32 0, %v247
      %v249 = vrot.slane %v244, %v248
      %v250 = vlaneseq
      %v251 = vshrl.u32 %v250, 7
      %v252 = vsub.s32 1, %v251
      %v253 = vrot.slane %v244, %v252
      %v254 = vlaneseq
      %v255 = vshrl.u32 %v254, 7
      %v256 = vsub.s32 2, %v255
      %v257 = vrot.slane %v244, %v256
      %v258 = vlaneseq
      %v259 = vshrl.u32 %v258, 7
      %v260 = vsub.s32 3, %v259
      %v261 = vrot.slane %v244, %v260
      %v270 = vunpack.c.l.b16 %v208
      %v271 = vunpack.c.l.b16 %v209
      %v272 = vunpack.c.l.b16 %v210
      %v273 = vunpack.c.l.b16 %v211
      %v274 = vpack.c.b16 %v271, %v270
      %v275 = vpack.c.b16 %v273, %v272
      %v310 = vunpack.c.l.b16 %v212
      %v311 = vunpack.c.h.b16 %v212
      %v312 = vunpack.c.l.b16 %v213
      %v313 = vunpack.c.h.b16 %v213
      %v314 = vunpack.c.l.b16 %v214
      %v315 = vunpack.c.h.b16 %v214
      %v316 = vunpack.c.l.b16 %v215
      %v317 = vunpack.c.h.b16 %v215
      %v318 = vunpack.c.l.b16 %v216
      %v319 = vunpack.c.h.b16 %v216
      %v320 = vunpack.c.l.b16 %v217
      %v321 = vunpack.c.h.b16 %v217
      %v322 = vunpack.c.l.b16 %v218
      %v323 = vunpack.c.h.b16 %v218
      %v324 = vunpack.c.l.b16 %v219
      %v325 = vunpack.c.h.b16 %v219
      %v326 = vunpack.c.l.b16 %v220
      %v327 = vunpack.c.h.b16 %v220
      %v328 = vunpack.c.l.b16 %v221
      %v329 = vunpack.c.h.b16 %v221
      %v330 = vunpack.c.l.b16 %v222
      %v331 = vunpack.c.h.b16 %v222
      %v332 = vunpack.c.l.b16 %v223
      %v333 = vunpack.c.h.b16 %v223
      %v334 = vunpack.c.l.b16 %v224
      %v335 = vunpack.c.h.b16 %v224
      %v336 = vunpack.c.l.b16 %v225
      %v337 = vunpack.c.h.b16 %v225
      %v338 = vunpack.c.l.b16 %v226
      %v339 = vunpack.c.h.b16 %v226
      %v340 = vunpack.c.l.b16 %v227
      %v341 = vunpack.c.h.b16 %v227
      %v342 = vunpack.c.l.b16 %v228
      %v343 = vunpack.c.h.b16 %v228
      %v344 = vunpack.c.l.b16 %v229
      %v345 = vunpack.c.h.b16 %v229
      %v346 = vunpack.c.l.b16 %v230
      %v347 = vunpack.c.h.b16 %v230
      %v348 = vunpack.c.l.b16 %v231
      %v349 = vunpack.c.h.b16 %v231
      %v350 = vunpack.c.l.b16 %v232
      %v351 = vunpack.c.h.b16 %v232
      %v352 = vunpack.c.l.b16 %v233
      %v353 = vunpack.c.h.b16 %v233
      %v354 = vunpack.c.l.b16 %v234
      %v355 = vunpack.c.h.b16 %v234
      %v356 = vunpack.c.l.b16 %v235
      %v357 = vunpack.c.h.b16 %v235
      %v358 = vunpack.c.l.b16 %v236
      %v359 = vunpack.c.h.b16 %v236
      %v360 = vunpack.c.l.b16 %v237
      %v361 = vunpack.c.h.b16 %v237
      %v362 = vunpack.c.l.b16 %v238
      %v363 = vunpack.c.h.b16 %v238
      %v364 = vunpack.c.l.b16 %v239
      %v365 = vunpack.c.h.b16 %v239
      %v366 = vunpack.c.l.b16 %v240
      %v367 = vunpack.c.h.b16 %v240
      %v368 = vunpack.c.l.b16 %v241
      %v369 = vunpack.c.h.b16 %v241
      %v370 = vunpack.c.l.b16 %v242
      %v371 = vunpack.c.h.b16 %v242
      %v372 = vunpack.c.l.b16 %v243
      %v373 = vunpack.c.h.b16 %v243
      %v374 = vpack.c.b16 %v314, %v310
      %v375 = vpack.c.b16 %v315, %v311
      %v376 = vpack.c.b16 %v316, %v312
      %v377 = vpack.c.b16 %v317, %v313
      %v378 = vpack.c.b16 %v322, %v318
      %v379 = vpack.c.b16 %v323, %v319
      %v380 = vpack.c.b16 %v324, %v320
      %v381 = vpack.c.b16 %v325, %v321
      %v382 = vpack.c.b16 %v330, %v326
      %v383 = vpack.c.b16 %v331, %v327
      %v384 = vpack.c.b16 %v332, %v328
      %v385 = vpack.c.b16 %v333, %v329
      %v386 = vpack.c.b16 %v338, %v334
      %v387 = vpack.c.b16 %v339, %v335
      %v388 = vpack.c.b16 %v340, %v336
      %v389 = vpack.c.b16 %v341, %v337
      %v390 = vpack.c.b16 %v346, %v342
      %v391 = vpack.c.b16 %v347, %v343
      %v392 = vpack.c.b16 %v348, %v344
      %v393 = vpack.c.b16 %v349, %v345
      %v394 = vpack.c.b16 %v354, %v350
      %v395 = vpack.c.b16 %v355, %v351
      %v396 = vpack.c.b16 %v356, %v352
      %v397 = vpack.c.b16 %v357, %v353
      %v398 = vpack.c.b16 %v362, %v358
      %v399 = vpack.c.b16 %v363, %v359
      %v400 = vpack.c.b16 %v364, %v360
      %v401 = vpack.c.b16 %v365, %v361
      %v402 = vpack.c.b16 %v370, %v366
      %v403 = vpack.c.b16 %v371, %v367
      %v404 = vpack.c.b16 %v372, %v368
      %v405 = vpack.c.b16 %v373, %v369
      %438 = vmatprep.subr.bf16.mxu0 %v375
      %439 = vmatpush1.bf16.msra.mxu0 %v374
      %440 = vmatprep.subr.bf16.mxu0 %v379
      %441 = vmatpush1.bf16.msra.mxu0 %v378
      %442 = vmatprep.subr.bf16.mxu0 %v383
      %443 = vmatpush1.bf16.msra.mxu0 %v382
      %444 = vmatprep.subr.bf16.mxu0 %v387
      %445 = vmatpush1.bf16.msra.mxu0 %v386
      %446 = vmatprep.subr.bf16.mxu0 %v391
      %447 = vmatpush1.bf16.msra.mxu0 %v390
      %448 = vmatprep.subr.bf16.mxu0 %v395
      %449 = vmatpush1.bf16.msra.mxu0 %v394
      %450 = vmatprep.subr.bf16.mxu0 %v399
      %451 = vmatpush1.bf16.msra.mxu0 %v398
      %452 = vmatprep.subr.bf16.mxu0 %v403
      %453 = vmatpush1.bf16.msra.mxu0 %v402
      %454 = vmatprep.subr.bf16.mxu0 0
      %455 = vmatpush1.bf16.msra.mxu0 0
      %456 = vmatprep.subr.bf16.mxu0 0
      %457 = vmatpush1.bf16.msra.mxu0 0
      %458 = vmatprep.subr.bf16.mxu0 0
      %459 = vmatpush1.bf16.msra.mxu0 0
      %460 = vmatprep.subr.bf16.mxu0 0
      %461 = vmatpush1.bf16.msra.mxu0 0
      %462 = vmatprep.subr.bf16.mxu0 0
      %463 = vmatpush1.bf16.msra.mxu0 0
      %464 = vmatprep.subr.bf16.mxu0 0
      %465 = vmatpush1.bf16.msra.mxu0 0
      %466 = vmatprep.subr.bf16.mxu0 0
      %467 = vmatpush1.bf16.msra.mxu0 0
      %468 = vmatprep.subr.bf16.mxu0 0
      %469 = vmatpush1.bf16.msra.mxu0 0
      %470 = vmatprep.mubr.bf16.mxu0 0
      %471 = vmatmul.mubr.bf16.gmra.mrb[0].mxu0 %v274
      %v472 = vpop.f32.mrb[0].mxu0
      %v473 = vadd.f32 %v249, %v472
      %v474 = vpop.f32.mrb[0].mxu0
      %v475 = vadd.f32 %v253, %v474
      %v476 = vpop.f32.mrb[0].mxu0
      %v477 = vadd.f32 %v249, %v476
      %v478 = vpop.f32.mrb[0].mxu0
      %v479 = vadd.f32 %v253, %v478
      %480 = vmatprep.mubr.bf16.mxu0 0
      %481 = vmatmul.mubr.bf16.gmra.mrb[0].mxu0 %v275
      %v482 = vpop.f32.mrb[0].mxu0
      %v483 = vadd.f32 %v249, %v482
      %v484 = vpop.f32.mrb[0].mxu0
      %v485 = vadd.f32 %v253, %v484
      %v486 = vpop.f32.mrb[0].mxu0
      %v487 = vadd.f32 %v249, %v486
      %v488 = vpop.f32.mrb[0].mxu0
      %v489 = vadd.f32 %v253, %v488
      %490 = vdwg.mxu0
      %491 = vmatprep.subr.bf16.mxu0 %v377
      %492 = vmatpush1.bf16.msra.mxu0 %v376
      %493 = vmatprep.subr.bf16.mxu0 %v381
      %494 = vmatpush1.bf16.msra.mxu0 %v380
      %495 = vmatprep.subr.bf16.mxu0 %v385
      %496 = vmatpush1.bf16.msra.mxu0 %v384
      %497 = vmatprep.subr.bf16.mxu0 %v389
      %498 = vmatpush1.bf16.msra.mxu0 %v388
      %499 = vmatprep.subr.bf16.mxu0 %v393
      %500 = vmatpush1.bf16.msra.mxu0 %v392
      %501 = vmatprep.subr.bf16.mxu0 %v397
      %502 = vmatpush1.bf16.msra.mxu0 %v396
      %503 = vmatprep.subr.bf16.mxu0 %v401
      %504 = vmatpush1.bf16.msra.mxu0 %v400
      %505 = vmatprep.subr.bf16.mxu0 %v405
      %506 = vmatpush1.bf16.msra.mxu0 %v404
      %507 = vmatprep.subr.bf16.mxu0 0
      %508 = vmatpush1.bf16.msra.mxu0 0
      %509 = vmatprep.subr.bf16.mxu0 0
      %510 = vmatpush1.bf16.msra.mxu0 0
      %511 = vmatprep.subr.bf16.mxu0 0
      %512 = vmatpush1.bf16.msra.mxu0 0
      %513 = vmatprep.subr.bf16.mxu0 0
      %514 = vmatpush1.bf16.msra.mxu0 0
      %515 = vmatprep.subr.bf16.mxu0 0
      %516 = vmatpush1.bf16.msra.mxu0 0
      %517 = vmatprep.subr.bf16.mxu0 0
      %518 = vmatpush1.bf16.msra.mxu0 0
      %519 = vmatprep.subr.bf16.mxu0 0
      %520 = vmatpush1.bf16.msra.mxu0 0
      %521 = vmatprep.subr.bf16.mxu0 0
      %522 = vmatpush1.bf16.msra.mxu0 0
      %523 = vmatprep.mubr.bf16.mxu0 0
      %524 = vmatmul.mubr.bf16.gmra.mrb[0].mxu0 %v274
      %v525 = vpop.f32.mrb[0].mxu0
      %v526 = vadd.f32 %v257, %v525
      %v527 = vpop.f32.mrb[0].mxu0
      %v528 = vadd.f32 %v261, %v527
      %v529 = vpop.f32.mrb[0].mxu0
      %v530 = vadd.f32 %v257, %v529
      %v531 = vpop.f32.mrb[0].mxu0
      %v532 = vadd.f32 %v261, %v531
      %533 = vmatprep.mubr.bf16.mxu0 0
      %534 = vmatmul.mubr.bf16.gmra.mrb[0].mxu0 %v275
      %v535 = vpop.f32.mrb[0].mxu0
      %v536 = vadd.f32 %v257, %v535
      %v537 = vpop.f32.mrb[0].mxu0
      %v538 = vadd.f32 %v261, %v537
      %v539 = vpop.f32.mrb[0].mxu0
      %v540 = vadd.f32 %v257, %v539
      %v541 = vpop.f32.mrb[0].mxu0
      %v542 = vadd.f32 %v261, %v541
      %543 = vdwg.mxu0
      %544 = vst [vmem:[#allocation4] sm:$0xff] %v473
      %545 = vst [vmem:[#allocation4 + $0x8] sm:$0xff] %v475
      %546 = vst [vmem:[#allocation4 + $0x10] sm:$0xff] %v526
      %547 = vst [vmem:[#allocation4 + $0x18] sm:$0xff] %v528
      %548 = vst [vmem:[#allocation4 + $0x20] sm:$0xff] %v477
      %549 = vst [vmem:[#allocation4 + $0x28] sm:$0xff] %v479
      %550 = vst [vmem:[#allocation4 + $0x30] sm:$0xff] %v530
      %551 = vst [vmem:[#allocation4 + $0x38] sm:$0xff] %v532
      %552 = vst [vmem:[#allocation4 + $0x40] sm:$0xff] %v483
      %553 = vst [vmem:[#allocation4 + $0x48] sm:$0xff] %v485
      %554 = vst [vmem:[#allocation4 + $0x50] sm:$0xff] %v536
      %555 = vst [vmem:[#allocation4 + $0x58] sm:$0xff] %v538
      %556 = vst [vmem:[#allocation4 + $0x60] sm:$0xff] %v487
      %557 = vst [vmem:[#allocation4 + $0x68] sm:$0xff] %v489
      %558 = vst [vmem:[#allocation4 + $0x70] sm:$0xff] %v540
      %559 = vst [vmem:[#allocation4 + $0x78] sm:$0xff] %v542
      %v560 = vld [vmem:[%s2] sm:$0xff]
      %v561 = vld [vmem:[%s2 + $0x8] sm:$0xff]
      %v562 = vld [vmem:[%s2 + $0x10] sm:$0xff]
      %v563 = vld [vmem:[%s2 + $0x18] sm:$0xff]
      %v564 = vld [vmem:[%s2 + $0x20] sm:$0xff]
      %v565 = vld [vmem:[%s2 + $0x28] sm:$0xff]
      %v566 = vld [vmem:[%s2 + $0x30] sm:$0xff]
      %v567 = vld [vmem:[%s2 + $0x38] sm:$0xff]
      %v568 = vld [vmem:[%s2 + $0x40] sm:$0xff]
      %v569 = vld [vmem:[%s2 + $0x48] sm:$0xff]
      %v570 = vld [vmem:[%s2 + $0x50] sm:$0xff]
      %v571 = vld [vmem:[%s2 + $0x58] sm:$0xff]
      %v572 = vld [vmem:[%s2 + $0x60] sm:$0xff]
      %v573 = vld [vmem:[%s2 + $0x68] sm:$0xff]
      %v574 = vld [vmem:[%s2 + $0x70] sm:$0xff]
      %v575 = vld [vmem:[%s2 + $0x78] sm:$0xff]
      %v576 = vld [vmem:[%s2 + $0x80] sm:$0xff]
      %v577 = vld [vmem:[%s2 + $0x88] sm:$0xff]
      %v578 = vld [vmem:[%s2 + $0x90] sm:$0xff]
      %v579 = vld [vmem:[%s2 + $0x98] sm:$0xff]
      %v580 = vld [vmem:[%s2 + $0xa0] sm:$0xff]
      %v581 = vld [vmem:[%s2 + $0xa8] sm:$0xff]
      %v582 = vld [vmem:[%s2 + $0xb0] sm:$0xff]
      %v583 = vld [vmem:[%s2 + $0xb8] sm:$0xff]
      %v584 = vld [vmem:[%s2 + $0xc0] sm:$0xff]
      %v585 = vld [vmem:[%s2 + $0xc8] sm:$0xff]
      %v586 = vld [vmem:[%s2 + $0xd0] sm:$0xff]
      %v587 = vld [vmem:[%s2 + $0xd8] sm:$0xff]
      %v588 = vld [vmem:[%s2 + $0xe0] sm:$0xff]
      %v589 = vld [vmem:[%s2 + $0xe8] sm:$0xff]
      %v590 = vld [vmem:[%s2 + $0xf0] sm:$0xff]
      %v591 = vld [vmem:[%s2 + $0xf8] sm:$0xff]
      %v592 = vld [vmem:[#allocation2] sm:$0xff]
      %v593 = vld [vmem:[#allocation3] sm:$0xff]
      %v594 = vld [vmem:[#allocation4] sm:$0xff]
      %v595 = vld [vmem:[#allocation4 + $0x8] sm:$0xff]
      %v596 = vld [vmem:[#allocation4 + $0x10] sm:$0xff]
      %v597 = vld [vmem:[#allocation4 + $0x18] sm:$0xff]
      %v598 = vpack.c.bf16 %v592, %v592
      %v631 = vunpack.c.l.b16 %v560
      %v632 = vunpack.c.h.b16 %v560
      %v633 = vunpack.c.l.b16 %v561
      %v634 = vunpack.c.h.b16 %v561
      %v635 = vunpack.c.l.b16 %v562
      %v636 = vunpack.c.h.b16 %v562
      %v637 = vunpack.c.l.b16 %v563
      %v638 = vunpack.c.h.b16 %v563
      %v639 = vunpack.c.l.b16 %v564
      %v640 = vunpack.c.h.b16 %v564
      %v641 = vunpack.c.l.b16 %v565
      %v642 = vunpack.c.h.b16 %v565
      %v643 = vunpack.c.l.b16 %v566
      %v644 = vunpack.c.h.b16 %v566
      %v645 = vunpack.c.l.b16 %v567
      %v646 = vunpack.c.h.b16 %v567
      %v647 = vunpack.c.l.b16 %v568
      %v648 = vunpack.c.h.b16 %v568
      %v649 = vunpack.c.l.b16 %v569
      %v650 = vunpack.c.h.b16 %v569
      %v651 = vunpack.c.l.b16 %v570
      %v652 = vunpack.c.h.b16 %v570
      %v653 = vunpack.c.l.b16 %v571
      %v654 = vunpack.c.h.b16 %v571
      %v655 = vunpack.c.l.b16 %v572
      %v656 = vunpack.c.h.b16 %v572
      %v657 = vunpack.c.l.b16 %v573
      %v658 = vunpack.c.h.b16 %v573
      %v659 = vunpack.c.l.b16 %v574
      %v660 = vunpack.c.h.b16 %v574
      %v661 = vunpack.c.l.b16 %v575
      %v662 = vunpack.c.h.b16 %v575
      %v663 = vunpack.c.l.b16 %v576
      %v664 = vunpack.c.h.b16 %v576
      %v665 = vunpack.c.l.b16 %v577
      %v666 = vunpack.c.h.b16 %v577
      %v667 = vunpack.c.l.b16 %v578
      %v668 = vunpack.c.h.b16 %v578
      %v669 = vunpack.c.l.b16 %v579
      %v670 = vunpack.c.h.b16 %v579
      %v671 = vunpack.c.l.b16 %v580
      %v672 = vunpack.c.h.b16 %v580
      %v673 = vunpack.c.l.b16 %v581
      %v674 = vunpack.c.h.b16 %v581
      %v675 = vunpack.c.l.b16 %v582
      %v676 = vunpack.c.h.b16 %v582
      %v677 = vunpack.c.l.b16 %v583
      %v678 = vunpack.c.h.b16 %v583
      %v679 = vunpack.c.l.b16 %v584
      %v680 = vunpack.c.h.b16 %v584
      %v681 = vunpack.c.l.b16 %v585
      %v682 = vunpack.c.h.b16 %v585
      %v683 = vunpack.c.l.b16 %v586
      %v684 = vunpack.c.h.b16 %v586
      %v685 = vunpack.c.l.b16 %v587
      %v686 = vunpack.c.h.b16 %v587
      %v687 = vunpack.c.l.b16 %v588
      %v688 = vunpack.c.h.b16 %v588
      %v689 = vunpack.c.l.b16 %v589
      %v690 = vunpack.c.h.b16 %v589
      %v691 = vunpack.c.l.b16 %v590
      %v692 = vunpack.c.h.b16 %v590
      %v693 = vunpack.c.l.b16 %v591
      %v694 = vunpack.c.h.b16 %v591
      %v695 = vpack.c.b16 %v635, %v631
      %v696 = vpack.c.b16 %v636, %v632
      %v697 = vpack.c.b16 %v637, %v633
      %v698 = vpack.c.b16 %v638, %v634
      %v699 = vpack.c.b16 %v643, %v639
      %v700 = vpack.c.b16 %v644, %v640
      %v701 = vpack.c.b16 %v645, %v641
      %v702 = vpack.c.b16 %v646, %v642
      %v703 = vpack.c.b16 %v651, %v647
      %v704 = vpack.c.b16 %v652, %v648
      %v705 = vpack.c.b16 %v653, %v649
      %v706 = vpack.c.b16 %v654, %v650
      %v707 = vpack.c.b16 %v659, %v655
      %v708 = vpack.c.b16 %v660, %v656
      %v709 = vpack.c.b16 %v661, %v657
      %v710 = vpack.c.b16 %v662, %v658
      %v711 = vpack.c.b16 %v667, %v663
      %v712 = vpack.c.b16 %v668, %v664
      %v713 = vpack.c.b16 %v669, %v665
      %v714 = vpack.c.b16 %v670, %v666
      %v715 = vpack.c.b16 %v675, %v671
      %v716 = vpack.c.b16 %v676, %v672
      %v717 = vpack.c.b16 %v677, %v673
      %v718 = vpack.c.b16 %v678, %v674
      %v719 = vpack.c.b16 %v683, %v679
      %v720 = vpack.c.b16 %v684, %v680
      %v721 = vpack.c.b16 %v685, %v681
      %v722 = vpack.c.b16 %v686, %v682
      %v723 = vpack.c.b16 %v691, %v687
      %v724 = vpack.c.b16 %v692, %v688
      %v725 = vpack.c.b16 %v693, %v689
      %v726 = vpack.c.b16 %v694, %v690
      %759 = vmatprep.subr.bf16.mxu0 %v696
      %760 = vmatpush1.bf16.msra.mxu0 %v695
      %761 = vmatprep.subr.bf16.mxu0 %v700
      %762 = vmatpush1.bf16.msra.mxu0 %v699
      %763 = vmatprep.subr.bf16.mxu0 %v704
      %764 = vmatpush1.bf16.msra.mxu0 %v703
      %765 = vmatprep.subr.bf16.mxu0 %v708
      %766 = vmatpush1.bf16.msra.mxu0 %v707
      %767 = vmatprep.subr.bf16.mxu0 %v712
      %768 = vmatpush1.bf16.msra.mxu0 %v711
      %769 = vmatprep.subr.bf16.mxu0 %v716
      %770 = vmatpush1.bf16.msra.mxu0 %v715
      %771 = vmatprep.subr.bf16.mxu0 %v720
      %772 = vmatpush1.bf16.msra.mxu0 %v719
      %773 = vmatprep.subr.bf16.mxu0 %v724
      %774 = vmatpush1.bf16.msra.mxu0 %v723
      %775 = vmatprep.subr.bf16.mxu0 0
      %776 = vmatpush1.bf16.msra.mxu0 0
      %777 = vmatprep.subr.bf16.mxu0 0
      %778 = vmatpush1.bf16.msra.mxu0 0
      %779 = vmatprep.subr.bf16.mxu0 0
      %780 = vmatpush1.bf16.msra.mxu0 0
      %781 = vmatprep.subr.bf16.mxu0 0
      %782 = vmatpush1.bf16.msra.mxu0 0
      %783 = vmatprep.subr.bf16.mxu0 0
      %784 = vmatpush1.bf16.msra.mxu0 0
      %785 = vmatprep.subr.bf16.mxu0 0
      %786 = vmatpush1.bf16.msra.mxu0 0
      %787 = vmatprep.subr.bf16.mxu0 0
      %788 = vmatpush1.bf16.msra.mxu0 0
      %789 = vmatprep.subr.bf16.mxu0 0
      %790 = vmatpush1.bf16.msra.mxu0 0
      %791 = vmatprep.mubr.bf16.mxu0 0
      %792 = vmatmul.mubr.bf16.gmra.mrb[0].mxu0 %v598
      %v793 = vpop.f32.mrb[0].mxu0
      %v794 = vadd.f32 0.0, %v793
      %v795 = vpop.f32.mrb[0].mxu0
      %v796 = vadd.f32 0.0, %v795
      %v797 = vpop.f32.mrb[0].mxu0
      %v798 = vpop.f32.mrb[0].mxu0
      %799 = vdwg.mxu0
      %800 = vmatprep.subr.bf16.mxu0 %v698
      %801 = vmatpush1.bf16.msra.mxu0 %v697
      %802 = vmatprep.subr.bf16.mxu0 %v702
      %803 = vmatpush1.bf16.msra.mxu0 %v701
      %804 = vmatprep.subr.bf16.mxu0 %v706
      %805 = vmatpush1.bf16.msra.mxu0 %v705
      %806 = vmatprep.subr.bf16.mxu0 %v710
      %807 = vmatpush1.bf16.msra.mxu0 %v709
      %808 = vmatprep.subr.bf16.mxu0 %v714
      %809 = vmatpush1.bf16.msra.mxu0 %v713
      %810 = vmatprep.subr.bf16.mxu0 %v718
      %811 = vmatpush1.bf16.msra.mxu0 %v717
      %812 = vmatprep.subr.bf16.mxu0 %v722
      %813 = vmatpush1.bf16.msra.mxu0 %v721
      %814 = vmatprep.subr.bf16.mxu0 %v726
      %815 = vmatpush1.bf16.msra.mxu0 %v725
      %816 = vmatprep.subr.bf16.mxu0 0
      %817 = vmatpush1.bf16.msra.mxu0 0
      %818 = vmatprep.subr.bf16.mxu0 0
      %819 = vmatpush1.bf16.msra.mxu0 0
      %820 = vmatprep.subr.bf16.mxu0 0
      %821 = vmatpush1.bf16.msra.mxu0 0
      %822 = vmatprep.subr.bf16.mxu0 0
      %823 = vmatpush1.bf16.msra.mxu0 0
      %824 = vmatprep.subr.bf16.mxu0 0
      %825 = vmatpush1.bf16.msra.mxu0 0
      %826 = vmatprep.subr.bf16.mxu0 0
      %827 = vmatpush1.bf16.msra.mxu0 0
      %828 = vmatprep.subr.bf16.mxu0 0
      %829 = vmatpush1.bf16.msra.mxu0 0
      %830 = vmatprep.subr.bf16.mxu0 0
      %831 = vmatpush1.bf16.msra.mxu0 0
      %832 = vmatprep.mubr.bf16.mxu0 0
      %833 = vmatmul.mubr.bf16.gmra.mrb[0].mxu0 %v598
      %v834 = vpop.f32.mrb[0].mxu0
      %v835 = vadd.f32 0.0, %v834
      %v836 = vpop.f32.mrb[0].mxu0
      %v837 = vadd.f32 0.0, %v836
      %v838 = vpop.f32.mrb[0].mxu0
      %v839 = vpop.f32.mrb[0].mxu0
      %840 = vdwg.mxu0
      %v841 = vadd.f32 %v594, %v794
      %v842 = vadd.f32 %v595, %v796
      %v843 = vadd.f32 %v596, %v835
      %v844 = vadd.f32 %v597, %v837
      %v845 = vxor.u32 %v841, 2147483648
      %v846 = vmul.f32 %v845, 1.442695
      %v847 = vpow.pop %v846
      %v848 = vadd.f32 %v847, 1.0
      %v849 = vrcp.pop %v848
      %v850 = vmul.f32 1.0, %v849
      %v851 = vxor.u32 %v842, 2147483648
      %v852 = vmul.f32 %v851, 1.442695
      %v853 = vpow.pop %v852
      %v854 = vadd.f32 %v853, 1.0
      %v855 = vrcp.pop %v854
      %v856 = vmul.f32 1.0, %v855
      %v857 = vtanh.pop %v843
      %v858 = vxor.u32 %v844, 2147483648
      %v859 = vmul.f32 %v858, 1.442695
      %v860 = vpow.pop %v859
      %v861 = vadd.f32 %v860, 1.0
      %v862 = vrcp.pop %v861
      %v863 = vmul.f32 1.0, %v862
      %v864 = vmul.f32 %v856, %v593
      %v865 = vmul.f32 %v850, %v857
      %v866 = vadd.f32 %v864, %v865
      %v867 = vtanh.pop %v866
      %v868 = vmul.f32 %v863, %v867
      %869 = vst [vmem:[%s199] sm:$0xff] %v868
      %s870 = scalar_lea.vmem [#allocation4], 32
      %v871 = vld [vmem:[%s870] sm:$0xff]
      %v872 = vld [vmem:[%s870 + $0x8] sm:$0xff]
      %v873 = vld [vmem:[%s870 + $0x10] sm:$0xff]
      %v874 = vld [vmem:[%s870 + $0x18] sm:$0xff]
      %v875 = vpack.c.bf16 %v868, %v868
      %876 = vmatprep.subr.bf16.mxu0 %v696
      %877 = vmatpush1.bf16.msra.mxu0 %v695
      %878 = vmatprep.subr.bf16.mxu0 %v700
      %879 = vmatpush1.bf16.msra.mxu0 %v699
      %880 = vmatprep.subr.bf16.mxu0 %v704
      %881 = vmatpush1.bf16.msra.mxu0 %v703
      %882 = vmatprep.subr.bf16.mxu0 %v708
      %883 = vmatpush1.bf16.msra.mxu0 %v707
      %884 = vmatprep.subr.bf16.mxu0 %v712
      %885 = vmatpush1.bf16.msra.mxu0 %v711
      %886 = vmatprep.subr.bf16.mxu0 %v716
      %887 = vmatpush1.bf16.msra.mxu0 %v715
      %888 = vmatprep.subr.bf16.mxu0 %v720
      %889 = vmatpush1.bf16.msra.mxu0 %v719
      %890 = vmatprep.subr.bf16.mxu0 %v724
      %891 = vmatpush1.bf16.msra.mxu0 %v723
      %892 = vmatprep.subr.bf16.mxu0 0
      %893 = vmatpush1.bf16.msra.mxu0 0
      %894 = vmatprep.subr.bf16.mxu0 0
      %895 = vmatpush1.bf16.msra.mxu0 0
      %896 = vmatprep.subr.bf16.mxu0 0
      %897 = vmatpush1.bf16.msra.mxu0 0
      %898 = vmatprep.subr.bf16.mxu0 0
      %899 = vmatpush1.bf16.msra.mxu0 0
      %900 = vmatprep.subr.bf16.mxu0 0
      %901 = vmatpush1.bf16.msra.mxu0 0
      %902 = vmatprep.subr.bf16.mxu0 0
      %903 = vmatpush1.bf16.msra.mxu0 0
      %904 = vmatprep.subr.bf16.mxu0 0
      %905 = vmatpush1.bf16.msra.mxu0 0
      %906 = vmatprep.subr.bf16.mxu0 0
      %907 = vmatpush1.bf16.msra.mxu0 0
      %908 = vmatprep.mubr.bf16.mxu0 0
      %909 = vmatmul.mubr.bf16.gmra.mrb[0].mxu0 %v875
      %v910 = vpop.f32.mrb[0].mxu0
      %v911 = vadd.f32 0.0, %v910
      %v912 = vpop.f32.mrb[0].mxu0
      %v913 = vadd.f32 0.0, %v912
      %v914 = vpop.f32.mrb[0].mxu0
      %v915 = vpop.f32.mrb[0].mxu0
      %916 = vdwg.mxu0
      %917 = vmatprep.subr.bf16.mxu0 %v698
      %918 = vmatpush1.bf16.msra.mxu0 %v697
      %919 = vmatprep.subr.bf16.mxu0 %v702
      %920 = vmatpush1.bf16.msra.mxu0 %v701
      %921 = vmatprep.subr.bf16.mxu0 %v706
      %922 = vmatpush1.bf16.msra.mxu0 %v705
      %923 = vmatprep.subr.bf16.mxu0 %v710
      %924 = vmatpush1.bf16.msra.mxu0 %v709
      %925 = vmatprep.subr.bf16.mxu0 %v714
      %926 = vmatpush1.bf16.msra.mxu0 %v713
      %927 = vmatprep.subr.bf16.mxu0 %v718
      %928 = vmatpush1.bf16.msra.mxu0 %v717
      %929 = vmatprep.subr.bf16.mxu0 %v722
      %930 = vmatpush1.bf16.msra.mxu0 %v721
      %931 = vmatprep.subr.bf16.mxu0 %v726
      %932 = vmatpush1.bf16.msra.mxu0 %v725
      %933 = vmatprep.subr.bf16.mxu0 0
      %934 = vmatpush1.bf16.msra.mxu0 0
      %935 = vmatprep.subr.bf16.mxu0 0
      %936 = vmatpush1.bf16.msra.mxu0 0
      %937 = vmatprep.subr.bf16.mxu0 0
      %938 = vmatpush1.bf16.msra.mxu0 0
      %939 = vmatprep.subr.bf16.mxu0 0
      %940 = vmatpush1.bf16.msra.mxu0 0
      %941 = vmatprep.subr.bf16.mxu0 0
      %942 = vmatpush1.bf16.msra.mxu0 0
      %943 = vmatprep.subr.bf16.mxu0 0
      %944 = vmatpush1.bf16.msra.mxu0 0
      %945 = vmatprep.subr.bf16.mxu0 0
      %946 = vmatpush1.bf16.msra.mxu0 0
      %947 = vmatprep.subr.bf16.mxu0 0
      %948 = vmatpush1.bf16.msra.mxu0 0
      %949 = vmatprep.mubr.bf16.mxu0 0
      %950 = vmatmul.mubr.bf16.gmra.mrb[0].mxu0 %v875
      %v951 = vpop.f32.mrb[0].mxu0
      %v952 = vadd.f32 0.0, %v951
      %v953 = vpop.f32.mrb[0].mxu0
      %v954 = vadd.f32 0.0, %v953
      %v955 = vpop.f32.mrb[0].mxu0
      %v956 = vpop.f32.mrb[0].mxu0
      %957 = vdwg.mxu0
      %v958 = vadd.f32 %v871, %v911
      %v959 = vadd.f32 %v872, %v913
      %v960 = vadd.f32 %v873, %v952
      %v961 = vadd.f32 %v874, %v954
      %v962 = vxor.u32 %v958, 2147483648
      %v963 = vmul.f32 %v962, 1.442695
      %v964 = vpow.pop %v963
      %v965 = vadd.f32 %v964, 1.0
      %v966 = vrcp.pop %v965
      %v967 = vmul.f32 1.0, %v966
      %v968 = vxor.u32 %v959, 2147483648
      %v969 = vmul.f32 %v968, 1.442695
      %v970 = vpow.pop %v969
      %v971 = vadd.f32 %v970, 1.0
      %v972 = vrcp.pop %v971
      %v973 = vmul.f32 1.0, %v972
      %v974 = vtanh.pop %v960
      %v975 = vxor.u32 %v961, 2147483648
      %v976 = vmul.f32 %v975, 1.442695
      %v977 = vpow.pop %v976
      %v978 = vadd.f32 %v977, 1.0
      %v979 = vrcp.pop %v978
      %v980 = vmul.f32 1.0, %v979
      %v981 = vmul.f32 %v973, %v866
      %v982 = vmul.f32 %v967, %v974
      %v983 = vadd.f32 %v981, %v982
      %v984 = vtanh.pop %v983
      %v985 = vmul.f32 %v980, %v984
      %s986 = scalar_lea.vmem %s199, 8
      %987 = vst [vmem:[%s986] sm:$0xff] %v985
      %s988 = scalar_lea.vmem [#allocation4], 64
      %v989 = vld [vmem:[%s988] sm:$0xff]
      %v990 = vld [vmem:[%s988 + $0x8] sm:$0xff]
      %v991 = vld [vmem:[%s988 + $0x10] sm:$0xff]
      %v992 = vld [vmem:[%s988 + $0x18] sm:$0xff]
      %v993 = vpack.c.bf16 %v985, %v985
      %994 = vmatprep.subr.bf16.mxu0 %v696
      %995 = vmatpush1.bf16.msra.mxu0 %v695
      %996 = vmatprep.subr.bf16.mxu0 %v700
      %997 = vmatpush1.bf16.msra.mxu0 %v699
      %998 = vmatprep.subr.bf16.mxu0 %v704
      %999 = vmatpush1.bf16.msra.mxu0 %v703
      %1000 = vmatprep.subr.bf16.mxu0 %v708
      %1001 = vmatpush1.bf16.msra.mxu0 %v707
      %1002 = vmatprep.subr.bf16.mxu0 %v712
      %1003 = vmatpush1.bf16.msra.mxu0 %v711
      %1004 = vmatprep.subr.bf16.mxu0 %v716
      %1005 = vmatpush1.bf16.msra.mxu0 %v715
      %1006 = vmatprep.subr.bf16.mxu0 %v720
      %1007 = vmatpush1.bf16.msra.mxu0 %v719
      %1008 = vmatprep.subr.bf16.mxu0 %v724
      %1009 = vmatpush1.bf16.msra.mxu0 %v723
      %1010 = vmatprep.subr.bf16.mxu0 0
      %1011 = vmatpush1.bf16.msra.mxu0 0
      %1012 = vmatprep.subr.bf16.mxu0 0
      %1013 = vmatpush1.bf16.msra.mxu0 0
      %1014 = vmatprep.subr.bf16.mxu0 0
      %1015 = vmatpush1.bf16.msra.mxu0 0
      %1016 = vmatprep.subr.bf16.mxu0 0
      %1017 = vmatpush1.bf16.msra.mxu0 0
      %1018 = vmatprep.subr.bf16.mxu0 0
      %1019 = vmatpush1.bf16.msra.mxu0 0
      %1020 = vmatprep.subr.bf16.mxu0 0
      %1021 = vmatpush1.bf16.msra.mxu0 0
      %1022 = vmatprep.subr.bf16.mxu0 0
      %1023 = vmatpush1.bf16.msra.mxu0 0
      %1024 = vmatprep.subr.bf16.mxu0 0
      %1025 = vmatpush1.bf16.msra.mxu0 0
      %1026 = vmatprep.mubr.bf16.mxu0 0
      %1027 = vmatmul.mubr.bf16.gmra.mrb[0].mxu0 %v993
      %v1028 = vpop.f32.mrb[0].mxu0
      %v1029 = vadd.f32 0.0, %v1028
      %v1030 = vpop.f32.mrb[0].mxu0
      %v1031 = vadd.f32 0.0, %v1030
      %v1032 = vpop.f32.mrb[0].mxu0
      %v1033 = vpop.f32.mrb[0].mxu0
      %1034 = vdwg.mxu0
      %1035 = vmatprep.subr.bf16.mxu0 %v698
      %1036 = vmatpush1.bf16.msra.mxu0 %v697
      %1037 = vmatprep.subr.bf16.mxu0 %v702
      %1038 = vmatpush1.bf16.msra.mxu0 %v701
      %1039 = vmatprep.subr.bf16.mxu0 %v706
      %1040 = vmatpush1.bf16.msra.mxu0 %v705
      %1041 = vmatprep.subr.bf16.mxu0 %v710
      %1042 = vmatpush1.bf16.msra.mxu0 %v709
      %1043 = vmatprep.subr.bf16.mxu0 %v714
      %1044 = vmatpush1.bf16.msra.mxu0 %v713
      %1045 = vmatprep.subr.bf16.mxu0 %v718
      %1046 = vmatpush1.bf16.msra.mxu0 %v717
      %1047 = vmatprep.subr.bf16.mxu0 %v722
      %1048 = vmatpush1.bf16.msra.mxu0 %v721
      %1049 = vmatprep.subr.bf16.mxu0 %v726
      %1050 = vmatpush1.bf16.msra.mxu0 %v725
      %1051 = vmatprep.subr.bf16.mxu0 0
      %1052 = vmatpush1.bf16.msra.mxu0 0
      %1053 = vmatprep.subr.bf16.mxu0 0
      %1054 = vmatpush1.bf16.msra.mxu0 0
      %1055 = vmatprep.subr.bf16.mxu0 0
      %1056 = vmatpush1.bf16.msra.mxu0 0
      %1057 = vmatprep.subr.bf16.mxu0 0
      %1058 = vmatpush1.bf16.msra.mxu0 0
      %1059 = vmatprep.subr.bf16.mxu0 0
      %1060 = vmatpush1.bf16.msra.mxu0 0
      %1061 = vmatprep.subr.bf16.mxu0 0
      %1062 = vmatpush1.bf16.msra.mxu0 0
      %1063 = vmatprep.subr.bf16.mxu0 0
      %1064 = vmatpush1.bf16.msra.mxu0 0
      %1065 = vmatprep.subr.bf16.mxu0 0
      %1066 = vmatpush1.bf16.msra.mxu0 0
      %1067 = vmatprep.mubr.bf16.mxu0 0
      %1068 = vmatmul.mubr.bf16.gmra.mrb[0].mxu0 %v993
      %v1069 = vpop.f32.mrb[0].mxu0
      %v1070 = vadd.f32 0.0, %v1069
      %v1071 = vpop.f32.mrb[0].mxu0
      %v1072 = vadd.f32 0.0, %v1071
      %v1073 = vpop.f32.mrb[0].mxu0
      %v1074 = vpop.f32.mrb[0].mxu0
      %1075 = vdwg.mxu0
      %v1076 = vadd.f32 %v989, %v1029
      %v1077 = vadd.f32 %v990, %v1031
      %v1078 = vadd.f32 %v991, %v1070
      %v1079 = vadd.f32 %v992, %v1072
      %v1080 = vxor.u32 %v1076, 2147483648
      %v1081 = vmul.f32 %v1080, 1.442695
      %v1082 = vpow.pop %v1081
      %v1083 = vadd.f32 %v1082, 1.0
      %v1084 = vrcp.pop %v1083
      %v1085 = vmul.f32 1.0, %v1084
      %v1086 = vxor.u32 %v1077, 2147483648
      %v1087 = vmul.f32 %v1086, 1.442695
      %v1088 = vpow.pop %v1087
      %v1089 = vadd.f32 %v1088, 1.0
      %v1090 = vrcp.pop %v1089
      %v1091 = vmul.f32 1.0, %v1090
      %v1092 = vtanh.pop %v1078
      %v1093 = vxor.u32 %v1079, 2147483648
      %v1094 = vmul.f32 %v1093, 1.442695
      %v1095 = vpow.pop %v1094
      %v1096 = vadd.f32 %v1095, 1.0
      %v1097 = vrcp.pop %v1096
      %v1098 = vmul.f32 1.0, %v1097
      %v1099 = vmul.f32 %v1091, %v983
      %v1100 = vmul.f32 %v1085, %v1092
      %v1101 = vadd.f32 %v1099, %v1100
      %v1102 = vtanh.pop %v1101
      %v1103 = vmul.f32 %v1098, %v1102
      %s1104 = scalar_lea.vmem %s199, 16
      %1105 = vst [vmem:[%s1104] sm:$0xff] %v1103
      %s1106 = scalar_lea.vmem [#allocation4], 96
      %v1107 = vld [vmem:[%s1106] sm:$0xff]
      %v1108 = vld [vmem:[%s1106 + $0x8] sm:$0xff]
      %v1109 = vld [vmem:[%s1106 + $0x10] sm:$0xff]
      %v1110 = vld [vmem:[%s1106 + $0x18] sm:$0xff]
      %v1111 = vpack.c.bf16 %v1103, %v1103
      %1112 = vmatprep.subr.bf16.mxu0 %v696
      %1113 = vmatpush1.bf16.msra.mxu0 %v695
      %1114 = vmatprep.subr.bf16.mxu0 %v700
      %1115 = vmatpush1.bf16.msra.mxu0 %v699
      %1116 = vmatprep.subr.bf16.mxu0 %v704
      %1117 = vmatpush1.bf16.msra.mxu0 %v703
      %1118 = vmatprep.subr.bf16.mxu0 %v708
      %1119 = vmatpush1.bf16.msra.mxu0 %v707
      %1120 = vmatprep.subr.bf16.mxu0 %v712
      %1121 = vmatpush1.bf16.msra.mxu0 %v711
      %1122 = vmatprep.subr.bf16.mxu0 %v716
      %1123 = vmatpush1.bf16.msra.mxu0 %v715
      %1124 = vmatprep.subr.bf16.mxu0 %v720
      %1125 = vmatpush1.bf16.msra.mxu0 %v719
      %1126 = vmatprep.subr.bf16.mxu0 %v724
      %1127 = vmatpush1.bf16.msra.mxu0 %v723
      %1128 = vmatprep.subr.bf16.mxu0 0
      %1129 = vmatpush1.bf16.msra.mxu0 0
      %1130 = vmatprep.subr.bf16.mxu0 0
      %1131 = vmatpush1.bf16.msra.mxu0 0
      %1132 = vmatprep.subr.bf16.mxu0 0
      %1133 = vmatpush1.bf16.msra.mxu0 0
      %1134 = vmatprep.subr.bf16.mxu0 0
      %1135 = vmatpush1.bf16.msra.mxu0 0
      %1136 = vmatprep.subr.bf16.mxu0 0
      %1137 = vmatpush1.bf16.msra.mxu0 0
      %1138 = vmatprep.subr.bf16.mxu0 0
      %1139 = vmatpush1.bf16.msra.mxu0 0
      %1140 = vmatprep.subr.bf16.mxu0 0
      %1141 = vmatpush1.bf16.msra.mxu0 0
      %1142 = vmatprep.subr.bf16.mxu0 0
      %1143 = vmatpush1.bf16.msra.mxu0 0
      %1144 = vmatprep.mubr.bf16.mxu0 0
      %1145 = vmatmul.mubr.bf16.gmra.mrb[0].mxu0 %v1111
      %v1146 = vpop.f32.mrb[0].mxu0
      %v1147 = vadd.f32 0.0, %v1146
      %v1148 = vpop.f32.mrb[0].mxu0
      %v1149 = vadd.f32 0.0, %v1148
      %v1150 = vpop.f32.mrb[0].mxu0
      %v1151 = vpop.f32.mrb[0].mxu0
      %1152 = vdwg.mxu0
      %1153 = vmatprep.subr.bf16.mxu0 %v698
      %1154 = vmatpush1.bf16.msra.mxu0 %v697
      %1155 = vmatprep.subr.bf16.mxu0 %v702
      %1156 = vmatpush1.bf16.msra.mxu0 %v701
      %1157 = vmatprep.subr.bf16.mxu0 %v706
      %1158 = vmatpush1.bf16.msra.mxu0 %v705
      %1159 = vmatprep.subr.bf16.mxu0 %v710
      %1160 = vmatpush1.bf16.msra.mxu0 %v709
      %1161 = vmatprep.subr.bf16.mxu0 %v714
      %1162 = vmatpush1.bf16.msra.mxu0 %v713
      %1163 = vmatprep.subr.bf16.mxu0 %v718
      %1164 = vmatpush1.bf16.msra.mxu0 %v717
      %1165 = vmatprep.subr.bf16.mxu0 %v722
      %1166 = vmatpush1.bf16.msra.mxu0 %v721
      %1167 = vmatprep.subr.bf16.mxu0 %v726
      %1168 = vmatpush1.bf16.msra.mxu0 %v725
      %1169 = vmatprep.subr.bf16.mxu0 0
      %1170 = vmatpush1.bf16.msra.mxu0 0
      %1171 = vmatprep.subr.bf16.mxu0 0
      %1172 = vmatpush1.bf16.msra.mxu0 0
      %1173 = vmatprep.subr.bf16.mxu0 0
      %1174 = vmatpush1.bf16.msra.mxu0 0
      %1175 = vmatprep.subr.bf16.mxu0 0
      %1176 = vmatpush1.bf16.msra.mxu0 0
      %1177 = vmatprep.subr.bf16.mxu0 0
      %1178 = vmatpush1.bf16.msra.mxu0 0
      %1179 = vmatprep.subr.bf16.mxu0 0
      %1180 = vmatpush1.bf16.msra.mxu0 0
      %1181 = vmatprep.subr.bf16.mxu0 0
      %1182 = vmatpush1.bf16.msra.mxu0 0
      %1183 = vmatprep.subr.bf16.mxu0 0
      %1184 = vmatpush1.bf16.msra.mxu0 0
      %1185 = vmatprep.mubr.bf16.mxu0 0
      %1186 = vmatmul.mubr.bf16.gmra.mrb[0].mxu0 %v1111
      %v1187 = vpop.f32.mrb[0].mxu0
      %v1188 = vadd.f32 0.0, %v1187
      %v1189 = vpop.f32.mrb[0].mxu0
      %v1190 = vadd.f32 0.0, %v1189
      %v1191 = vpop.f32.mrb[0].mxu0
      %v1192 = vpop.f32.mrb[0].mxu0
      %1193 = vdwg.mxu0
      %v1194 = vadd.f32 %v1107, %v1147
      %v1195 = vadd.f32 %v1108, %v1149
      %v1196 = vadd.f32 %v1109, %v1188
      %v1197 = vadd.f32 %v1110, %v1190
      %v1198 = vxor.u32 %v1194, 2147483648
      %v1199 = vmul.f32 %v1198, 1.442695
      %v1200 = vpow.pop %v1199
      %v1201 = vadd.f32 %v1200, 1.0
      %v1202 = vrcp.pop %v1201
      %v1203 = vmul.f32 1.0, %v1202
      %v1204 = vxor.u32 %v1195, 2147483648
      %v1205 = vmul.f32 %v1204, 1.442695
      %v1206 = vpow.pop %v1205
      %v1207 = vadd.f32 %v1206, 1.0
      %v1208 = vrcp.pop %v1207
      %v1209 = vmul.f32 1.0, %v1208
      %v1210 = vtanh.pop %v1196
      %v1211 = vxor.u32 %v1197, 2147483648
      %v1212 = vmul.f32 %v1211, 1.442695
      %v1213 = vpow.pop %v1212
      %v1214 = vadd.f32 %v1213, 1.0
      %v1215 = vrcp.pop %v1214
      %v1216 = vmul.f32 1.0, %v1215
      %v1217 = vmul.f32 %v1209, %v1101
      %v1218 = vmul.f32 %v1203, %v1210
      %v1219 = vadd.f32 %v1217, %v1218
      %v1220 = vtanh.pop %v1219
      %v1221 = vmul.f32 %v1216, %v1220
      %s1222 = scalar_lea.vmem %s199, 24
      %1223 = vst [vmem:[%s1222] sm:$0xff] %v1221
      %1224 = vst [vmem:[#allocation2] sm:$0xff] %v1221
      %1225 = vst [vmem:[#allocation3] sm:$0xff] %v1219
      %s1226 = smul.u32 4, %s15
      %p1227 = scmp.lt.s32.totalorder %s1226, 7
      %s1228 = scalar_select %p1227, %s1226, 7
      %s1229 = smul.addr %s1228, 8
      %s1230 = scalar_lea.vmem %s4, %s1229
      // Predicated region
      $region41: #{stage5_forward.2} parent=35 // pred_check
        %p1231 = pneg %p122
      $region42: #{stage5_forward.2} parent=35 // pred_check_branch
        %1233 = sbr.rel (%p1231) target = $region44
      $region43: #{stage5_forward.2} parent=35 // pred_region
        %s1234 = smul.u32 4, %s15
      $region44: #{stage5_forward.2} parent=35 // pred_fallthru
        _
    $region36: #{stage5_forward.2} parent=5 // pred_fallthru
      _
    %p1235 = scmp.le.s32.totalorder 2, %s10
    // Predicated region
    $region45: #{stage5_forward.2} parent=5 // pred_check
      %p1236 = pneg %p1235
    $region46: #{stage5_forward.2} parent=5 // pred_check_branch
      %1238 = sbr.rel (%p1236) target = $region48
    $region47: #{stage5_forward.2} parent=5 // pred_region
      %s1239 = ssub.s32 %s10, 2
      // Predicated region
      $region49: #{stage5_forward.2} parent=47 // pred_check
        %p1240 = pneg %p128
      $region50: #{stage5_forward.2} parent=47 // pred_check_branch
        %1242 = sbr.rel (%p1240) target = $region52
      $region51: #{stage5_forward.2} parent=47 // pred_region
        %s1243 = smul.u32 4, %s16
        %p1244 = scmp.lt.s32.totalorder %s1243, 7
        %s1245 = scalar_select %p1244, %s1243, 7
        %s1246 = smul.addr %s1245, 8
        %s1247 = scalar_lea.vmem %s4, %s1246
      $region52: #{stage5_forward.2} parent=47 // pred_fallthru
        _
    $region48: #{stage5_forward.2} parent=5 // pred_fallthru
      _
  $region6: #{stage5_forward.2} parent=0 // loop_footer
    %s14 = sadd.s32 1, %s10
  $region7: #{stage5_forward.2} parent=0 // loop_footer_branch
    %9 = sbr.rel target = $region3
  $region8: #{stage5_forward.2} parent=0 // loop_exit
    _

// kernel: stage5_forward.3
$region0: #{stage5_forward.3}
  #allocation0 [shape = 'u32[]', space=smem, size = 0x4, offset = 0x4, fixed_abs, tag = 'smem constant byte address 0x4 - core index']
  #allocation1 [shape = 'u32[144,128]{1,0:T(1,128)}', space=vmem, size = 0x12000, scoped, tag = 'internal scratch']
  #allocation2 [shape = 'f32[8,8,16]{2,1,0:T(8,128)}', space=vmem, size = 0x8000, scoped, tag = 'scratch operand']
  #allocation3 [shape = 's32[1]{0}', space=sflag, size = 0x4, scoped, tag = 'scoped memory for stage5_forward.3']
  #allocation4 [shape = 'u8[512]{0}', space=smem, size = 0x200, scoped, tag = 'prefetched SMEM operand 0']
  %s0 = inlined_call_operand.vmem [shape: s32[8], index: 0, kind: input, shape index: {}]
  %s1 = inlined_call_operand.vmem [shape: f32[8,8,128], index: 1, kind: input, shape index: {}]
  %s2 = inlined_call_operand.vmem [shape: f32[16,8,128], index: 2, kind: input, shape index: {}]
  %s3 = inlined_call_operand.vmem [shape: f32[16,8,128], index: 3, kind: input, shape index: {}]
  %s4 = inlined_call_operand.vmem [shape: bf16[128,128], index: 4, kind: input, shape index: {}]
  %s5 = inlined_call_operand.vmem [shape: bf16[128,128], index: 5, kind: input, shape index: {}]
  %s6 = inlined_call_operand.vmem [shape: f32[1,128], index: 6, kind: input, shape index: {}]
  %s7 = inlined_call_operand.vmem [shape: f32[1,128], index: 7, kind: input, shape index: {}]
  %s8 = inlined_call_operand.hbm [shape: f32[8,8,128], index: 8, kind: output, shape index: {}]
  %s9 = sld [smem:[#allocation0]]
  $region46: #{stage5_forward.3} parent=0
    _
  %s11 = ssub.s32 1, %s9
  %s12 = scalar_select 0, %s11, %s9
  %s13 = sshll.u32 %s0, 4
  %s14 = int_to_ptr.vmem [resolvable:$true] %s13
  %16 = dma.vmem_to_smem %s14, 16, [#allocation4], [#allocation3]
  %17 = dma.done [#allocation3], 16
  %18 = sfence
  $region1: #{stage5_forward.3} parent=0
    #allocation5 [shape = 'u8[32768]{0}', space=vmem, size = 0x8000, scoped, tag = 'output window, operand 0, single buffered']
    #allocation6 [shape = 's32[1]{0}', space=sflag, size = 0x4, scoped, tag = 'scoped memory for stage5_forward.3']
    %19 = vsyncpa [#allocation6], 0
    // Predicated region
    $region2: #{stage5_forward.3} parent=1 // pred_check
      _
    $region3: #{stage5_forward.3} parent=1 // pred_check_branch
      %21 = sbr.rel (0) target = $region5
    $region4: #{stage5_forward.3} parent=1 // pred_region
      _
    $region5: #{stage5_forward.3} parent=1 // pred_fallthru
      _
    // Predicated region
    $region6: #{stage5_forward.3} parent=1 // pred_check
      _
    $region7: #{stage5_forward.3} parent=1 // pred_check_branch
      %23 = sbr.rel (0) target = $region9
    $region8: #{stage5_forward.3} parent=1 // pred_region
      _
    $region9: #{stage5_forward.3} parent=1 // pred_fallthru
      _
    // Predicated region
    $region10: #{stage5_forward.3} parent=1 // pred_check
      _
    $region11: #{stage5_forward.3} parent=1 // pred_check_branch
      %25 = sbr.rel (0) target = $region13
    $region12: #{stage5_forward.3} parent=1 // pred_region
      _
    $region13: #{stage5_forward.3} parent=1 // pred_fallthru
      _
    // Predicated region
    $region14: #{stage5_forward.3} parent=1 // pred_check
      _
    $region15: #{stage5_forward.3} parent=1 // pred_check_branch
      %27 = sbr.rel (0) target = $region17
    $region16: #{stage5_forward.3} parent=1 // pred_region
      _
    $region17: #{stage5_forward.3} parent=1 // pred_fallthru
      _
    // Predicated region
    $region18: #{stage5_forward.3} parent=1 // pred_check
      _
    $region19: #{stage5_forward.3} parent=1 // pred_check_branch
      %29 = sbr.rel (0) target = $region21
    $region20: #{stage5_forward.3} parent=1 // pred_region
      _
    $region21: #{stage5_forward.3} parent=1 // pred_fallthru
      _
    // Predicated region
    $region22: #{stage5_forward.3} parent=1 // pred_check
      _
    $region23: #{stage5_forward.3} parent=1 // pred_check_branch
      %31 = sbr.rel (0) target = $region25
    $region24: #{stage5_forward.3} parent=1 // pred_region
      _
    $region25: #{stage5_forward.3} parent=1 // pred_fallthru
      _
    // Predicated region
    $region26: #{stage5_forward.3} parent=1 // pred_check
      _
    $region27: #{stage5_forward.3} parent=1 // pred_check_branch
      %33 = sbr.rel (0) target = $region29
    $region28: #{stage5_forward.3} parent=1 // pred_region
      _
    $region29: #{stage5_forward.3} parent=1 // pred_fallthru
      _
    %s35 = smul.u32 0, 8
    %v36 = vld [vmem:[%s2] sm:$0xff]
    %v37 = vld [vmem:[%s2 + $0x8] sm:$0xff]
    %v38 = vld [vmem:[%s2 + $0x10] sm:$0xff]
    %v39 = vld [vmem:[%s2 + $0x18] sm:$0xff]
    %v40 = vld [vmem:[%s2 + $0x20] sm:$0xff]
    %v41 = vld [vmem:[%s2 + $0x28] sm:$0xff]
    %v42 = vld [vmem:[%s2 + $0x30] sm:$0xff]
    %v43 = vld [vmem:[%s2 + $0x38] sm:$0xff]
    %v44 = vld [vmem:[%s2 + $0x40] sm:$0xff]
    %v45 = vld [vmem:[%s2 + $0x48] sm:$0xff]
    %v46 = vld [vmem:[%s2 + $0x50] sm:$0xff]
    %v47 = vld [vmem:[%s2 + $0x58] sm:$0xff]
    %v48 = vld [vmem:[%s2 + $0x60] sm:$0xff]
    %v49 = vld [vmem:[%s2 + $0x68] sm:$0xff]
    %v50 = vld [vmem:[%s2 + $0x70] sm:$0xff]
    %v51 = vld [vmem:[%s2 + $0x78] sm:$0xff]
    %v52 = vld [vmem:[%s3] sm:$0xff]
    %v53 = vld [vmem:[%s3 + $0x8] sm:$0xff]
    %v54 = vld [vmem:[%s3 + $0x10] sm:$0xff]
    %v55 = vld [vmem:[%s3 + $0x18] sm:$0xff]
    %v56 = vld [vmem:[%s3 + $0x20] sm:$0xff]
    %v57 = vld [vmem:[%s3 + $0x28] sm:$0xff]
    %v58 = vld [vmem:[%s3 + $0x30] sm:$0xff]
    %v59 = vld [vmem:[%s3 + $0x38] sm:$0xff]
    %v60 = vld [vmem:[%s3 + $0x40] sm:$0xff]
    %v61 = vld [vmem:[%s3 + $0x48] sm:$0xff]
    %v62 = vld [vmem:[%s3 + $0x50] sm:$0xff]
    %v63 = vld [vmem:[%s3 + $0x58] sm:$0xff]
    %v64 = vld [vmem:[%s3 + $0x60] sm:$0xff]
    %v65 = vld [vmem:[%s3 + $0x68] sm:$0xff]
    %v66 = vld [vmem:[%s3 + $0x70] sm:$0xff]
    %v67 = vld [vmem:[%s3 + $0x78] sm:$0xff]
    %v68 = vadd.f32 %v36, %v52
    %v69 = vadd.f32 %v37, %v53
    %v70 = vadd.f32 %v38, %v54
    %v71 = vadd.f32 %v39, %v55
    %v72 = vadd.f32 %v40, %v56
    %v73 = vadd.f32 %v41, %v57
    %v74 = vadd.f32 %v42, %v58
    %v75 = vadd.f32 %v43, %v59
    %v76 = vadd.f32 %v44, %v60
    %v77 = vadd.f32 %v45, %v61
    %v78 = vadd.f32 %v46, %v62
    %v79 = vadd.f32 %v47, %v63
    %v80 = vadd.f32 %v48, %v64
    %v81 = vadd.f32 %v49, %v65
    %v82 = vadd.f32 %v50, %v66
    %v83 = vadd.f32 %v51, %v67
    %v84 = vld [vmem:[%s1] sm:$0xff]
    %v85 = vld [vmem:[%s1 + $0x8] sm:$0xff]
    %v86 = vld [vmem:[%s1 + $0x10] sm:$0xff]
    %v87 = vld [vmem:[%s1 + $0x18] sm:$0xff]
    %v88 = vld [vmem:[%s1 + $0x20] sm:$0xff]
    %v89 = vld [vmem:[%s1 + $0x28] sm:$0xff]
    %v90 = vld [vmem:[%s1 + $0x30] sm:$0xff]
    %v91 = vld [vmem:[%s1 + $0x38] sm:$0xff]
    %v92 = vcombine.low %v84, %v86
    %v93 = vcombine.high %v84, %v86
    %v95 = vunpack.c.l.s4 1983009808
    %v96 = vunpack.c.0.s8 %v95
    %v97 = vlaneseq
    %v98 = vshrl.u32 %v97, 7
    %v99 = vsub.s32 %v96, %v98
    %v100 = vrot.slane %v92, %v99
    %v102 = vunpack.c.l.s4 1983009808
    %v103 = vunpack.c.0.s8 %v102
    %v104 = vlaneseq
    %v105 = vshrl.u32 %v104, 7
    %v106 = vsub.s32 %v103, %v105
    %v107 = vrot.slane %v93, %v106
    %v108 = vcombine.low %v85, %v87
    %v109 = vcombine.high %v85, %v87
    %v111 = vunpack.c.l.s4 1983009808
    %v112 = vunpack.c.0.s8 %v111
    %v113 = vlaneseq
    %v114 = vshrl.u32 %v113, 7
    %v115 = vsub.s32 %v112, %v114
    %v116 = vrot.slane %v108, %v115
    %v118 = vunpack.c.l.s4 1983009808
    %v119 = vunpack.c.0.s8 %v118
    %v120 = vlaneseq
    %v121 = vshrl.u32 %v120, 7
    %v122 = vsub.s32 %v119, %v121
    %v123 = vrot.slane %v109, %v122
    %v124 = vcombine.low %v88, %v90
    %v125 = vcombine.high %v88, %v90
    %v127 = vunpack.c.l.s4 1983009808
    %v128 = vunpack.c.0.s8 %v127
    %v129 = vlaneseq
    %v130 = vshrl.u32 %v129, 7
    %v131 = vsub.s32 %v128, %v130
    %v132 = vrot.slane %v124, %v131
    %v134 = vunpack.c.l.s4 1983009808
    %v135 = vunpack.c.0.s8 %v134
    %v136 = vlaneseq
    %v137 = vshrl.u32 %v136, 7
    %v138 = vsub.s32 %v135, %v137
    %v139 = vrot.slane %v125, %v138
    %v140 = vcombine.low %v89, %v91
    %v141 = vcombine.high %v89, %v91
    %v143 = vunpack.c.l.s4 1983009808
    %v144 = vunpack.c.0.s8 %v143
    %v145 = vlaneseq
    %v146 = vshrl.u32 %v145, 7
    %v147 = vsub.s32 %v144, %v146
    %v148 = vrot.slane %v140, %v147
    %v150 = vunpack.c.l.s4 1983009808
    %v151 = vunpack.c.0.s8 %v150
    %v152 = vlaneseq
    %v153 = vshrl.u32 %v152, 7
    %v154 = vsub.s32 %v151, %v153
    %v155 = vrot.slane %v141, %v154
    %v156 = vcombine.low %v100, %v116
    %v157 = vcombine.high %v100, %v116
    %v159 = vunpack.c.l.s4 1934713408
    %v160 = vunpack.c.0.s8 %v159
    %v161 = vlaneseq
    %v162 = vshrl.u32 %v161, 7
    %v163 = vsub.s32 %v160, %v162
    %v164 = vrot.slane %v156, %v163
    %v166 = vunpack.c.l.s4 1934713408
    %v167 = vunpack.c.0.s8 %v166
    %v168 = vlaneseq
    %v169 = vshrl.u32 %v168, 7
    %v170 = vsub.s32 %v167, %v169
    %v171 = vrot.slane %v157, %v170
    %v172 = vcombine.low %v107, %v123
    %v173 = vcombine.high %v107, %v123
    %v175 = vunpack.c.l.s4 1934713408
    %v176 = vunpack.c.0.s8 %v175
    %v177 = vlaneseq
    %v178 = vshrl.u32 %v177, 7
    %v179 = vsub.s32 %v176, %v178
    %v180 = vrot.slane %v172, %v179
    %v182 = vunpack.c.l.s4 1934713408
    %v183 = vunpack.c.0.s8 %v182
    %v184 = vlaneseq
    %v185 = vshrl.u32 %v184, 7
    %v186 = vsub.s32 %v183, %v185
    %v187 = vrot.slane %v173, %v186
    %v188 = vcombine.low %v132, %v148
    %v189 = vcombine.high %v132, %v148
    %v191 = vunpack.c.l.s4 1934713408
    %v192 = vunpack.c.0.s8 %v191
    %v193 = vlaneseq
    %v194 = vshrl.u32 %v193, 7
    %v195 = vsub.s32 %v192, %v194
    %v196 = vrot.slane %v188, %v195
    %v198 = vunpack.c.l.s4 1934713408
    %v199 = vunpack.c.0.s8 %v198
    %v200 = vlaneseq
    %v201 = vshrl.u32 %v200, 7
    %v202 = vsub.s32 %v199, %v201
    %v203 = vrot.slane %v189, %v202
    %v204 = vcombine.low %v139, %v155
    %v205 = vcombine.high %v139, %v155
    %v207 = vunpack.c.l.s4 1934713408
    %v208 = vunpack.c.0.s8 %v207
    %v209 = vlaneseq
    %v210 = vshrl.u32 %v209, 7
    %v211 = vsub.s32 %v208, %v210
    %v212 = vrot.slane %v204, %v211
    %v214 = vunpack.c.l.s4 1934713408
    %v215 = vunpack.c.0.s8 %v214
    %v216 = vlaneseq
    %v217 = vshrl.u32 %v216, 7
    %v218 = vsub.s32 %v215, %v217
    %v219 = vrot.slane %v205, %v218
    %v220 = vcombine.low %v164, %v196
    %v221 = vcombine.high %v164, %v196
    %v222 = vcombine.low %v171, %v203
    %v223 = vcombine.high %v171, %v203
    %v224 = vcombine.low %v180, %v212
    %v225 = vcombine.high %v180, %v212
    %v226 = vcombine.low %v187, %v219
    %v227 = vcombine.high %v187, %v219
    %v228 = vcombine.low %v68, %v70
    %v229 = vcombine.high %v68, %v70
    %v231 = vunpack.c.l.s4 1983009808
    %v232 = vunpack.c.0.s8 %v231
    %v233 = vlaneseq
    %v234 = vshrl.u32 %v233, 7
    %v235 = vsub.s32 %v232, %v234
    %v236 = vrot.slane %v228, %v235
    %v238 = vunpack.c.l.s4 1983009808
    %v239 = vunpack.c.0.s8 %v238
    %v240 = vlaneseq
    %v241 = vshrl.u32 %v240, 7
    %v242 = vsub.s32 %v239, %v241
    %v243 = vrot.slane %v229, %v242
    %v244 = vcombine.low %v69, %v71
    %v245 = vcombine.high %v69, %v71
    %v247 = vunpack.c.l.s4 1983009808
    %v248 = vunpack.c.0.s8 %v247
    %v249 = vlaneseq
    %v250 = vshrl.u32 %v249, 7
    %v251 = vsub.s32 %v248, %v250
    %v252 = vrot.slane %v244, %v251
    %v254 = vunpack.c.l.s4 1983009808
    %v255 = vunpack.c.0.s8 %v254
    %v256 = vlaneseq
    %v257 = vshrl.u32 %v256, 7
    %v258 = vsub.s32 %v255, %v257
    %v259 = vrot.slane %v245, %v258
    %v260 = vcombine.low %v72, %v74
    %v261 = vcombine.high %v72, %v74
    %v263 = vunpack.c.l.s4 1983009808
    %v264 = vunpack.c.0.s8 %v263
    %v265 = vlaneseq
    %v266 = vshrl.u32 %v265, 7
    %v267 = vsub.s32 %v264, %v266
    %v268 = vrot.slane %v260, %v267
    %v270 = vunpack.c.l.s4 1983009808
    %v271 = vunpack.c.0.s8 %v270
    %v272 = vlaneseq
    %v273 = vshrl.u32 %v272, 7
    %v274 = vsub.s32 %v271, %v273
    %v275 = vrot.slane %v261, %v274
    %v276 = vcombine.low %v73, %v75
    %v277 = vcombine.high %v73, %v75
    %v279 = vunpack.c.l.s4 1983009808
    %v280 = vunpack.c.0.s8 %v279
    %v281 = vlaneseq
    %v282 = vshrl.u32 %v281, 7
    %v283 = vsub.s32 %v280, %v282
    %v284 = vrot.slane %v276, %v283
    %v286 = vunpack.c.l.s4 1983009808
    %v287 = vunpack.c.0.s8 %v286
    %v288 = vlaneseq
    %v289 = vshrl.u32 %v288, 7
    %v290 = vsub.s32 %v287, %v289
    %v291 = vrot.slane %v277, %v290
    %v292 = vcombine.low %v236, %v252
    %v293 = vcombine.high %v236, %v252
    %v295 = vunpack.c.l.s4 1934713408
    %v296 = vunpack.c.0.s8 %v295
    %v297 = vlaneseq
    %v298 = vshrl.u32 %v297, 7
    %v299 = vsub.s32 %v296, %v298
    %v300 = vrot.slane %v292, %v299
    %v302 = vunpack.c.l.s4 1934713408
    %v303 = vunpack.c.0.s8 %v302
    %v304 = vlaneseq
    %v305 = vshrl.u32 %v304, 7
    %v306 = vsub.s32 %v303, %v305
    %v307 = vrot.slane %v293, %v306
    %v308 = vcombine.low %v243, %v259
    %v309 = vcombine.high %v243, %v259
    %v311 = vunpack.c.l.s4 1934713408
    %v312 = vunpack.c.0.s8 %v311
    %v313 = vlaneseq
    %v314 = vshrl.u32 %v313, 7
    %v315 = vsub.s32 %v312, %v314
    %v316 = vrot.slane %v308, %v315
    %v318 = vunpack.c.l.s4 1934713408
    %v319 = vunpack.c.0.s8 %v318
    %v320 = vlaneseq
    %v321 = vshrl.u32 %v320, 7
    %v322 = vsub.s32 %v319, %v321
    %v323 = vrot.slane %v309, %v322
    %v324 = vcombine.low %v268, %v284
    %v325 = vcombine.high %v268, %v284
    %v327 = vunpack.c.l.s4 1934713408
    %v328 = vunpack.c.0.s8 %v327
    %v329 = vlaneseq
    %v330 = vshrl.u32 %v329, 7
    %v331 = vsub.s32 %v328, %v330
    %v332 = vrot.slane %v324, %v331
    %v334 = vunpack.c.l.s4 1934713408
    %v335 = vunpack.c.0.s8 %v334
    %v336 = vlaneseq
    %v337 = vshrl.u32 %v336, 7
    %v338 = vsub.s32 %v335, %v337
    %v339 = vrot.slane %v325, %v338
    %v340 = vcombine.low %v275, %v291
    %v341 = vcombine.high %v275, %v291
    %v343 = vunpack.c.l.s4 1934713408
    %v344 = vunpack.c.0.s8 %v343
    %v345 = vlaneseq
    %v346 = vshrl.u32 %v345, 7
    %v347 = vsub.s32 %v344, %v346
    %v348 = vrot.slane %v340, %v347
    %v350 = vunpack.c.l.s4 1934713408
    %v351 = vunpack.c.0.s8 %v350
    %v352 = vlaneseq
    %v353 = vshrl.u32 %v352, 7
    %v354 = vsub.s32 %v351, %v353
    %v355 = vrot.slane %v341, %v354
    %v356 = vcombine.low %v300, %v332
    %v357 = vcombine.high %v300, %v332
    %v358 = vcombine.low %v307, %v339
    %v359 = vcombine.high %v307, %v339
    %v360 = vcombine.low %v316, %v348
    %v361 = vcombine.high %v316, %v348
    %v362 = vcombine.low %v323, %v355
    %v363 = vcombine.high %v323, %v355
    %v364 = vcombine.low %v76, %v78
    %v365 = vcombine.high %v76, %v78
    %v367 = vunpack.c.l.s4 1983009808
    %v368 = vunpack.c.0.s8 %v367
    %v369 = vlaneseq
    %v370 = vshrl.u32 %v369, 7
    %v371 = vsub.s32 %v368, %v370
    %v372 = vrot.slane %v364, %v371
    %v374 = vunpack.c.l.s4 1983009808
    %v375 = vunpack.c.0.s8 %v374
    %v376 = vlaneseq
    %v377 = vshrl.u32 %v376, 7
    %v378 = vsub.s32 %v375, %v377
    %v379 = vrot.slane %v365, %v378
    %v380 = vcombine.low %v77, %v79
    %v381 = vcombine.high %v77, %v79
    %v383 = vunpack.c.l.s4 1983009808
    %v384 = vunpack.c.0.s8 %v383
    %v385 = vlaneseq
    %v386 = vshrl.u32 %v385, 7
    %v387 = vsub.s32 %v384, %v386
    %v388 = vrot.slane %v380, %v387
    %v390 = vunpack.c.l.s4 1983009808
    %v391 = vunpack.c.0.s8 %v390
    %v392 = vlaneseq
    %v393 = vshrl.u32 %v392, 7
    %v394 = vsub.s32 %v391, %v393
    %v395 = vrot.slane %v381, %v394
    %v396 = vcombine.low %v80, %v82
    %v397 = vcombine.high %v80, %v82
    %v399 = vunpack.c.l.s4 1983009808
    %v400 = vunpack.c.0.s8 %v399
    %v401 = vlaneseq
    %v402 = vshrl.u32 %v401, 7
    %v403 = vsub.s32 %v400, %v402
    %v404 = vrot.slane %v396, %v403
    %v406 = vunpack.c.l.s4 1983009808
    %v407 = vunpack.c.0.s8 %v406
    %v408 = vlaneseq
    %v409 = vshrl.u32 %v408, 7
    %v410 = vsub.s32 %v407, %v409
    %v411 = vrot.slane %v397, %v410
    %v412 = vcombine.low %v81, %v83
    %v413 = vcombine.high %v81, %v83
    %v415 = vunpack.c.l.s4 1983009808
    %v416 = vunpack.c.0.s8 %v415
    %v417 = vlaneseq
    %v418 = vshrl.u32 %v417, 7
    %v419 = vsub.s32 %v416, %v418
    %v420 = vrot.slane %v412, %v419
    %v422 = vunpack.c.l.s4 1983009808
    %v423 = vunpack.c.0.s8 %v422
    %v424 = vlaneseq
    %v425 = vshrl.u32 %v424, 7
    %v426 = vsub.s32 %v423, %v425
    %v427 = vrot.slane %v413, %v426
    %v428 = vcombine.low %v372, %v388
    %v429 = vcombine.high %v372, %v388
    %v431 = vunpack.c.l.s4 1934713408
    %v432 = vunpack.c.0.s8 %v431
    %v433 = vlaneseq
    %v434 = vshrl.u32 %v433, 7
    %v435 = vsub.s32 %v432, %v434
    %v436 = vrot.slane %v428, %v435
    %v438 = vunpack.c.l.s4 1934713408
    %v439 = vunpack.c.0.s8 %v438
    %v440 = vlaneseq
    %v441 = vshrl.u32 %v440, 7
    %v442 = vsub.s32 %v439, %v441
    %v443 = vrot.slane %v429, %v442
    %v444 = vcombine.low %v379, %v395
    %v445 = vcombine.high %v379, %v395
    %v447 = vunpack.c.l.s4 1934713408
    %v448 = vunpack.c.0.s8 %v447
    %v449 = vlaneseq
    %v450 = vshrl.u32 %v449, 7
    %v451 = vsub.s32 %v448, %v450
    %v452 = vrot.slane %v444, %v451
    %v454 = vunpack.c.l.s4 1934713408
    %v455 = vunpack.c.0.s8 %v454
    %v456 = vlaneseq
    %v457 = vshrl.u32 %v456, 7
    %v458 = vsub.s32 %v455, %v457
    %v459 = vrot.slane %v445, %v458
    %v460 = vcombine.low %v404, %v420
    %v461 = vcombine.high %v404, %v420
    %v463 = vunpack.c.l.s4 1934713408
    %v464 = vunpack.c.0.s8 %v463
    %v465 = vlaneseq
    %v466 = vshrl.u32 %v465, 7
    %v467 = vsub.s32 %v464, %v466
    %v468 = vrot.slane %v460, %v467
    %v470 = vunpack.c.l.s4 1934713408
    %v471 = vunpack.c.0.s8 %v470
    %v472 = vlaneseq
    %v473 = vshrl.u32 %v472, 7
    %v474 = vsub.s32 %v471, %v473
    %v475 = vrot.slane %v461, %v474
    %v476 = vcombine.low %v411, %v427
    %v477 = vcombine.high %v411, %v427
    %v479 = vunpack.c.l.s4 1934713408
    %v480 = vunpack.c.0.s8 %v479
    %v481 = vlaneseq
    %v482 = vshrl.u32 %v481, 7
    %v483 = vsub.s32 %v480, %v482
    %v484 = vrot.slane %v476, %v483
    %v486 = vunpack.c.l.s4 1934713408
    %v487 = vunpack.c.0.s8 %v486
    %v488 = vlaneseq
    %v489 = vshrl.u32 %v488, 7
    %v490 = vsub.s32 %v487, %v489
    %v491 = vrot.slane %v477, %v490
    %v492 = vcombine.low %v436, %v468
    %v493 = vcombine.high %v436, %v468
    %v494 = vcombine.low %v443, %v475
    %v495 = vcombine.high %v443, %v475
    %v496 = vcombine.low %v452, %v484
    %v497 = vcombine.high %v452, %v484
    %v498 = vcombine.low %v459, %v491
    %v499 = vcombine.high %v459, %v491
    %v500 = vpack.c.bf16 %v221, %v220
    %v501 = vpack.c.bf16 %v223, %v222
    %v502 = vpack.c.bf16 %v225, %v224
    %v503 = vpack.c.bf16 %v227, %v226
    %v504 = vld [vmem:[%s4] sm:$0xf]
    %v505 = vld [vmem:[%s4 + $0x4] sm:$0xf]
    %v506 = vld [vmem:[%s4 + $0x8] sm:$0xf]
    %v507 = vld [vmem:[%s4 + $0xc] sm:$0xf]
    %v508 = vld [vmem:[%s4 + $0x10] sm:$0xf]
    %v509 = vld [vmem:[%s4 + $0x14] sm:$0xf]
    %v510 = vld [vmem:[%s4 + $0x18] sm:$0xf]
    %v511 = vld [vmem:[%s4 + $0x1c] sm:$0xf]
    %v512 = vld [vmem:[%s4 + $0x20] sm:$0xf]
    %v513 = vld [vmem:[%s4 + $0x24] sm:$0xf]
    %v514 = vld [vmem:[%s4 + $0x28] sm:$0xf]
    %v515 = vld [vmem:[%s4 + $0x2c] sm:$0xf]
    %v516 = vld [vmem:[%s4 + $0x30] sm:$0xf]
    %v517 = vld [vmem:[%s4 + $0x34] sm:$0xf]
    %v518 = vld [vmem:[%s4 + $0x38] sm:$0xf]
    %v519 = vld [vmem:[%s4 + $0x3c] sm:$0xf]
    %v536 = vunpack.c.l.b16 %v504
    %v537 = vunpack.c.l.b16 %v505
    %v538 = vunpack.c.l.b16 %v506
    %v539 = vunpack.c.l.b16 %v507
    %v540 = vunpack.c.l.b16 %v508
    %v541 = vunpack.c.l.b16 %v509
    %v542 = vunpack.c.l.b16 %v510
    %v543 = vunpack.c.l.b16 %v511
    %v544 = vunpack.c.l.b16 %v512
    %v545 = vunpack.c.l.b16 %v513
    %v546 = vunpack.c.l.b16 %v514
    %v547 = vunpack.c.l.b16 %v515
    %v548 = vunpack.c.l.b16 %v516
    %v549 = vunpack.c.l.b16 %v517
    %v550 = vunpack.c.l.b16 %v518
    %v551 = vunpack.c.l.b16 %v519
    %v552 = vpack.c.b16 %v537, %v536
    %v553 = vpack.c.b16 %v539, %v538
    %v554 = vpack.c.b16 %v541, %v540
    %v555 = vpack.c.b16 %v543, %v542
    %v556 = vpack.c.b16 %v545, %v544
    %v557 = vpack.c.b16 %v547, %v546
    %v558 = vpack.c.b16 %v549, %v548
    %v559 = vpack.c.b16 %v551, %v550
    %568 = vmatprep.subr.bf16.mxu0 0
    %569 = vmatpush1.bf16.msra.mxu0 %v552
    %570 = vmatprep.subr.bf16.mxu0 0
    %571 = vmatpush1.bf16.msra.mxu0 %v553
    %572 = vmatprep.subr.bf16.mxu0 0
    %573 = vmatpush1.bf16.msra.mxu0 %v554
    %574 = vmatprep.subr.bf16.mxu0 0
    %575 = vmatpush1.bf16.msra.mxu0 %v555
    %576 = vmatprep.subr.bf16.mxu0 0
    %577 = vmatpush1.bf16.msra.mxu0 %v556
    %578 = vmatprep.subr.bf16.mxu0 0
    %579 = vmatpush1.bf16.msra.mxu0 %v557
    %580 = vmatprep.subr.bf16.mxu0 0
    %581 = vmatpush1.bf16.msra.mxu0 %v558
    %582 = vmatprep.subr.bf16.mxu0 0
    %583 = vmatpush1.bf16.msra.mxu0 %v559
    %584 = vmatprep.subr.bf16.mxu0 0
    %585 = vmatpush1.bf16.msra.mxu0 0
    %586 = vmatprep.subr.bf16.mxu0 0
    %587 = vmatpush1.bf16.msra.mxu0 0
    %588 = vmatprep.subr.bf16.mxu0 0
    %589 = vmatpush1.bf16.msra.mxu0 0
    %590 = vmatprep.subr.bf16.mxu0 0
    %591 = vmatpush1.bf16.msra.mxu0 0
    %592 = vmatprep.subr.bf16.mxu0 0
    %593 = vmatpush1.bf16.msra.mxu0 0
    %594 = vmatprep.subr.bf16.mxu0 0
    %595 = vmatpush1.bf16.msra.mxu0 0
    %596 = vmatprep.subr.bf16.mxu0 0
    %597 = vmatpush1.bf16.msra.mxu0 0
    %598 = vmatprep.subr.bf16.mxu0 0
    %599 = vmatpush1.bf16.msra.mxu0 0
    %600 = vmatprep.mubr.bf16.mxu0 0
    %601 = vmatmul.mubr.bf16.gmra.mrb[0].mxu0 %v500
    %v602 = vpop.f32.mrb[0].mxu0
    %v603 = vadd.f32 0.0, %v602
    %v604 = vpop.f32.mrb[0].mxu0
    %v605 = vpop.f32.mrb[0].mxu0
    %v606 = vadd.f32 0.0, %v605
    %v607 = vpop.f32.mrb[0].mxu0
    %608 = vmatprep.mubr.bf16.mxu0 0
    %609 = vmatmul.mubr.bf16.gmra.mrb[0].mxu0 %v501
    %v610 = vpop.f32.mrb[0].mxu0
    %v611 = vadd.f32 0.0, %v610
    %v612 = vpop.f32.mrb[0].mxu0
    %v613 = vpop.f32.mrb[0].mxu0
    %v614 = vadd.f32 0.0, %v613
    %v615 = vpop.f32.mrb[0].mxu0
    %616 = vmatprep.mubr.bf16.mxu0 0
    %617 = vmatmul.mubr.bf16.gmra.mrb[0].mxu0 %v502
    %v618 = vpop.f32.mrb[0].mxu0
    %v619 = vadd.f32 0.0, %v618
    %v620 = vpop.f32.mrb[0].mxu0
    %v621 = vpop.f32.mrb[0].mxu0
    %v622 = vadd.f32 0.0, %v621
    %v623 = vpop.f32.mrb[0].mxu0
    %624 = vmatprep.mubr.bf16.mxu0 0
    %625 = vmatmul.mubr.bf16.gmra.mrb[0].mxu0 %v503
    %v626 = vpop.f32.mrb[0].mxu0
    %v627 = vadd.f32 0.0, %v626
    %v628 = vpop.f32.mrb[0].mxu0
    %v629 = vpop.f32.mrb[0].mxu0
    %v630 = vadd.f32 0.0, %v629
    %v631 = vpop.f32.mrb[0].mxu0
    %632 = vdwg.mxu0
    %v633 = vpack.c.bf16 %v492, %v356
    %v634 = vpack.c.bf16 %v493, %v357
    %v635 = vpack.c.bf16 %v494, %v358
    %v636 = vpack.c.bf16 %v495, %v359
    %v637 = vpack.c.bf16 %v496, %v360
    %v638 = vpack.c.bf16 %v497, %v361
    %v639 = vpack.c.bf16 %v498, %v362
    %v640 = vpack.c.bf16 %v499, %v363
    %v641 = vld [vmem:[%s5] sm:$0xf]
    %v642 = vld [vmem:[%s5 + $0x4] sm:$0xf]
    %v643 = vld [vmem:[%s5 + $0x8] sm:$0xf]
    %v644 = vld [vmem:[%s5 + $0xc] sm:$0xf]
    %v645 = vld [vmem:[%s5 + $0x10] sm:$0xf]
    %v646 = vld [vmem:[%s5 + $0x14] sm:$0xf]
    %v647 = vld [vmem:[%s5 + $0x18] sm:$0xf]
    %v648 = vld [vmem:[%s5 + $0x1c] sm:$0xf]
    %v649 = vld [vmem:[%s5 + $0x20] sm:$0xf]
    %v650 = vld [vmem:[%s5 + $0x24] sm:$0xf]
    %v651 = vld [vmem:[%s5 + $0x28] sm:$0xf]
    %v652 = vld [vmem:[%s5 + $0x2c] sm:$0xf]
    %v653 = vld [vmem:[%s5 + $0x30] sm:$0xf]
    %v654 = vld [vmem:[%s5 + $0x34] sm:$0xf]
    %v655 = vld [vmem:[%s5 + $0x38] sm:$0xf]
    %v656 = vld [vmem:[%s5 + $0x3c] sm:$0xf]
    %v673 = vunpack.c.l.b16 %v641
    %v674 = vunpack.c.l.b16 %v642
    %v675 = vunpack.c.l.b16 %v643
    %v676 = vunpack.c.l.b16 %v644
    %v677 = vunpack.c.l.b16 %v645
    %v678 = vunpack.c.l.b16 %v646
    %v679 = vunpack.c.l.b16 %v647
    %v680 = vunpack.c.l.b16 %v648
    %v681 = vunpack.c.l.b16 %v649
    %v682 = vunpack.c.l.b16 %v650
    %v683 = vunpack.c.l.b16 %v651
    %v684 = vunpack.c.l.b16 %v652
    %v685 = vunpack.c.l.b16 %v653
    %v686 = vunpack.c.l.b16 %v654
    %v687 = vunpack.c.l.b16 %v655
    %v688 = vunpack.c.l.b16 %v656
    %v689 = vpack.c.b16 %v674, %v673
    %v690 = vpack.c.b16 %v676, %v675
    %v691 = vpack.c.b16 %v678, %v677
    %v692 = vpack.c.b16 %v680, %v679
    %v693 = vpack.c.b16 %v682, %v681
    %v694 = vpack.c.b16 %v684, %v683
    %v695 = vpack.c.b16 %v686, %v685
    %v696 = vpack.c.b16 %v688, %v687
    %705 = vmatprep.subr.bf16.mxu0 0
    %706 = vmatpush1.bf16.msra.mxu0 %v689
    %707 = vmatprep.subr.bf16.mxu0 0
    %708 = vmatpush1.bf16.msra.mxu0 %v690
    %709 = vmatprep.subr.bf16.mxu0 0
    %710 = vmatpush1.bf16.msra.mxu0 %v691
    %711 = vmatprep.subr.bf16.mxu0 0
    %712 = vmatpush1.bf16.msra.mxu0 %v692
    %713 = vmatprep.subr.bf16.mxu0 0
    %714 = vmatpush1.bf16.msra.mxu0 %v693
    %715 = vmatprep.subr.bf16.mxu0 0
    %716 = vmatpush1.bf16.msra.mxu0 %v694
    %717 = vmatprep.subr.bf16.mxu0 0
    %718 = vmatpush1.bf16.msra.mxu0 %v695
    %719 = vmatprep.subr.bf16.mxu0 0
    %720 = vmatpush1.bf16.msra.mxu0 %v696
    %721 = vmatprep.subr.bf16.mxu0 0
    %722 = vmatpush1.bf16.msra.mxu0 0
    %723 = vmatprep.subr.bf16.mxu0 0
    %724 = vmatpush1.bf16.msra.mxu0 0
    %725 = vmatprep.subr.bf16.mxu0 0
    %726 = vmatpush1.bf16.msra.mxu0 0
    %727 = vmatprep.subr.bf16.mxu0 0
    %728 = vmatpush1.bf16.msra.mxu0 0
    %729 = vmatprep.subr.bf16.mxu0 0
    %730 = vmatpush1.bf16.msra.mxu0 0
    %731 = vmatprep.subr.bf16.mxu0 0
    %732 = vmatpush1.bf16.msra.mxu0 0
    %733 = vmatprep.subr.bf16.mxu0 0
    %734 = vmatpush1.bf16.msra.mxu0 0
    %735 = vmatprep.subr.bf16.mxu0 0
    %736 = vmatpush1.bf16.msra.mxu0 0
    %737 = vmatprep.mubr.bf16.mxu0 0
    %738 = vmatmul.mubr.bf16.gmra.mrb[0].mxu0 %v633
    %v739 = vpop.f32.mrb[0].mxu0
    %v740 = vadd.f32 0.0, %v739
    %v741 = vpop.f32.mrb[0].mxu0
    %v742 = vpop.f32.mrb[0].mxu0
    %v743 = vadd.f32 0.0, %v742
    %v744 = vpop.f32.mrb[0].mxu0
    %745 = vmatprep.mubr.bf16.mxu0 0
    %746 = vmatmul.mubr.bf16.gmra.mrb[0].mxu0 %v634
    %v747 = vpop.f32.mrb[0].mxu0
    %v748 = vadd.f32 0.0, %v747
    %v749 = vpop.f32.mrb[0].mxu0
    %v750 = vpop.f32.mrb[0].mxu0
    %v751 = vadd.f32 0.0, %v750
    %v752 = vpop.f32.mrb[0].mxu0
    %753 = vmatprep.mubr.bf16.mxu0 0
    %754 = vmatmul.mubr.bf16.gmra.mrb[0].mxu0 %v635
    %v755 = vpop.f32.mrb[0].mxu0
    %v756 = vadd.f32 0.0, %v755
    %v757 = vpop.f32.mrb[0].mxu0
    %v758 = vpop.f32.mrb[0].mxu0
    %v759 = vadd.f32 0.0, %v758
    %v760 = vpop.f32.mrb[0].mxu0
    %761 = vmatprep.mubr.bf16.mxu0 0
    %762 = vmatmul.mubr.bf16.gmra.mrb[0].mxu0 %v636
    %v763 = vpop.f32.mrb[0].mxu0
    %v764 = vadd.f32 0.0, %v763
    %v765 = vpop.f32.mrb[0].mxu0
    %v766 = vpop.f32.mrb[0].mxu0
    %v767 = vadd.f32 0.0, %v766
    %v768 = vpop.f32.mrb[0].mxu0
    %769 = vmatprep.mubr.bf16.mxu0 0
    %770 = vmatmul.mubr.bf16.gmra.mrb[0].mxu0 %v637
    %v771 = vpop.f32.mrb[0].mxu0
    %v772 = vadd.f32 0.0, %v771
    %v773 = vpop.f32.mrb[0].mxu0
    %v774 = vpop.f32.mrb[0].mxu0
    %v775 = vadd.f32 0.0, %v774
    %v776 = vpop.f32.mrb[0].mxu0
    %777 = vmatprep.mubr.bf16.mxu0 0
    %778 = vmatmul.mubr.bf16.gmra.mrb[0].mxu0 %v638
    %v779 = vpop.f32.mrb[0].mxu0
    %v780 = vadd.f32 0.0, %v779
    %v781 = vpop.f32.mrb[0].mxu0
    %v782 = vpop.f32.mrb[0].mxu0
    %v783 = vadd.f32 0.0, %v782
    %v784 = vpop.f32.mrb[0].mxu0
    %785 = vmatprep.mubr.bf16.mxu0 0
    %786 = vmatmul.mubr.bf16.gmra.mrb[0].mxu0 %v639
    %v787 = vpop.f32.mrb[0].mxu0
    %v788 = vadd.f32 0.0, %v787
    %v789 = vpop.f32.mrb[0].mxu0
    %v790 = vpop.f32.mrb[0].mxu0
    %v791 = vadd.f32 0.0, %v790
    %v792 = vpop.f32.mrb[0].mxu0
    %793 = vmatprep.mubr.bf16.mxu0 0
    %794 = vmatmul.mubr.bf16.gmra.mrb[0].mxu0 %v640
    %v795 = vpop.f32.mrb[0].mxu0
    %v796 = vadd.f32 0.0, %v795
    %v797 = vpop.f32.mrb[0].mxu0
    %v798 = vpop.f32.mrb[0].mxu0
    %v799 = vadd.f32 0.0, %v798
    %v800 = vpop.f32.mrb[0].mxu0
    %801 = vdwg.mxu0
    %v802 = vld [vmem:[%s6] sm:$0x1]
    %v804 = vlaneseq
    %v805 = vshrl.u32 %v804, 7
    %v806 = vsub.s32 0, %v805
    %v807 = vrot.slane %v802, %v806
    %v809 = vadd.f32 %v740, %v807
    %v810 = vadd.f32 %v743, %v807
    %v811 = vadd.f32 %v748, %v807
    %v812 = vadd.f32 %v751, %v807
    %v813 = vadd.f32 %v756, %v807
    %v814 = vadd.f32 %v759, %v807
    %v815 = vadd.f32 %v764, %v807
    %v816 = vadd.f32 %v767, %v807
    %v817 = vadd.f32 %v772, %v807
    %v818 = vadd.f32 %v775, %v807
    %v819 = vadd.f32 %v780, %v807
    %v820 = vadd.f32 %v783, %v807
    %v821 = vadd.f32 %v788, %v807
    %v822 = vadd.f32 %v791, %v807
    %v823 = vadd.f32 %v796, %v807
    %v824 = vadd.f32 %v799, %v807
    %v825 = vld [vmem:[%s7] sm:$0x1]
    %s826 = sld [smem:[#allocation4 + %s35]]
    %s827 = sadd.s32 %s35, 1
    %s828 = sld [smem:[#allocation4 + %s827]]
    %p829 = scmp.gt.s32.totalorder %s826, %s828
    %s830 = scalar_select %p829, %s826, %s828
    %s831 = sadd.s32 %s35, 2
    %s832 = sld [smem:[#allocation4 + %s831]]
    %p833 = scmp.gt.s32.totalorder %s830, %s832
    %s834 = scalar_select %p833, %s830, %s832
    %s835 = sadd.s32 %s35, 3
    %s836 = sld [smem:[#allocation4 + %s835]]
    %p837 = scmp.gt.s32.totalorder %s834, %s836
    %s838 = scalar_select %p837, %s834, %s836
    %s839 = sadd.s32 %s35, 4
    %s840 = sld [smem:[#allocation4 + %s839]]
    %p841 = scmp.gt.s32.totalorder %s838, %s840
    %s842 = scalar_select %p841, %s838, %s840
    %s843 = sadd.s32 %s35, 5
    %s844 = sld [smem:[#allocation4 + %s843]]
    %p845 = scmp.gt.s32.totalorder %s842, %s844
    %s846 = scalar_select %p845, %s842, %s844
    %s847 = sadd.s32 %s35, 6
    %s848 = sld [smem:[#allocation4 + %s847]]
    %p849 = scmp.gt.s32.totalorder %s846, %s848
    %s850 = scalar_select %p849, %s846, %s848
    %s851 = sadd.s32 %s35, 7
    %s852 = sld [smem:[#allocation4 + %s851]]
    %p853 = scmp.gt.s32.totalorder %s850, %s852
    %s854 = scalar_select %p853, %s850, %s852
    %vm855 = vcmask 130048
    %856 = vst.msk [vmem:[#allocation2] sm:$0xff] %vm855, 0.0
    %857 = vst.msk [vmem:[#allocation2 + $0x8] sm:$0xff] %vm855, 0.0
    %858 = vst.msk [vmem:[#allocation2 + $0x10] sm:$0xff] %vm855, 0.0
    %859 = vst.msk [vmem:[#allocation2 + $0x18] sm:$0xff] %vm855, 0.0
    %860 = vst.msk [vmem:[#allocation2 + $0x20] sm:$0xff] %vm855, 0.0
    %861 = vst.msk [vmem:[#allocation2 + $0x28] sm:$0xff] %vm855, 0.0
    %862 = vst.msk [vmem:[#allocation2 + $0x30] sm:$0xff] %vm855, 0.0
    %863 = vst.msk [vmem:[#allocation2 + $0x38] sm:$0xff] %vm855, 0.0
    %p864 = scmp.gt.s32.totalorder %s854, 0
    // Predicated region
    $region30: #{stage5_forward.3} parent=1 // pred_check
      %p865 = pneg %p864
    $region31: #{stage5_forward.3} parent=1 // pred_check_branch
      %867 = sbr.rel (%p865) target = $region33
    $region32: #{stage5_forward.3} parent=1 // pred_region
      %v876 = vcombine.high %v603, %v603
      %v878 = vunpack.c.l.s4 1966171168
      %v879 = vunpack.c.0.s8 %v878
      %v880 = vlaneseq
      %v881 = vshrl.u32 %v880, 7
      %v882 = vsub.s32 %v879, %v881
      %v883 = vrot.slane %v603, %v882
      %v885 = vunpack.c.l.s4 1966171168
      %v886 = vunpack.c.0.s8 %v885
      %v887 = vlaneseq
      %v888 = vshrl.u32 %v887, 7
      %v889 = vsub.s32 %v886, %v888
      %v890 = vrot.slane %v876, %v889
      %v891 = vcombine.high %v883, %v883
      %v892 = vcombine.high %v890, %v890
      %v894 = vunpack.c.l.s4 1966171168
      %v895 = vunpack.c.0.s8 %v894
      %v896 = vlaneseq
      %v897 = vshrl.u32 %v896, 7
      %v898 = vsub.s32 %v895, %v897
      %v899 = vrot.slane %v883, %v898
      %v901 = vunpack.c.l.s4 1966171168
      %v902 = vunpack.c.0.s8 %v901
      %v903 = vlaneseq
      %v904 = vshrl.u32 %v903, 7
      %v905 = vsub.s32 %v902, %v904
      %v906 = vrot.slane %v890, %v905
      %v908 = vunpack.c.l.s4 1966171168
      %v909 = vunpack.c.0.s8 %v908
      %v910 = vlaneseq
      %v911 = vshrl.u32 %v910, 7
      %v912 = vsub.s32 %v909, %v911
      %v913 = vrot.slane %v891, %v912
      %v915 = vunpack.c.l.s4 1966171168
      %v916 = vunpack.c.0.s8 %v915
      %v917 = vlaneseq
      %v918 = vshrl.u32 %v917, 7
      %v919 = vsub.s32 %v916, %v918
      %v920 = vrot.slane %v892, %v919
      %v921 = vcombine.high %v899, %v899
      %v922 = vcombine.high %v906, %v906
      %v923 = vcombine.high %v913, %v913
      %v924 = vcombine.high %v920, %v920
      %v925 = vcombine.high %v606, %v606
      %v927 = vunpack.c.l.s4 1966171168
      %v928 = vunpack.c.0.s8 %v927
      %v929 = vlaneseq
      %v930 = vshrl.u32 %v929, 7
      %v931 = vsub.s32 %v928, %v930
      %v932 = vrot.slane %v606, %v931
      %v934 = vunpack.c.l.s4 1966171168
      %v935 = vunpack.c.0.s8 %v934
      %v936 = vlaneseq
      %v937 = vshrl.u32 %v936, 7
      %v938 = vsub.s32 %v935, %v937
      %v939 = vrot.slane %v925, %v938
      %v940 = vcombine.high %v932, %v932
      %v941 = vcombine.high %v939, %v939
      %v943 = vunpack.c.l.s4 1966171168
      %v944 = vunpack.c.0.s8 %v943
      %v945 = vlaneseq
      %v946 = vshrl.u32 %v945, 7
      %v947 = vsub.s32 %v944, %v946
      %v948 = vrot.slane %v932, %v947
      %v950 = vunpack.c.l.s4 1966171168
      %v951 = vunpack.c.0.s8 %v950
      %v952 = vlaneseq
      %v953 = vshrl.u32 %v952, 7
      %v954 = vsub.s32 %v951, %v953
      %v955 = vrot.slane %v939, %v954
      %v957 = vunpack.c.l.s4 1966171168
      %v958 = vunpack.c.0.s8 %v957
      %v959 = vlaneseq
      %v960 = vshrl.u32 %v959, 7
      %v961 = vsub.s32 %v958, %v960
      %v962 = vrot.slane %v940, %v961
      %v964 = vunpack.c.l.s4 1966171168
      %v965 = vunpack.c.0.s8 %v964
      %v966 = vlaneseq
      %v967 = vshrl.u32 %v966, 7
      %v968 = vsub.s32 %v965, %v967
      %v969 = vrot.slane %v941, %v968
      %v970 = vcombine.high %v948, %v948
      %v971 = vcombine.high %v955, %v955
      %v972 = vcombine.high %v962, %v962
      %v973 = vcombine.high %v969, %v969
      %v974 = vcombine.high %v611, %v611
      %v976 = vunpack.c.l.s4 1966171168
      %v977 = vunpack.c.0.s8 %v976
      %v978 = vlaneseq
      %v979 = vshrl.u32 %v978, 7
      %v980 = vsub.s32 %v977, %v979
      %v981 = vrot.slane %v611, %v980
      %v983 = vunpack.c.l.s4 1966171168
      %v984 = vunpack.c.0.s8 %v983
      %v985 = vlaneseq
      %v986 = vshrl.u32 %v985, 7
      %v987 = vsub.s32 %v984, %v986
      %v988 = vrot.slane %v974, %v987
      %v989 = vcombine.high %v981, %v981
      %v990 = vcombine.high %v988, %v988
      %v992 = vunpack.c.l.s4 1966171168
      %v993 = vunpack.c.0.s8 %v992
      %v994 = vlaneseq
      %v995 = vshrl.u32 %v994, 7
      %v996 = vsub.s32 %v993, %v995
      %v997 = vrot.slane %v981, %v996
      %v999 = vunpack.c.l.s4 1966171168
      %v1000 = vunpack.c.0.s8 %v999
      %v1001 = vlaneseq
      %v1002 = vshrl.u32 %v1001, 7
      %v1003 = vsub.s32 %v1000, %v1002
      %v1004 = vrot.slane %v988, %v1003
      %v1006 = vunpack.c.l.s4 1966171168
      %v1007 = vunpack.c.0.s8 %v1006
      %v1008 = vlaneseq
      %v1009 = vshrl.u32 %v1008, 7
      %v1010 = vsub.s32 %v1007, %v1009
      %v1011 = vrot.slane %v989, %v1010
      %v1013 = vunpack.c.l.s4 1966171168
      %v1014 = vunpack.c.0.s8 %v1013
      %v1015 = vlaneseq
      %v1016 = vshrl.u32 %v1015, 7
      %v1017 = vsub.s32 %v1014, %v1016
      %v1018 = vrot.slane %v990, %v1017
      %v1019 = vcombine.high %v997, %v997
      %v1020 = vcombine.high %v1004, %v1004
      %v1021 = vcombine.high %v1011, %v1011
      %v1022 = vcombine.high %v1018, %v1018
      %v1023 = vcombine.high %v614, %v614
      %v1025 = vunpack.c.l.s4 1966171168
      %v1026 = vunpack.c.0.s8 %v1025
      %v1027 = vlaneseq
      %v1028 = vshrl.u32 %v1027, 7
      %v1029 = vsub.s32 %v1026, %v1028
      %v1030 = vrot.slane %v614, %v1029
      %v1032 = vunpack.c.l.s4 1966171168
      %v1033 = vunpack.c.0.s8 %v1032
      %v1034 = vlaneseq
      %v1035 = vshrl.u32 %v1034, 7
      %v1036 = vsub.s32 %v1033, %v1035
      %v1037 = vrot.slane %v1023, %v1036
      %v1038 = vcombine.high %v1030, %v1030
      %v1039 = vcombine.high %v1037, %v1037
      %v1041 = vunpack.c.l.s4 1966171168
      %v1042 = vunpack.c.0.s8 %v1041
      %v1043 = vlaneseq
      %v1044 = vshrl.u32 %v1043, 7
      %v1045 = vsub.s32 %v1042, %v1044
      %v1046 = vrot.slane %v1030, %v1045
      %v1048 = vunpack.c.l.s4 1966171168
      %v1049 = vunpack.c.0.s8 %v1048
      %v1050 = vlaneseq
      %v1051 = vshrl.u32 %v1050, 7
      %v1052 = vsub.s32 %v1049, %v1051
      %v1053 = vrot.slane %v1037, %v1052
      %v1055 = vunpack.c.l.s4 1966171168
      %v1056 = vunpack.c.0.s8 %v1055
      %v1057 = vlaneseq
      %v1058 = vshrl.u32 %v1057, 7
      %v1059 = vsub.s32 %v1056, %v1058
      %v1060 = vrot.slane %v1038, %v1059
      %v1062 = vunpack.c.l.s4 1966171168
      %v1063 = vunpack.c.0.s8 %v1062
      %v1064 = vlaneseq
      %v1065 = vshrl.u32 %v1064, 7
      %v1066 = vsub.s32 %v1063, %v1065
      %v1067 = vrot.slane %v1039, %v1066
      %v1068 = vcombine.high %v1046, %v1046
      %v1069 = vcombine.high %v1053, %v1053
      %v1070 = vcombine.high %v1060, %v1060
      %v1071 = vcombine.high %v1067, %v1067
      %v1072 = vcombine.high %v619, %v619
      %v1074 = vunpack.c.l.s4 1966171168
      %v1075 = vunpack.c.0.s8 %v1074
      %v1076 = vlaneseq
      %v1077 = vshrl.u32 %v1076, 7
      %v1078 = vsub.s32 %v1075, %v1077
      %v1079 = vrot.slane %v619, %v1078
      %v1081 = vunpack.c.l.s4 1966171168
      %v1082 = vunpack.c.0.s8 %v1081
      %v1083 = vlaneseq
      %v1084 = vshrl.u32 %v1083, 7
      %v1085 = vsub.s32 %v1082, %v1084
      %v1086 = vrot.slane %v1072, %v1085
      %v1087 = vcombine.high %v1079, %v1079
      %v1088 = vcombine.high %v1086, %v1086
      %v1090 = vunpack.c.l.s4 1966171168
      %v1091 = vunpack.c.0.s8 %v1090
      %v1092 = vlaneseq
      %v1093 = vshrl.u32 %v1092, 7
      %v1094 = vsub.s32 %v1091, %v1093
      %v1095 = vrot.slane %v1079, %v1094
      %v1097 = vunpack.c.l.s4 1966171168
      %v1098 = vunpack.c.0.s8 %v1097
      %v1099 = vlaneseq
      %v1100 = vshrl.u32 %v1099, 7
      %v1101 = vsub.s32 %v1098, %v1100
      %v1102 = vrot.slane %v1086, %v1101
      %v1104 = vunpack.c.l.s4 1966171168
      %v1105 = vunpack.c.0.s8 %v1104
      %v1106 = vlaneseq
      %v1107 = vshrl.u32 %v1106, 7
      %v1108 = vsub.s32 %v1105, %v1107
      %v1109 = vrot.slane %v1087, %v1108
      %v1111 = vunpack.c.l.s4 1966171168
      %v1112 = vunpack.c.0.s8 %v1111
      %v1113 = vlaneseq
      %v1114 = vshrl.u32 %v1113, 7
      %v1115 = vsub.s32 %v1112, %v1114
      %v1116 = vrot.slane %v1088, %v1115
      %v1117 = vcombine.high %v1095, %v1095
      %v1118 = vcombine.high %v1102, %v1102
      %v1119 = vcombine.high %v1109, %v1109
      %v1120 = vcombine.high %v1116, %v1116
      %v1121 = vcombine.high %v622, %v622
      %v1123 = vunpack.c.l.s4 1966171168
      %v1124 = vunpack.c.0.s8 %v1123
      %v1125 = vlaneseq
      %v1126 = vshrl.u32 %v1125, 7
      %v1127 = vsub.s32 %v1124, %v1126
      %v1128 = vrot.slane %v622, %v1127
      %v1130 = vunpack.c.l.s4 1966171168
      %v1131 = vunpack.c.0.s8 %v1130
      %v1132 = vlaneseq
      %v1133 = vshrl.u32 %v1132, 7
      %v1134 = vsub.s32 %v1131, %v1133
      %v1135 = vrot.slane %v1121, %v1134
      %v1136 = vcombine.high %v1128, %v1128
      %v1137 = vcombine.high %v1135, %v1135
      %v1139 = vunpack.c.l.s4 1966171168
      %v1140 = vunpack.c.0.s8 %v1139
      %v1141 = vlaneseq
      %v1142 = vshrl.u32 %v1141, 7
      %v1143 = vsub.s32 %v1140, %v1142
      %v1144 = vrot.slane %v1128, %v1143
      %v1146 = vunpack.c.l.s4 1966171168
      %v1147 = vunpack.c.0.s8 %v1146
      %v1148 = vlaneseq
      %v1149 = vshrl.u32 %v1148, 7
      %v1150 = vsub.s32 %v1147, %v1149
      %v1151 = vrot.slane %v1135, %v1150
      %v1153 = vunpack.c.l.s4 1966171168
      %v1154 = vunpack.c.0.s8 %v1153
      %v1155 = vlaneseq
      %v1156 = vshrl.u32 %v1155, 7
      %v1157 = vsub.s32 %v1154, %v1156
      %v1158 = vrot.slane %v1136, %v1157
      %v1160 = vunpack.c.l.s4 1966171168
      %v1161 = vunpack.c.0.s8 %v1160
      %v1162 = vlaneseq
      %v1163 = vshrl.u32 %v1162, 7
      %v1164 = vsub.s32 %v1161, %v1163
      %v1165 = vrot.slane %v1137, %v1164
      %v1166 = vcombine.high %v1144, %v1144
      %v1167 = vcombine.high %v1151, %v1151
      %v1168 = vcombine.high %v1158, %v1158
      %v1169 = vcombine.high %v1165, %v1165
      %v1170 = vcombine.high %v627, %v627
      %v1172 = vunpack.c.l.s4 1966171168
      %v1173 = vunpack.c.0.s8 %v1172
      %v1174 = vlaneseq
      %v1175 = vshrl.u32 %v1174, 7
      %v1176 = vsub.s32 %v1173, %v1175
      %v1177 = vrot.slane %v627, %v1176
      %v1179 = vunpack.c.l.s4 1966171168
      %v1180 = vunpack.c.0.s8 %v1179
      %v1181 = vlaneseq
      %v1182 = vshrl.u32 %v1181, 7
      %v1183 = vsub.s32 %v1180, %v1182
      %v1184 = vrot.slane %v1170, %v1183
      %v1185 = vcombine.high %v1177, %v1177
      %v1186 = vcombine.high %v1184, %v1184
      %v1188 = vunpack.c.l.s4 1966171168
      %v1189 = vunpack.c.0.s8 %v1188
      %v1190 = vlaneseq
      %v1191 = vshrl.u32 %v1190, 7
      %v1192 = vsub.s32 %v1189, %v1191
      %v1193 = vrot.slane %v1177, %v1192
      %v1195 = vunpack.c.l.s4 1966171168
      %v1196 = vunpack.c.0.s8 %v1195
      %v1197 = vlaneseq
      %v1198 = vshrl.u32 %v1197, 7
      %v1199 = vsub.s32 %v1196, %v1198
      %v1200 = vrot.slane %v1184, %v1199
      %v1202 = vunpack.c.l.s4 1966171168
      %v1203 = vunpack.c.0.s8 %v1202
      %v1204 = vlaneseq
      %v1205 = vshrl.u32 %v1204, 7
      %v1206 = vsub.s32 %v1203, %v1205
      %v1207 = vrot.slane %v1185, %v1206
      %v1209 = vunpack.c.l.s4 1966171168
      %v1210 = vunpack.c.0.s8 %v1209
      %v1211 = vlaneseq
      %v1212 = vshrl.u32 %v1211, 7
      %v1213 = vsub.s32 %v1210, %v1212
      %v1214 = vrot.slane %v1186, %v1213
      %v1215 = vcombine.high %v1193, %v1193
      %v1216 = vcombine.high %v1200, %v1200
      %v1217 = vcombine.high %v1207, %v1207
      %v1218 = vcombine.high %v1214, %v1214
      %v1219 = vcombine.high %v630, %v630
      %v1221 = vunpack.c.l.s4 1966171168
      %v1222 = vunpack.c.0.s8 %v1221
      %v1223 = vlaneseq
      %v1224 = vshrl.u32 %v1223, 7
      %v1225 = vsub.s32 %v1222, %v1224
      %v1226 = vrot.slane %v630, %v1225
      %v1228 = vunpack.c.l.s4 1966171168
      %v1229 = vunpack.c.0.s8 %v1228
      %v1230 = vlaneseq
      %v1231 = vshrl.u32 %v1230, 7
      %v1232 = vsub.s32 %v1229, %v1231
      %v1233 = vrot.slane %v1219, %v1232
      %v1234 = vcombine.high %v1226, %v1226
      %v1235 = vcombine.high %v1233, %v1233
      %v1237 = vunpack.c.l.s4 1966171168
      %v1238 = vunpack.c.0.s8 %v1237
      %v1239 = vlaneseq
      %v1240 = vshrl.u32 %v1239, 7
      %v1241 = vsub.s32 %v1238, %v1240
      %v1242 = vrot.slane %v1226, %v1241
      %v1244 = vunpack.c.l.s4 1966171168
      %v1245 = vunpack.c.0.s8 %v1244
      %v1246 = vlaneseq
      %v1247 = vshrl.u32 %v1246, 7
      %v1248 = vsub.s32 %v1245, %v1247
      %v1249 = vrot.slane %v1233, %v1248
      %v1251 = vunpack.c.l.s4 1966171168
      %v1252 = vunpack.c.0.s8 %v1251
      %v1253 = vlaneseq
      %v1254 = vshrl.u32 %v1253, 7
      %v1255 = vsub.s32 %v1252, %v1254
      %v1256 = vrot.slane %v1234, %v1255
      %v1258 = vunpack.c.l.s4 1966171168
      %v1259 = vunpack.c.0.s8 %v1258
      %v1260 = vlaneseq
      %v1261 = vshrl.u32 %v1260, 7
      %v1262 = vsub.s32 %v1259, %v1261
      %v1263 = vrot.slane %v1235, %v1262
      %v1264 = vcombine.high %v1242, %v1242
      %v1265 = vcombine.high %v1249, %v1249
      %v1266 = vcombine.high %v1256, %v1256
      %v1267 = vcombine.high %v1263, %v1263
      %v1268 = vlaneseq
      %v1269 = vshrl.u32 %v1268, 7
      %v1270 = vsub.s32 0, %v1269
      %v1271 = vrot.slane %v899, %v1270
      %v1272 = vlaneseq
      %v1273 = vshrl.u32 %v1272, 7
      %v1274 = vsub.s32 0, %v1273
      %v1275 = vrot.slane %v913, %v1274
      %v1276 = vlaneseq
      %v1277 = vshrl.u32 %v1276, 7
      %v1278 = vsub.s32 0, %v1277
      %v1279 = vrot.slane %v921, %v1278
      %v1280 = vlaneseq
      %v1281 = vshrl.u32 %v1280, 7
      %v1282 = vsub.s32 0, %v1281
      %v1283 = vrot.slane %v923, %v1282
      %v1284 = vlaneseq
      %v1285 = vshrl.u32 %v1284, 7
      %v1286 = vsub.s32 0, %v1285
      %v1287 = vrot.slane %v906, %v1286
      %v1288 = vlaneseq
      %v1289 = vshrl.u32 %v1288, 7
      %v1290 = vsub.s32 0, %v1289
      %v1291 = vrot.slane %v920, %v1290
      %v1292 = vlaneseq
      %v1293 = vshrl.u32 %v1292, 7
      %v1294 = vsub.s32 0, %v1293
      %v1295 = vrot.slane %v922, %v1294
      %v1296 = vlaneseq
      %v1297 = vshrl.u32 %v1296, 7
      %v1298 = vsub.s32 0, %v1297
      %v1299 = vrot.slane %v924, %v1298
      %v1300 = vlaneseq
      %v1301 = vshrl.u32 %v1300, 7
      %v1302 = vsub.s32 0, %v1301
      %v1303 = vrot.slane %v948, %v1302
      %v1304 = vlaneseq
      %v1305 = vshrl.u32 %v1304, 7
      %v1306 = vsub.s32 0, %v1305
      %v1307 = vrot.slane %v962, %v1306
      %v1308 = vlaneseq
      %v1309 = vshrl.u32 %v1308, 7
      %v1310 = vsub.s32 0, %v1309
      %v1311 = vrot.slane %v970, %v1310
      %v1312 = vlaneseq
      %v1313 = vshrl.u32 %v1312, 7
      %v1314 = vsub.s32 0, %v1313
      %v1315 = vrot.slane %v972, %v1314
      %v1316 = vlaneseq
      %v1317 = vshrl.u32 %v1316, 7
      %v1318 = vsub.s32 0, %v1317
      %v1319 = vrot.slane %v955, %v1318
      %v1320 = vlaneseq
      %v1321 = vshrl.u32 %v1320, 7
      %v1322 = vsub.s32 0, %v1321
      %v1323 = vrot.slane %v969, %v1322
      %v1324 = vlaneseq
      %v1325 = vshrl.u32 %v1324, 7
      %v1326 = vsub.s32 0, %v1325
      %v1327 = vrot.slane %v971, %v1326
      %v1328 = vlaneseq
      %v1329 = vshrl.u32 %v1328, 7
      %v1330 = vsub.s32 0, %v1329
      %v1331 = vrot.slane %v973, %v1330
      %v1332 = vlaneseq
      %v1333 = vshrl.u32 %v1332, 7
      %v1334 = vsub.s32 0, %v1333
      %v1335 = vrot.slane %v997, %v1334
      %v1336 = vlaneseq
      %v1337 = vshrl.u32 %v1336, 7
      %v1338 = vsub.s32 0, %v1337
      %v1339 = vrot.slane %v1011, %v1338
      %v1340 = vlaneseq
      %v1341 = vshrl.u32 %v1340, 7
      %v1342 = vsub.s32 0, %v1341
      %v1343 = vrot.slane %v1019, %v1342
      %v1344 = vlaneseq
      %v1345 = vshrl.u32 %v1344, 7
      %v1346 = vsub.s32 0, %v1345
      %v1347 = vrot.slane %v1021, %v1346
      %v1348 = vlaneseq
      %v1349 = vshrl.u32 %v1348, 7
      %v1350 = vsub.s32 0, %v1349
      %v1351 = vrot.slane %v1004, %v1350
      %v1352 = vlaneseq
      %v1353 = vshrl.u32 %v1352, 7
      %v1354 = vsub.s32 0, %v1353
      %v1355 = vrot.slane %v1018, %v1354
      %v1356 = vlaneseq
      %v1357 = vshrl.u32 %v1356, 7
      %v1358 = vsub.s32 0, %v1357
      %v1359 = vrot.slane %v1020, %v1358
      %v1360 = vlaneseq
      %v1361 = vshrl.u32 %v1360, 7
      %v1362 = vsub.s32 0, %v1361
      %v1363 = vrot.slane %v1022, %v1362
      %v1364 = vlaneseq
      %v1365 = vshrl.u32 %v1364, 7
      %v1366 = vsub.s32 0, %v1365
      %v1367 = vrot.slane %v1046, %v1366
      %v1368 = vlaneseq
      %v1369 = vshrl.u32 %v1368, 7
      %v1370 = vsub.s32 0, %v1369
      %v1371 = vrot.slane %v1060, %v1370
      %v1372 = vlaneseq
      %v1373 = vshrl.u32 %v1372, 7
      %v1374 = vsub.s32 0, %v1373
      %v1375 = vrot.slane %v1068, %v1374
      %v1376 = vlaneseq
      %v1377 = vshrl.u32 %v1376, 7
      %v1378 = vsub.s32 0, %v1377
      %v1379 = vrot.slane %v1070, %v1378
      %v1380 = vlaneseq
      %v1381 = vshrl.u32 %v1380, 7
      %v1382 = vsub.s32 0, %v1381
      %v1383 = vrot.slane %v1053, %v1382
      %v1384 = vlaneseq
      %v1385 = vshrl.u32 %v1384, 7
      %v1386 = vsub.s32 0, %v1385
      %v1387 = vrot.slane %v1067, %v1386
      %v1388 = vlaneseq
      %v1389 = vshrl.u32 %v1388, 7
      %v1390 = vsub.s32 0, %v1389
      %v1391 = vrot.slane %v1069, %v1390
      %v1392 = vlaneseq
      %v1393 = vshrl.u32 %v1392, 7
      %v1394 = vsub.s32 0, %v1393
      %v1395 = vrot.slane %v1071, %v1394
      %v1396 = vlaneseq
      %v1397 = vshrl.u32 %v1396, 7
      %v1398 = vsub.s32 0, %v1397
      %v1399 = vrot.slane %v1095, %v1398
      %v1400 = vlaneseq
      %v1401 = vshrl.u32 %v1400, 7
      %v1402 = vsub.s32 0, %v1401
      %v1403 = vrot.slane %v1109, %v1402
      %v1404 = vlaneseq
      %v1405 = vshrl.u32 %v1404, 7
      %v1406 = vsub.s32 0, %v1405
      %v1407 = vrot.slane %v1117, %v1406
      %v1408 = vlaneseq
      %v1409 = vshrl.u32 %v1408, 7
      %v1410 = vsub.s32 0, %v1409
      %v1411 = vrot.slane %v1119, %v1410
      %v1412 = vlaneseq
      %v1413 = vshrl.u32 %v1412, 7
      %v1414 = vsub.s32 0, %v1413
      %v1415 = vrot.slane %v1102, %v1414
      %v1416 = vlaneseq
      %v1417 = vshrl.u32 %v1416, 7
      %v1418 = vsub.s32 0, %v1417
      %v1419 = vrot.slane %v1116, %v1418
      %v1420 = vlaneseq
      %v1421 = vshrl.u32 %v1420, 7
      %v1422 = vsub.s32 0, %v1421
      %v1423 = vrot.slane %v1118, %v1422
      %v1424 = vlaneseq
      %v1425 = vshrl.u32 %v1424, 7
      %v1426 = vsub.s32 0, %v1425
      %v1427 = vrot.slane %v1120, %v1426
      %v1428 = vlaneseq
      %v1429 = vshrl.u32 %v1428, 7
      %v1430 = vsub.s32 0, %v1429
      %v1431 = vrot.slane %v1144, %v1430
      %v1432 = vlaneseq
      %v1433 = vshrl.u32 %v1432, 7
      %v1434 = vsub.s32 0, %v1433
      %v1435 = vrot.slane %v1158, %v1434
      %v1436 = vlaneseq
      %v1437 = vshrl.u32 %v1436, 7
      %v1438 = vsub.s32 0, %v1437
      %v1439 = vrot.slane %v1166, %v1438
      %v1440 = vlaneseq
      %v1441 = vshrl.u32 %v1440, 7
      %v1442 = vsub.s32 0, %v1441
      %v1443 = vrot.slane %v1168, %v1442
      %v1444 = vlaneseq
      %v1445 = vshrl.u32 %v1444, 7
      %v1446 = vsub.s32 0, %v1445
      %v1447 = vrot.slane %v1151, %v1446
      %v1448 = vlaneseq
      %v1449 = vshrl.u32 %v1448, 7
      %v1450 = vsub.s32 0, %v1449
      %v1451 = vrot.slane %v1165, %v1450
      %v1452 = vlaneseq
      %v1453 = vshrl.u32 %v1452, 7
      %v1454 = vsub.s32 0, %v1453
      %v1455 = vrot.slane %v1167, %v1454
      %v1456 = vlaneseq
      %v1457 = vshrl.u32 %v1456, 7
      %v1458 = vsub.s32 0, %v1457
      %v1459 = vrot.slane %v1169, %v1458
      %v1460 = vlaneseq
      %v1461 = vshrl.u32 %v1460, 7
      %v1462 = vsub.s32 0, %v1461
      %v1463 = vrot.slane %v1193, %v1462
      %v1464 = vlaneseq
      %v1465 = vshrl.u32 %v1464, 7
      %v1466 = vsub.s32 0, %v1465
      %v1467 = vrot.slane %v1207, %v1466
      %v1468 = vlaneseq
      %v1469 = vshrl.u32 %v1468, 7
      %v1470 = vsub.s32 0, %v1469
      %v1471 = vrot.slane %v1215, %v1470
      %v1472 = vlaneseq
      %v1473 = vshrl.u32 %v1472, 7
      %v1474 = vsub.s32 0, %v1473
      %v1475 = vrot.slane %v1217, %v1474
      %v1476 = vlaneseq
      %v1477 = vshrl.u32 %v1476, 7
      %v1478 = vsub.s32 0, %v1477
      %v1479 = vrot.slane %v1200, %v1478
      %v1480 = vlaneseq
      %v1481 = vshrl.u32 %v1480, 7
      %v1482 = vsub.s32 0, %v1481
      %v1483 = vrot.slane %v1214, %v1482
      %v1484 = vlaneseq
      %v1485 = vshrl.u32 %v1484, 7
      %v1486 = vsub.s32 0, %v1485
      %v1487 = vrot.slane %v1216, %v1486
      %v1488 = vlaneseq
      %v1489 = vshrl.u32 %v1488, 7
      %v1490 = vsub.s32 0, %v1489
      %v1491 = vrot.slane %v1218, %v1490
      %v1492 = vlaneseq
      %v1493 = vshrl.u32 %v1492, 7
      %v1494 = vsub.s32 0, %v1493
      %v1495 = vrot.slane %v1242, %v1494
      %v1496 = vlaneseq
      %v1497 = vshrl.u32 %v1496, 7
      %v1498 = vsub.s32 0, %v1497
      %v1499 = vrot.slane %v1256, %v1498
      %v1500 = vlaneseq
      %v1501 = vshrl.u32 %v1500, 7
      %v1502 = vsub.s32 0, %v1501
      %v1503 = vrot.slane %v1264, %v1502
      %v1504 = vlaneseq
      %v1505 = vshrl.u32 %v1504, 7
      %v1506 = vsub.s32 0, %v1505
      %v1507 = vrot.slane %v1266, %v1506
      %v1508 = vlaneseq
      %v1509 = vshrl.u32 %v1508, 7
      %v1510 = vsub.s32 0, %v1509
      %v1511 = vrot.slane %v1249, %v1510
      %v1512 = vlaneseq
      %v1513 = vshrl.u32 %v1512, 7
      %v1514 = vsub.s32 0, %v1513
      %v1515 = vrot.slane %v1263, %v1514
      %v1516 = vlaneseq
      %v1517 = vshrl.u32 %v1516, 7
      %v1518 = vsub.s32 0, %v1517
      %v1519 = vrot.slane %v1265, %v1518
      %v1520 = vlaneseq
      %v1521 = vshrl.u32 %v1520, 7
      %v1522 = vsub.s32 0, %v1521
      %v1523 = vrot.slane %v1267, %v1522
      %v1588 = vadd.f32 %v1271, %v809
      %v1589 = vadd.f32 %v1275, %v809
      %v1590 = vadd.f32 %v1279, %v809
      %v1591 = vadd.f32 %v1283, %v809
      %v1592 = vadd.f32 %v1287, %v809
      %v1593 = vadd.f32 %v1291, %v809
      %v1594 = vadd.f32 %v1295, %v809
      %v1595 = vadd.f32 %v1299, %v809
      %v1596 = vadd.f32 %v1303, %v811
      %v1597 = vadd.f32 %v1307, %v811
      %v1598 = vadd.f32 %v1311, %v811
      %v1599 = vadd.f32 %v1315, %v811
      %v1600 = vadd.f32 %v1319, %v811
      %v1601 = vadd.f32 %v1323, %v811
      %v1602 = vadd.f32 %v1327, %v811
      %v1603 = vadd.f32 %v1331, %v811
      %v1604 = vadd.f32 %v1335, %v813
      %v1605 = vadd.f32 %v1339, %v813
      %v1606 = vadd.f32 %v1343, %v813
      %v1607 = vadd.f32 %v1347, %v813
      %v1608 = vadd.f32 %v1351, %v813
      %v1609 = vadd.f32 %v1355, %v813
      %v1610 = vadd.f32 %v1359, %v813
      %v1611 = vadd.f32 %v1363, %v813
      %v1612 = vadd.f32 %v1367, %v815
      %v1613 = vadd.f32 %v1371, %v815
      %v1614 = vadd.f32 %v1375, %v815
      %v1615 = vadd.f32 %v1379, %v815
      %v1616 = vadd.f32 %v1383, %v815
      %v1617 = vadd.f32 %v1387, %v815
      %v1618 = vadd.f32 %v1391, %v815
      %v1619 = vadd.f32 %v1395, %v815
      %v1620 = vadd.f32 %v1399, %v817
      %v1621 = vadd.f32 %v1403, %v817
      %v1622 = vadd.f32 %v1407, %v817
      %v1623 = vadd.f32 %v1411, %v817
      %v1624 = vadd.f32 %v1415, %v817
      %v1625 = vadd.f32 %v1419, %v817
      %v1626 = vadd.f32 %v1423, %v817
      %v1627 = vadd.f32 %v1427, %v817
      %v1628 = vadd.f32 %v1431, %v819
      %v1629 = vadd.f32 %v1435, %v819
      %v1630 = vadd.f32 %v1439, %v819
      %v1631 = vadd.f32 %v1443, %v819
      %v1632 = vadd.f32 %v1447, %v819
      %v1633 = vadd.f32 %v1451, %v819
      %v1634 = vadd.f32 %v1455, %v819
      %v1635 = vadd.f32 %v1459, %v819
      %v1636 = vadd.f32 %v1463, %v821
      %v1637 = vadd.f32 %v1467, %v821
      %v1638 = vadd.f32 %v1471, %v821
      %v1639 = vadd.f32 %v1475, %v821
      %v1640 = vadd.f32 %v1479, %v821
      %v1641 = vadd.f32 %v1483, %v821
      %v1642 = vadd.f32 %v1487, %v821
      %v1643 = vadd.f32 %v1491, %v821
      %v1644 = vadd.f32 %v1495, %v823
      %v1645 = vadd.f32 %v1499, %v823
      %v1646 = vadd.f32 %v1503, %v823
      %v1647 = vadd.f32 %v1507, %v823
      %v1648 = vadd.f32 %v1511, %v823
      %v1649 = vadd.f32 %v1515, %v823
      %v1650 = vadd.f32 %v1519, %v823
      %v1651 = vadd.f32 %v1523, %v823
      %v1652 = vtanh.pop %v1588
      %v1653 = vtanh.pop %v1589
      %v1654 = vtanh.pop %v1590
      %v1655 = vtanh.pop %v1591
      %v1656 = vtanh.pop %v1592
      %v1657 = vtanh.pop %v1593
      %v1658 = vtanh.pop %v1594
      %v1659 = vtanh.pop %v1595
      %v1660 = vtanh.pop %v1596
      %v1661 = vtanh.pop %v1597
      %v1662 = vtanh.pop %v1598
      %v1663 = vtanh.pop %v1599
      %v1664 = vtanh.pop %v1600
      %v1665 = vtanh.pop %v1601
      %v1666 = vtanh.pop %v1602
      %v1667 = vtanh.pop %v1603
      %v1668 = vtanh.pop %v1604
      %v1669 = vtanh.pop %v1605
      %v1670 = vtanh.pop %v1606
      %v1671 = vtanh.pop %v1607
      %v1672 = vtanh.pop %v1608
      %v1673 = vtanh.pop %v1609
      %v1674 = vtanh.pop %v1610
      %v1675 = vtanh.pop %v1611
      %v1676 = vtanh.pop %v1612
      %v1677 = vtanh.pop %v1613
      %v1678 = vtanh.pop %v1614
      %v1679 = vtanh.pop %v1615
      %v1680 = vtanh.pop %v1616
      %v1681 = vtanh.pop %v1617
      %v1682 = vtanh.pop %v1618
      %v1683 = vtanh.pop %v1619
      %v1684 = vtanh.pop %v1620
      %v1685 = vtanh.pop %v1621
      %v1686 = vtanh.pop %v1622
      %v1687 = vtanh.pop %v1623
      %v1688 = vtanh.pop %v1624
      %v1689 = vtanh.pop %v1625
      %v1690 = vtanh.pop %v1626
      %v1691 = vtanh.pop %v1627
      %v1692 = vtanh.pop %v1628
      %v1693 = vtanh.pop %v1629
      %v1694 = vtanh.pop %v1630
      %v1695 = vtanh.pop %v1631
      %v1696 = vtanh.pop %v1632
      %v1697 = vtanh.pop %v1633
      %v1698 = vtanh.pop %v1634
      %v1699 = vtanh.pop %v1635
      %v1700 = vtanh.pop %v1636
      %v1701 = vtanh.pop %v1637
      %v1702 = vtanh.pop %v1638
      %v1703 = vtanh.pop %v1639
      %v1704 = vtanh.pop %v1640
      %v1705 = vtanh.pop %v1641
      %v1706 = vtanh.pop %v1642
      %v1707 = vtanh.pop %v1643
      %v1708 = vtanh.pop %v1644
      %v1709 = vtanh.pop %v1645
      %v1710 = vtanh.pop %v1646
      %v1711 = vtanh.pop %v1647
      %v1712 = vtanh.pop %v1648
      %v1713 = vtanh.pop %v1649
      %v1714 = vtanh.pop %v1650
      %v1715 = vtanh.pop %v1651
      %v1717 = vlaneseq
      %v1718 = vshrl.u32 %v1717, 7
      %v1719 = vsub.s32 0, %v1718
      %v1720 = vrot.slane %v825, %v1719
      %v1722 = vmul.f32 %v1652, %v1720
      %v1723 = vmul.f32 %v1653, %v1720
      %v1724 = vmul.f32 %v1654, %v1720
      %v1725 = vmul.f32 %v1655, %v1720
      %v1726 = vmul.f32 %v1656, %v1720
      %v1727 = vmul.f32 %v1657, %v1720
      %v1728 = vmul.f32 %v1658, %v1720
      %v1729 = vmul.f32 %v1659, %v1720
      %v1730 = vmul.f32 %v1660, %v1720
      %v1731 = vmul.f32 %v1661, %v1720
      %v1732 = vmul.f32 %v1662, %v1720
      %v1733 = vmul.f32 %v1663, %v1720
      %v1734 = vmul.f32 %v1664, %v1720
      %v1735 = vmul.f32 %v1665, %v1720
      %v1736 = vmul.f32 %v1666, %v1720
      %v1737 = vmul.f32 %v1667, %v1720
      %v1738 = vmul.f32 %v1668, %v1720
      %v1739 = vmul.f32 %v1669, %v1720
      %v1740 = vmul.f32 %v1670, %v1720
      %v1741 = vmul.f32 %v1671, %v1720
      %v1742 = vmul.f32 %v1672, %v1720
      %v1743 = vmul.f32 %v1673, %v1720
      %v1744 = vmul.f32 %v1674, %v1720
      %v1745 = vmul.f32 %v1675, %v1720
      %v1746 = vmul.f32 %v1676, %v1720
      %v1747 = vmul.f32 %v1677, %v1720
      %v1748 = vmul.f32 %v1678, %v1720
      %v1749 = vmul.f32 %v1679, %v1720
      %v1750 = vmul.f32 %v1680, %v1720
      %v1751 = vmul.f32 %v1681, %v1720
      %v1752 = vmul.f32 %v1682, %v1720
      %v1753 = vmul.f32 %v1683, %v1720
      %v1754 = vmul.f32 %v1684, %v1720
      %v1755 = vmul.f32 %v1685, %v1720
      %v1756 = vmul.f32 %v1686, %v1720
      %v1757 = vmul.f32 %v1687, %v1720
      %v1758 = vmul.f32 %v1688, %v1720
      %v1759 = vmul.f32 %v1689, %v1720
      %v1760 = vmul.f32 %v1690, %v1720
      %v1761 = vmul.f32 %v1691, %v1720
      %v1762 = vmul.f32 %v1692, %v1720
      %v1763 = vmul.f32 %v1693, %v1720
      %v1764 = vmul.f32 %v1694, %v1720
      %v1765 = vmul.f32 %v1695, %v1720
      %v1766 = vmul.f32 %v1696, %v1720
      %v1767 = vmul.f32 %v1697, %v1720
      %v1768 = vmul.f32 %v1698, %v1720
      %v1769 = vmul.f32 %v1699, %v1720
      %v1770 = vmul.f32 %v1700, %v1720
      %v1771 = vmul.f32 %v1701, %v1720
      %v1772 = vmul.f32 %v1702, %v1720
      %v1773 = vmul.f32 %v1703, %v1720
      %v1774 = vmul.f32 %v1704, %v1720
      %v1775 = vmul.f32 %v1705, %v1720
      %v1776 = vmul.f32 %v1706, %v1720
      %v1777 = vmul.f32 %v1707, %v1720
      %v1778 = vmul.f32 %v1708, %v1720
      %v1779 = vmul.f32 %v1709, %v1720
      %v1780 = vmul.f32 %v1710, %v1720
      %v1781 = vmul.f32 %v1711, %v1720
      %v1782 = vmul.f32 %v1712, %v1720
      %v1783 = vmul.f32 %v1713, %v1720
      %v1784 = vmul.f32 %v1714, %v1720
      %v1785 = vmul.f32 %v1715, %v1720
      %1786 = vadd.xlane.f32.xlu0 %v1722
      %v1787 = vpop.xlane.xlu0 %1786
      %1788 = vadd.xlane.f32.xlu0 %v1723
      %v1789 = vpop.xlane.xlu0 %1788
      %1790 = vadd.xlane.f32.xlu0 %v1724
      %v1791 = vpop.xlane.xlu0 %1790
      %1792 = vadd.xlane.f32.xlu0 %v1725
      %v1793 = vpop.xlane.xlu0 %1792
      %1794 = vadd.xlane.f32.xlu0 %v1726
      %v1795 = vpop.xlane.xlu0 %1794
      %1796 = vadd.xlane.f32.xlu0 %v1727
      %v1797 = vpop.xlane.xlu0 %1796
      %1798 = vadd.xlane.f32.xlu0 %v1728
      %v1799 = vpop.xlane.xlu0 %1798
      %1800 = vadd.xlane.f32.xlu0 %v1729
      %v1801 = vpop.xlane.xlu0 %1800
      %1802 = vadd.xlane.f32.xlu0 %v1730
      %v1803 = vpop.xlane.xlu0 %1802
      %1804 = vadd.xlane.f32.xlu0 %v1731
      %v1805 = vpop.xlane.xlu0 %1804
      %1806 = vadd.xlane.f32.xlu0 %v1732
      %v1807 = vpop.xlane.xlu0 %1806
      %1808 = vadd.xlane.f32.xlu0 %v1733
      %v1809 = vpop.xlane.xlu0 %1808
      %1810 = vadd.xlane.f32.xlu0 %v1734
      %v1811 = vpop.xlane.xlu0 %1810
      %1812 = vadd.xlane.f32.xlu0 %v1735
      %v1813 = vpop.xlane.xlu0 %1812
      %1814 = vadd.xlane.f32.xlu0 %v1736
      %v1815 = vpop.xlane.xlu0 %1814
      %1816 = vadd.xlane.f32.xlu0 %v1737
      %v1817 = vpop.xlane.xlu0 %1816
      %1818 = vadd.xlane.f32.xlu0 %v1738
      %v1819 = vpop.xlane.xlu0 %1818
      %1820 = vadd.xlane.f32.xlu0 %v1739
      %v1821 = vpop.xlane.xlu0 %1820
      %1822 = vadd.xlane.f32.xlu0 %v1740
      %v1823 = vpop.xlane.xlu0 %1822
      %1824 = vadd.xlane.f32.xlu0 %v1741
      %v1825 = vpop.xlane.xlu0 %1824
      %1826 = vadd.xlane.f32.xlu0 %v1742
      %v1827 = vpop.xlane.xlu0 %1826
      %1828 = vadd.xlane.f32.xlu0 %v1743
      %v1829 = vpop.xlane.xlu0 %1828
      %1830 = vadd.xlane.f32.xlu0 %v1744
      %v1831 = vpop.xlane.xlu0 %1830
      %1832 = vadd.xlane.f32.xlu0 %v1745
      %v1833 = vpop.xlane.xlu0 %1832
      %1834 = vadd.xlane.f32.xlu0 %v1746
      %v1835 = vpop.xlane.xlu0 %1834
      %1836 = vadd.xlane.f32.xlu0 %v1747
      %v1837 = vpop.xlane.xlu0 %1836
      %1838 = vadd.xlane.f32.xlu0 %v1748
      %v1839 = vpop.xlane.xlu0 %1838
      %1840 = vadd.xlane.f32.xlu0 %v1749
      %v1841 = vpop.xlane.xlu0 %1840
      %1842 = vadd.xlane.f32.xlu0 %v1750
      %v1843 = vpop.xlane.xlu0 %1842
      %1844 = vadd.xlane.f32.xlu0 %v1751
      %v1845 = vpop.xlane.xlu0 %1844
      %1846 = vadd.xlane.f32.xlu0 %v1752
      %v1847 = vpop.xlane.xlu0 %1846
      %1848 = vadd.xlane.f32.xlu0 %v1753
      %v1849 = vpop.xlane.xlu0 %1848
      %1850 = vadd.xlane.f32.xlu0 %v1754
      %v1851 = vpop.xlane.xlu0 %1850
      %1852 = vadd.xlane.f32.xlu0 %v1755
      %v1853 = vpop.xlane.xlu0 %1852
      %1854 = vadd.xlane.f32.xlu0 %v1756
      %v1855 = vpop.xlane.xlu0 %1854
      %1856 = vadd.xlane.f32.xlu0 %v1757
      %v1857 = vpop.xlane.xlu0 %1856
      %1858 = vadd.xlane.f32.xlu0 %v1758
      %v1859 = vpop.xlane.xlu0 %1858
      %1860 = vadd.xlane.f32.xlu0 %v1759
      %v1861 = vpop.xlane.xlu0 %1860
      %1862 = vadd.xlane.f32.xlu0 %v1760
      %v1863 = vpop.xlane.xlu0 %1862
      %1864 = vadd.xlane.f32.xlu0 %v1761
      %v1865 = vpop.xlane.xlu0 %1864
      %1866 = vadd.xlane.f32.xlu0 %v1762
      %v1867 = vpop.xlane.xlu0 %1866
      %1868 = vadd.xlane.f32.xlu0 %v1763
      %v1869 = vpop.xlane.xlu0 %1868
      %1870 = vadd.xlane.f32.xlu0 %v1764
      %v1871 = vpop.xlane.xlu0 %1870
      %1872 = vadd.xlane.f32.xlu0 %v1765
      %v1873 = vpop.xlane.xlu0 %1872
      %1874 = vadd.xlane.f32.xlu0 %v1766
      %v1875 = vpop.xlane.xlu0 %1874
      %1876 = vadd.xlane.f32.xlu0 %v1767
      %v1877 = vpop.xlane.xlu0 %1876
      %1878 = vadd.xlane.f32.xlu0 %v1768
      %v1879 = vpop.xlane.xlu0 %1878
      %1880 = vadd.xlane.f32.xlu0 %v1769
      %v1881 = vpop.xlane.xlu0 %1880
      %1882 = vadd.xlane.f32.xlu0 %v1770
      %v1883 = vpop.xlane.xlu0 %1882
      %1884 = vadd.xlane.f32.xlu0 %v1771
      %v1885 = vpop.xlane.xlu0 %1884
      %1886 = vadd.xlane.f32.xlu0 %v1772
      %v1887 = vpop.xlane.xlu0 %1886
      %1888 = vadd.xlane.f32.xlu0 %v1773
      %v1889 = vpop.xlane.xlu0 %1888
      %1890 = vadd.xlane.f32.xlu0 %v1774
      %v1891 = vpop.xlane.xlu0 %1890
      %1892 = vadd.xlane.f32.xlu0 %v1775
      %v1893 = vpop.xlane.xlu0 %1892
      %1894 = vadd.xlane.f32.xlu0 %v1776
      %v1895 = vpop.xlane.xlu0 %1894
      %1896 = vadd.xlane.f32.xlu0 %v1777
      %v1897 = vpop.xlane.xlu0 %1896
      %1898 = vadd.xlane.f32.xlu0 %v1778
      %v1899 = vpop.xlane.xlu0 %1898
      %1900 = vadd.xlane.f32.xlu0 %v1779
      %v1901 = vpop.xlane.xlu0 %1900
      %1902 = vadd.xlane.f32.xlu0 %v1780
      %v1903 = vpop.xlane.xlu0 %1902
      %1904 = vadd.xlane.f32.xlu0 %v1781
      %v1905 = vpop.xlane.xlu0 %1904
      %1906 = vadd.xlane.f32.xlu0 %v1782
      %v1907 = vpop.xlane.xlu0 %1906
      %1908 = vadd.xlane.f32.xlu0 %v1783
      %v1909 = vpop.xlane.xlu0 %1908
      %1910 = vadd.xlane.f32.xlu0 %v1784
      %v1911 = vpop.xlane.xlu0 %1910
      %1912 = vadd.xlane.f32.xlu0 %v1785
      %v1913 = vpop.xlane.xlu0 %1912
      %v1978 = vlaneseq
      %v1979 = vand.u32 %v1978, 127
      %v1980 = vlaneseq
      %v1981 = vshrl.u32 %v1980, 7
      %v1982 = vsub.s32 %v1979, %v1981
      %v1983 = vrot.slane %v1787, %v1982
      %v1984 = vlaneseq
      %v1985 = vshrl.u32 %v1984, 7
      %v1986 = vsub.s32 %v1979, %v1985
      %v1987 = vrot.slane %v1789, %v1986
      %v1988 = vlaneseq
      %v1989 = vshrl.u32 %v1988, 7
      %v1990 = vsub.s32 %v1979, %v1989
      %v1991 = vrot.slane %v1791, %v1990
      %v1992 = vlaneseq
      %v1993 = vshrl.u32 %v1992, 7
      %v1994 = vsub.s32 %v1979, %v1993
      %v1995 = vrot.slane %v1793, %v1994
      %v1996 = vlaneseq
      %v1997 = vshrl.u32 %v1996, 7
      %v1998 = vsub.s32 %v1979, %v1997
      %v1999 = vrot.slane %v1795, %v1998
      %v2000 = vlaneseq
      %v2001 = vshrl.u32 %v2000, 7
      %v2002 = vsub.s32 %v1979, %v2001
      %v2003 = vrot.slane %v1797, %v2002
      %v2004 = vlaneseq
      %v2005 = vshrl.u32 %v2004, 7
      %v2006 = vsub.s32 %v1979, %v2005
      %v2007 = vrot.slane %v1799, %v2006
      %v2008 = vlaneseq
      %v2009 = vshrl.u32 %v2008, 7
      %v2010 = vsub.s32 %v1979, %v2009
      %v2011 = vrot.slane %v1801, %v2010
      %v2012 = vlaneseq
      %v2013 = vshrl.u32 %v2012, 7
      %v2014 = vsub.s32 %v1979, %v2013
      %v2015 = vrot.slane %v1803, %v2014
      %v2016 = vlaneseq
      %v2017 = vshrl.u32 %v2016, 7
      %v2018 = vsub.s32 %v1979, %v2017
      %v2019 = vrot.slane %v1805, %v2018
      %v2020 = vlaneseq
      %v2021 = vshrl.u32 %v2020, 7
      %v2022 = vsub.s32 %v1979, %v2021
      %v2023 = vrot.slane %v1807, %v2022
      %v2024 = vlaneseq
      %v2025 = vshrl.u32 %v2024, 7
      %v2026 = vsub.s32 %v1979, %v2025
      %v2027 = vrot.slane %v1809, %v2026
      %v2028 = vlaneseq
      %v2029 = vshrl.u32 %v2028, 7
      %v2030 = vsub.s32 %v1979, %v2029
      %v2031 = vrot.slane %v1811, %v2030
      %v2032 = vlaneseq
      %v2033 = vshrl.u32 %v2032, 7
      %v2034 = vsub.s32 %v1979, %v2033
      %v2035 = vrot.slane %v1813, %v2034
      %v2036 = vlaneseq
      %v2037 = vshrl.u32 %v2036, 7
      %v2038 = vsub.s32 %v1979, %v2037
      %v2039 = vrot.slane %v1815, %v2038
      %v2040 = vlaneseq
      %v2041 = vshrl.u32 %v2040, 7
      %v2042 = vsub.s32 %v1979, %v2041
      %v2043 = vrot.slane %v1817, %v2042
      %v2044 = vlaneseq
      %v2045 = vshrl.u32 %v2044, 7
      %v2046 = vsub.s32 %v1979, %v2045
      %v2047 = vrot.slane %v1819, %v2046
      %v2048 = vlaneseq
      %v2049 = vshrl.u32 %v2048, 7
      %v2050 = vsub.s32 %v1979, %v2049
      %v2051 = vrot.slane %v1821, %v2050
      %v2052 = vlaneseq
      %v2053 = vshrl.u32 %v2052, 7
      %v2054 = vsub.s32 %v1979, %v2053
      %v2055 = vrot.slane %v1823, %v2054
      %v2056 = vlaneseq
      %v2057 = vshrl.u32 %v2056, 7
      %v2058 = vsub.s32 %v1979, %v2057
      %v2059 = vrot.slane %v1825, %v2058
      %v2060 = vlaneseq
      %v2061 = vshrl.u32 %v2060, 7
      %v2062 = vsub.s32 %v1979, %v2061
      %v2063 = vrot.slane %v1827, %v2062
      %v2064 = vlaneseq
      %v2065 = vshrl.u32 %v2064, 7
      %v2066 = vsub.s32 %v1979, %v2065
      %v2067 = vrot.slane %v1829, %v2066
      %v2068 = vlaneseq
      %v2069 = vshrl.u32 %v2068, 7
      %v2070 = vsub.s32 %v1979, %v2069
      %v2071 = vrot.slane %v1831, %v2070
      %v2072 = vlaneseq
      %v2073 = vshrl.u32 %v2072, 7
      %v2074 = vsub.s32 %v1979, %v2073
      %v2075 = vrot.slane %v1833, %v2074
      %v2076 = vlaneseq
      %v2077 = vshrl.u32 %v2076, 7
      %v2078 = vsub.s32 %v1979, %v2077
      %v2079 = vrot.slane %v1835, %v2078
      %v2080 = vlaneseq
      %v2081 = vshrl.u32 %v2080, 7
      %v2082 = vsub.s32 %v1979, %v2081
      %v2083 = vrot.slane %v1837, %v2082
      %v2084 = vlaneseq
      %v2085 = vshrl.u32 %v2084, 7
      %v2086 = vsub.s32 %v1979, %v2085
      %v2087 = vrot.slane %v1839, %v2086
      %v2088 = vlaneseq
      %v2089 = vshrl.u32 %v2088, 7
      %v2090 = vsub.s32 %v1979, %v2089
      %v2091 = vrot.slane %v1841, %v2090
      %v2092 = vlaneseq
      %v2093 = vshrl.u32 %v2092, 7
      %v2094 = vsub.s32 %v1979, %v2093
      %v2095 = vrot.slane %v1843, %v2094
      %v2096 = vlaneseq
      %v2097 = vshrl.u32 %v2096, 7
      %v2098 = vsub.s32 %v1979, %v2097
      %v2099 = vrot.slane %v1845, %v2098
      %v2100 = vlaneseq
      %v2101 = vshrl.u32 %v2100, 7
      %v2102 = vsub.s32 %v1979, %v2101
      %v2103 = vrot.slane %v1847, %v2102
      %v2104 = vlaneseq
      %v2105 = vshrl.u32 %v2104, 7
      %v2106 = vsub.s32 %v1979, %v2105
      %v2107 = vrot.slane %v1849, %v2106
      %v2108 = vlaneseq
      %v2109 = vshrl.u32 %v2108, 7
      %v2110 = vsub.s32 %v1979, %v2109
      %v2111 = vrot.slane %v1851, %v2110
      %v2112 = vlaneseq
      %v2113 = vshrl.u32 %v2112, 7
      %v2114 = vsub.s32 %v1979, %v2113
      %v2115 = vrot.slane %v1853, %v2114
      %v2116 = vlaneseq
      %v2117 = vshrl.u32 %v2116, 7
      %v2118 = vsub.s32 %v1979, %v2117
      %v2119 = vrot.slane %v1855, %v2118
      %v2120 = vlaneseq
      %v2121 = vshrl.u32 %v2120, 7
      %v2122 = vsub.s32 %v1979, %v2121
      %v2123 = vrot.slane %v1857, %v2122
      %v2124 = vlaneseq
      %v2125 = vshrl.u32 %v2124, 7
      %v2126 = vsub.s32 %v1979, %v2125
      %v2127 = vrot.slane %v1859, %v2126
      %v2128 = vlaneseq
      %v2129 = vshrl.u32 %v2128, 7
      %v2130 = vsub.s32 %v1979, %v2129
      %v2131 = vrot.slane %v1861, %v2130
      %v2132 = vlaneseq
      %v2133 = vshrl.u32 %v2132, 7
      %v2134 = vsub.s32 %v1979, %v2133
      %v2135 = vrot.slane %v1863, %v2134
      %v2136 = vlaneseq
      %v2137 = vshrl.u32 %v2136, 7
      %v2138 = vsub.s32 %v1979, %v2137
      %v2139 = vrot.slane %v1865, %v2138
      %v2140 = vlaneseq
      %v2141 = vshrl.u32 %v2140, 7
      %v2142 = vsub.s32 %v1979, %v2141
      %v2143 = vrot.slane %v1867, %v2142
      %v2144 = vlaneseq
      %v2145 = vshrl.u32 %v2144, 7
      %v2146 = vsub.s32 %v1979, %v2145
      %v2147 = vrot.slane %v1869, %v2146
      %v2148 = vlaneseq
      %v2149 = vshrl.u32 %v2148, 7
      %v2150 = vsub.s32 %v1979, %v2149
      %v2151 = vrot.slane %v1871, %v2150
      %v2152 = vlaneseq
      %v2153 = vshrl.u32 %v2152, 7
      %v2154 = vsub.s32 %v1979, %v2153
      %v2155 = vrot.slane %v1873, %v2154
      %v2156 = vlaneseq
      %v2157 = vshrl.u32 %v2156, 7
      %v2158 = vsub.s32 %v1979, %v2157
      %v2159 = vrot.slane %v1875, %v2158
      %v2160 = vlaneseq
      %v2161 = vshrl.u32 %v2160, 7
      %v2162 = vsub.s32 %v1979, %v2161
      %v2163 = vrot.slane %v1877, %v2162
      %v2164 = vlaneseq
      %v2165 = vshrl.u32 %v2164, 7
      %v2166 = vsub.s32 %v1979, %v2165
      %v2167 = vrot.slane %v1879, %v2166
      %v2168 = vlaneseq
      %v2169 = vshrl.u32 %v2168, 7
      %v2170 = vsub.s32 %v1979, %v2169
      %v2171 = vrot.slane %v1881, %v2170
      %v2172 = vlaneseq
      %v2173 = vshrl.u32 %v2172, 7
      %v2174 = vsub.s32 %v1979, %v2173
      %v2175 = vrot.slane %v1883, %v2174
      %v2176 = vlaneseq
      %v2177 = vshrl.u32 %v2176, 7
      %v2178 = vsub.s32 %v1979, %v2177
      %v2179 = vrot.slane %v1885, %v2178
      %v2180 = vlaneseq
      %v2181 = vshrl.u32 %v2180, 7
      %v2182 = vsub.s32 %v1979, %v2181
      %v2183 = vrot.slane %v1887, %v2182
      %v2184 = vlaneseq
      %v2185 = vshrl.u32 %v2184, 7
      %v2186 = vsub.s32 %v1979, %v2185
      %v2187 = vrot.slane %v1889, %v2186
      %v2188 = vlaneseq
      %v2189 = vshrl.u32 %v2188, 7
      %v2190 = vsub.s32 %v1979, %v2189
      %v2191 = vrot.slane %v1891, %v2190
      %v2192 = vlaneseq
      %v2193 = vshrl.u32 %v2192, 7
      %v2194 = vsub.s32 %v1979, %v2193
      %v2195 = vrot.slane %v1893, %v2194
      %v2196 = vlaneseq
      %v2197 = vshrl.u32 %v2196, 7
      %v2198 = vsub.s32 %v1979, %v2197
      %v2199 = vrot.slane %v1895, %v2198
      %v2200 = vlaneseq
      %v2201 = vshrl.u32 %v2200, 7
      %v2202 = vsub.s32 %v1979, %v2201
      %v2203 = vrot.slane %v1897, %v2202
      %v2204 = vlaneseq
      %v2205 = vshrl.u32 %v2204, 7
      %v2206 = vsub.s32 %v1979, %v2205
      %v2207 = vrot.slane %v1899, %v2206
      %v2208 = vlaneseq
      %v2209 = vshrl.u32 %v2208, 7
      %v2210 = vsub.s32 %v1979, %v2209
      %v2211 = vrot.slane %v1901, %v2210
      %v2212 = vlaneseq
      %v2213 = vshrl.u32 %v2212, 7
      %v2214 = vsub.s32 %v1979, %v2213
      %v2215 = vrot.slane %v1903, %v2214
      %v2216 = vlaneseq
      %v2217 = vshrl.u32 %v2216, 7
      %v2218 = vsub.s32 %v1979, %v2217
      %v2219 = vrot.slane %v1905, %v2218
      %v2220 = vlaneseq
      %v2221 = vshrl.u32 %v2220, 7
      %v2222 = vsub.s32 %v1979, %v2221
      %v2223 = vrot.slane %v1907, %v2222
      %v2224 = vlaneseq
      %v2225 = vshrl.u32 %v2224, 7
      %v2226 = vsub.s32 %v1979, %v2225
      %v2227 = vrot.slane %v1909, %v2226
      %v2228 = vlaneseq
      %v2229 = vshrl.u32 %v2228, 7
      %v2230 = vsub.s32 %v1979, %v2229
      %v2231 = vrot.slane %v1911, %v2230
      %v2232 = vlaneseq
      %v2233 = vshrl.u32 %v2232, 7
      %v2234 = vsub.s32 %v1979, %v2233
      %v2235 = vrot.slane %v1913, %v2234
      %vm2236 = vcmask 1041409
      %v2237 = vsel %vm2236, %v1987, %v1983
      %vm2238 = vcmask 1042434
      %v2239 = vsel %vm2238, %v1991, %v2237
      %vm2240 = vcmask 1043459
      %v2241 = vsel %vm2240, %v1995, %v2239
      %vm2242 = vcmask 1044484
      %v2243 = vsel %vm2242, %v1999, %v2241
      %vm2244 = vcmask 1045509
      %v2245 = vsel %vm2244, %v2003, %v2243
      %vm2246 = vcmask 1046534
      %v2247 = vsel %vm2246, %v2007, %v2245
      %vm2248 = vcmask 1047559
      %v2249 = vsel %vm2248, %v2011, %v2247
      %v2250 = vsel %vm2236, %v2019, %v2015
      %v2251 = vsel %vm2238, %v2023, %v2250
      %v2252 = vsel %vm2240, %v2027, %v2251
      %v2253 = vsel %vm2242, %v2031, %v2252
      %v2254 = vsel %vm2244, %v2035, %v2253
      %v2255 = vsel %vm2246, %v2039, %v2254
      %v2256 = vsel %vm2248, %v2043, %v2255
      %v2257 = vsel %vm2236, %v2051, %v2047
      %v2258 = vsel %vm2238, %v2055, %v2257
      %v2259 = vsel %vm2240, %v2059, %v2258
      %v2260 = vsel %vm2242, %v2063, %v2259
      %v2261 = vsel %vm2244, %v2067, %v2260
      %v2262 = vsel %vm2246, %v2071, %v2261
      %v2263 = vsel %vm2248, %v2075, %v2262
      %v2264 = vsel %vm2236, %v2083, %v2079
      %v2265 = vsel %vm2238, %v2087, %v2264
      %v2266 = vsel %vm2240, %v2091, %v2265
      %v2267 = vsel %vm2242, %v2095, %v2266
      %v2268 = vsel %vm2244, %v2099, %v2267
      %v2269 = vsel %vm2246, %v2103, %v2268
      %v2270 = vsel %vm2248, %v2107, %v2269
      %v2271 = vsel %vm2236, %v2115, %v2111
      %v2272 = vsel %vm2238, %v2119, %v2271
      %v2273 = vsel %vm2240, %v2123, %v2272
      %v2274 = vsel %vm2242, %v2127, %v2273
      %v2275 = vsel %vm2244, %v2131, %v2274
      %v2276 = vsel %vm2246, %v2135, %v2275
      %v2277 = vsel %vm2248, %v2139, %v2276
      %v2278 = vsel %vm2236, %v2147, %v2143
      %v2279 = vsel %vm2238, %v2151, %v2278
      %v2280 = vsel %vm2240, %v2155, %v2279
      %v2281 = vsel %vm2242, %v2159, %v2280
      %v2282 = vsel %vm2244, %v2163, %v2281
      %v2283 = vsel %vm2246, %v2167, %v2282
      %v2284 = vsel %vm2248, %v2171, %v2283
      %v2285 = vsel %vm2236, %v2179, %v2175
      %v2286 = vsel %vm2238, %v2183, %v2285
      %v2287 = vsel %vm2240, %v2187, %v2286
      %v2288 = vsel %vm2242, %v2191, %v2287
      %v2289 = vsel %vm2244, %v2195, %v2288
      %v2290 = vsel %vm2246, %v2199, %v2289
      %v2291 = vsel %vm2248, %v2203, %v2290
      %v2292 = vsel %vm2236, %v2211, %v2207
      %v2293 = vsel %vm2238, %v2215, %v2292
      %v2294 = vsel %vm2240, %v2219, %v2293
      %v2295 = vsel %vm2242, %v2223, %v2294
      %v2296 = vsel %vm2244, %v2227, %v2295
      %v2297 = vsel %vm2246, %v2231, %v2296
      %v2298 = vsel %vm2248, %v2235, %v2297
      %vm2307 = vcmask 64512
      %2308 = vst.msk [vmem:[#allocation2] sm:$0xff] %vm2307, %v2249
      %2309 = vst.msk [vmem:[#allocation2 + $0x8] sm:$0xff] %vm2307, %v2256
      %2310 = vst.msk [vmem:[#allocation2 + $0x10] sm:$0xff] %vm2307, %v2263
      %2311 = vst.msk [vmem:[#allocation2 + $0x18] sm:$0xff] %vm2307, %v2270
      %2312 = vst.msk [vmem:[#allocation2 + $0x20] sm:$0xff] %vm2307, %v2277
      %2313 = vst.msk [vmem:[#allocation2 + $0x28] sm:$0xff] %vm2307, %v2284
      %2314 = vst.msk [vmem:[#allocation2 + $0x30] sm:$0xff] %vm2307, %v2291
      %2315 = vst.msk [vmem:[#allocation2 + $0x38] sm:$0xff] %vm2307, %v2298
    $region33: #{stage5_forward.3} parent=1 // pred_fallthru
      _
    %p2316 = scmp.gt.s32.totalorder %s854, 8
    // Predicated region
    $region34: #{stage5_forward.3} parent=1 // pred_check
      %p2317 = pneg %p2316
    $region35: #{stage5_forward.3} parent=1 // pred_check_branch
      %2319 = sbr.rel (%p2317) target = $region37
    $region36: #{stage5_forward.3} parent=1 // pred_region
      %v2328 = vcombine.high %v603, %v603
      %v2330 = vunpack.c.l.s4 1966171168
      %v2331 = vunpack.c.0.s8 %v2330
      %v2332 = vlaneseq
      %v2333 = vshrl.u32 %v2332, 7
      %v2334 = vsub.s32 %v2331, %v2333
      %v2335 = vrot.slane %v603, %v2334
      %v2337 = vunpack.c.l.s4 1966171168
      %v2338 = vunpack.c.0.s8 %v2337
      %v2339 = vlaneseq
      %v2340 = vshrl.u32 %v2339, 7
      %v2341 = vsub.s32 %v2338, %v2340
      %v2342 = vrot.slane %v2328, %v2341
      %v2343 = vcombine.high %v2335, %v2335
      %v2344 = vcombine.high %v2342, %v2342
      %v2346 = vunpack.c.l.s4 1966171168
      %v2347 = vunpack.c.0.s8 %v2346
      %v2348 = vlaneseq
      %v2349 = vshrl.u32 %v2348, 7
      %v2350 = vsub.s32 %v2347, %v2349
      %v2351 = vrot.slane %v2335, %v2350
      %v2353 = vunpack.c.l.s4 1966171168
      %v2354 = vunpack.c.0.s8 %v2353
      %v2355 = vlaneseq
      %v2356 = vshrl.u32 %v2355, 7
      %v2357 = vsub.s32 %v2354, %v2356
      %v2358 = vrot.slane %v2342, %v2357
      %v2360 = vunpack.c.l.s4 1966171168
      %v2361 = vunpack.c.0.s8 %v2360
      %v2362 = vlaneseq
      %v2363 = vshrl.u32 %v2362, 7
      %v2364 = vsub.s32 %v2361, %v2363
      %v2365 = vrot.slane %v2343, %v2364
      %v2367 = vunpack.c.l.s4 1966171168
      %v2368 = vunpack.c.0.s8 %v2367
      %v2369 = vlaneseq
      %v2370 = vshrl.u32 %v2369, 7
      %v2371 = vsub.s32 %v2368, %v2370
      %v2372 = vrot.slane %v2344, %v2371
      %v2373 = vcombine.high %v2351, %v2351
      %v2374 = vcombine.high %v2358, %v2358
      %v2375 = vcombine.high %v2365, %v2365
      %v2376 = vcombine.high %v2372, %v2372
      %v2377 = vcombine.high %v606, %v606
      %v2379 = vunpack.c.l.s4 1966171168
      %v2380 = vunpack.c.0.s8 %v2379
      %v2381 = vlaneseq
      %v2382 = vshrl.u32 %v2381, 7
      %v2383 = vsub.s32 %v2380, %v2382
      %v2384 = vrot.slane %v606, %v2383
      %v2386 = vunpack.c.l.s4 1966171168
      %v2387 = vunpack.c.0.s8 %v2386
      %v2388 = vlaneseq
      %v2389 = vshrl.u32 %v2388, 7
      %v2390 = vsub.s32 %v2387, %v2389
      %v2391 = vrot.slane %v2377, %v2390
      %v2392 = vcombine.high %v2384, %v2384
      %v2393 = vcombine.high %v2391, %v2391
      %v2395 = vunpack.c.l.s4 1966171168
      %v2396 = vunpack.c.0.s8 %v2395
      %v2397 = vlaneseq
      %v2398 = vshrl.u32 %v2397, 7
      %v2399 = vsub.s32 %v2396, %v2398
      %v2400 = vrot.slane %v2384, %v2399
      %v2402 = vunpack.c.l.s4 1966171168
      %v2403 = vunpack.c.0.s8 %v2402
      %v2404 = vlaneseq
      %v2405 = vshrl.u32 %v2404, 7
      %v2406 = vsub.s32 %v2403, %v2405
      %v2407 = vrot.slane %v2391, %v2406
      %v2409 = vunpack.c.l.s4 1966171168
      %v2410 = vunpack.c.0.s8 %v2409
      %v2411 = vlaneseq
      %v2412 = vshrl.u32 %v2411, 7
      %v2413 = vsub.s32 %v2410, %v2412
      %v2414 = vrot.slane %v2392, %v2413
      %v2416 = vunpack.c.l.s4 1966171168
      %v2417 = vunpack.c.0.s8 %v2416
      %v2418 = vlaneseq
      %v2419 = vshrl.u32 %v2418, 7
      %v2420 = vsub.s32 %v2417, %v2419
      %v2421 = vrot.slane %v2393, %v2420
      %v2422 = vcombine.high %v2400, %v2400
      %v2423 = vcombine.high %v2407, %v2407
      %v2424 = vcombine.high %v2414, %v2414
      %v2425 = vcombine.high %v2421, %v2421
      %v2426 = vcombine.high %v611, %v611
      %v2428 = vunpack.c.l.s4 1966171168
      %v2429 = vunpack.c.0.s8 %v2428
      %v2430 = vlaneseq
      %v2431 = vshrl.u32 %v2430, 7
      %v2432 = vsub.s32 %v2429, %v2431
      %v2433 = vrot.slane %v611, %v2432
      %v2435 = vunpack.c.l.s4 1966171168
      %v2436 = vunpack.c.0.s8 %v2435
      %v2437 = vlaneseq
      %v2438 = vshrl.u32 %v2437, 7
      %v2439 = vsub.s32 %v2436, %v2438
      %v2440 = vrot.slane %v2426, %v2439
      %v2441 = vcombine.high %v2433, %v2433
      %v2442 = vcombine.high %v2440, %v2440
      %v2444 = vunpack.c.l.s4 1966171168
      %v2445 = vunpack.c.0.s8 %v2444
      %v2446 = vlaneseq
      %v2447 = vshrl.u32 %v2446, 7
      %v2448 = vsub.s32 %v2445, %v2447
      %v2449 = vrot.slane %v2433, %v2448
      %v2451 = vunpack.c.l.s4 1966171168
      %v2452 = vunpack.c.0.s8 %v2451
      %v2453 = vlaneseq
      %v2454 = vshrl.u32 %v2453, 7
      %v2455 = vsub.s32 %v2452, %v2454
      %v2456 = vrot.slane %v2440, %v2455
      %v2458 = vunpack.c.l.s4 1966171168
      %v2459 = vunpack.c.0.s8 %v2458
      %v2460 = vlaneseq
      %v2461 = vshrl.u32 %v2460, 7
      %v2462 = vsub.s32 %v2459, %v2461
      %v2463 = vrot.slane %v2441, %v2462
      %v2465 = vunpack.c.l.s4 1966171168
      %v2466 = vunpack.c.0.s8 %v2465
      %v2467 = vlaneseq
      %v2468 = vshrl.u32 %v2467, 7
      %v2469 = vsub.s32 %v2466, %v2468
      %v2470 = vrot.slane %v2442, %v2469
      %v2471 = vcombine.high %v2449, %v2449
      %v2472 = vcombine.high %v2456, %v2456
      %v2473 = vcombine.high %v2463, %v2463
      %v2474 = vcombine.high %v2470, %v2470
      %v2475 = vcombine.high %v614, %v614
      %v2477 = vunpack.c.l.s4 1966171168
      %v2478 = vunpack.c.0.s8 %v2477
      %v2479 = vlaneseq
      %v2480 = vshrl.u32 %v2479, 7
      %v2481 = vsub.s32 %v2478, %v2480
      %v2482 = vrot.slane %v614, %v2481
      %v2484 = vunpack.c.l.s4 1966171168
      %v2485 = vunpack.c.0.s8 %v2484
      %v2486 = vlaneseq
      %v2487 = vshrl.u32 %v2486, 7
      %v2488 = vsub.s32 %v2485, %v2487
      %v2489 = vrot.slane %v2475, %v2488
      %v2490 = vcombine.high %v2482, %v2482
      %v2491 = vcombine.high %v2489, %v2489
      %v2493 = vunpack.c.l.s4 1966171168
      %v2494 = vunpack.c.0.s8 %v2493
      %v2495 = vlaneseq
      %v2496 = vshrl.u32 %v2495, 7
      %v2497 = vsub.s32 %v2494, %v2496
      %v2498 = vrot.slane %v2482, %v2497
      %v2500 = vunpack.c.l.s4 1966171168
      %v2501 = vunpack.c.0.s8 %v2500
      %v2502 = vlaneseq
      %v2503 = vshrl.u32 %v2502, 7
      %v2504 = vsub.s32 %v2501, %v2503
      %v2505 = vrot.slane %v2489, %v2504
      %v2507 = vunpack.c.l.s4 1966171168
      %v2508 = vunpack.c.0.s8 %v2507
      %v2509 = vlaneseq
      %v2510 = vshrl.u32 %v2509, 7
      %v2511 = vsub.s32 %v2508, %v2510
      %v2512 = vrot.slane %v2490, %v2511
      %v2514 = vunpack.c.l.s4 1966171168
      %v2515 = vunpack.c.0.s8 %v2514
      %v2516 = vlaneseq
      %v2517 = vshrl.u32 %v2516, 7
      %v2518 = vsub.s32 %v2515, %v2517
      %v2519 = vrot.slane %v2491, %v2518
      %v2520 = vcombine.high %v2498, %v2498
      %v2521 = vcombine.high %v2505, %v2505
      %v2522 = vcombine.high %v2512, %v2512
      %v2523 = vcombine.high %v2519, %v2519
      %v2524 = vcombine.high %v619, %v619
      %v2526 = vunpack.c.l.s4 1966171168
      %v2527 = vunpack.c.0.s8 %v2526
      %v2528 = vlaneseq
      %v2529 = vshrl.u32 %v2528, 7
      %v2530 = vsub.s32 %v2527, %v2529
      %v2531 = vrot.slane %v619, %v2530
      %v2533 = vunpack.c.l.s4 1966171168
      %v2534 = vunpack.c.0.s8 %v2533
      %v2535 = vlaneseq
      %v2536 = vshrl.u32 %v2535, 7
      %v2537 = vsub.s32 %v2534, %v2536
      %v2538 = vrot.slane %v2524, %v2537
      %v2539 = vcombine.high %v2531, %v2531
      %v2540 = vcombine.high %v2538, %v2538
      %v2542 = vunpack.c.l.s4 1966171168
      %v2543 = vunpack.c.0.s8 %v2542
      %v2544 = vlaneseq
      %v2545 = vshrl.u32 %v2544, 7
      %v2546 = vsub.s32 %v2543, %v2545
      %v2547 = vrot.slane %v2531, %v2546
      %v2549 = vunpack.c.l.s4 1966171168
      %v2550 = vunpack.c.0.s8 %v2549
      %v2551 = vlaneseq
      %v2552 = vshrl.u32 %v2551, 7
      %v2553 = vsub.s32 %v2550, %v2552
      %v2554 = vrot.slane %v2538, %v2553
      %v2556 = vunpack.c.l.s4 1966171168
      %v2557 = vunpack.c.0.s8 %v2556
      %v2558 = vlaneseq
      %v2559 = vshrl.u32 %v2558, 7
      %v2560 = vsub.s32 %v2557, %v2559
      %v2561 = vrot.slane %v2539, %v2560
      %v2563 = vunpack.c.l.s4 1966171168
      %v2564 = vunpack.c.0.s8 %v2563
      %v2565 = vlaneseq
      %v2566 = vshrl.u32 %v2565, 7
      %v2567 = vsub.s32 %v2564, %v2566
      %v2568 = vrot.slane %v2540, %v2567
      %v2569 = vcombine.high %v2547, %v2547
      %v2570 = vcombine.high %v2554, %v2554
      %v2571 = vcombine.high %v2561, %v2561
      %v2572 = vcombine.high %v2568, %v2568
      %v2573 = vcombine.high %v622, %v622
      %v2575 = vunpack.c.l.s4 1966171168
      %v2576 = vunpack.c.0.s8 %v2575
      %v2577 = vlaneseq
      %v2578 = vshrl.u32 %v2577, 7
      %v2579 = vsub.s32 %v2576, %v2578
      %v2580 = vrot.slane %v622, %v2579
      %v2582 = vunpack.c.l.s4 1966171168
      %v2583 = vunpack.c.0.s8 %v2582
      %v2584 = vlaneseq
      %v2585 = vshrl.u32 %v2584, 7
      %v2586 = vsub.s32 %v2583, %v2585
      %v2587 = vrot.slane %v2573, %v2586
      %v2588 = vcombine.high %v2580, %v2580
      %v2589 = vcombine.high %v2587, %v2587
      %v2591 = vunpack.c.l.s4 1966171168
      %v2592 = vunpack.c.0.s8 %v2591
      %v2593 = vlaneseq
      %v2594 = vshrl.u32 %v2593, 7
      %v2595 = vsub.s32 %v2592, %v2594
      %v2596 = vrot.slane %v2580, %v2595
      %v2598 = vunpack.c.l.s4 1966171168
      %v2599 = vunpack.c.0.s8 %v2598
      %v2600 = vlaneseq
      %v2601 = vshrl.u32 %v2600, 7
      %v2602 = vsub.s32 %v2599, %v2601
      %v2603 = vrot.slane %v2587, %v2602
      %v2605 = vunpack.c.l.s4 1966171168
      %v2606 = vunpack.c.0.s8 %v2605
      %v2607 = vlaneseq
      %v2608 = vshrl.u32 %v2607, 7
      %v2609 = vsub.s32 %v2606, %v2608
      %v2610 = vrot.slane %v2588, %v2609
      %v2612 = vunpack.c.l.s4 1966171168
      %v2613 = vunpack.c.0.s8 %v2612
      %v2614 = vlaneseq
      %v2615 = vshrl.u32 %v2614, 7
      %v2616 = vsub.s32 %v2613, %v2615
      %v2617 = vrot.slane %v2589, %v2616
      %v2618 = vcombine.high %v2596, %v2596
      %v2619 = vcombine.high %v2603, %v2603
      %v2620 = vcombine.high %v2610, %v2610
      %v2621 = vcombine.high %v2617, %v2617
      %v2622 = vcombine.high %v627, %v627
      %v2624 = vunpack.c.l.s4 1966171168
      %v2625 = vunpack.c.0.s8 %v2624
      %v2626 = vlaneseq
      %v2627 = vshrl.u32 %v2626, 7
      %v2628 = vsub.s32 %v2625, %v2627
      %v2629 = vrot.slane %v627, %v2628
      %v2631 = vunpack.c.l.s4 1966171168
      %v2632 = vunpack.c.0.s8 %v2631
      %v2633 = vlaneseq
      %v2634 = vshrl.u32 %v2633, 7
      %v2635 = vsub.s32 %v2632, %v2634
      %v2636 = vrot.slane %v2622, %v2635
      %v2637 = vcombine.high %v2629, %v2629
      %v2638 = vcombine.high %v2636, %v2636
      %v2640 = vunpack.c.l.s4 1966171168
      %v2641 = vunpack.c.0.s8 %v2640
      %v2642 = vlaneseq
      %v2643 = vshrl.u32 %v2642, 7
      %v2644 = vsub.s32 %v2641, %v2643
      %v2645 = vrot.slane %v2629, %v2644
      %v2647 = vunpack.c.l.s4 1966171168
      %v2648 = vunpack.c.0.s8 %v2647
      %v2649 = vlaneseq
      %v2650 = vshrl.u32 %v2649, 7
      %v2651 = vsub.s32 %v2648, %v2650
      %v2652 = vrot.slane %v2636, %v2651
      %v2654 = vunpack.c.l.s4 1966171168
      %v2655 = vunpack.c.0.s8 %v2654
      %v2656 = vlaneseq
      %v2657 = vshrl.u32 %v2656, 7
      %v2658 = vsub.s32 %v2655, %v2657
      %v2659 = vrot.slane %v2637, %v2658
      %v2661 = vunpack.c.l.s4 1966171168
      %v2662 = vunpack.c.0.s8 %v2661
      %v2663 = vlaneseq
      %v2664 = vshrl.u32 %v2663, 7
      %v2665 = vsub.s32 %v2662, %v2664
      %v2666 = vrot.slane %v2638, %v2665
      %v2667 = vcombine.high %v2645, %v2645
      %v2668 = vcombine.high %v2652, %v2652
      %v2669 = vcombine.high %v2659, %v2659
      %v2670 = vcombine.high %v2666, %v2666
      %v2671 = vcombine.high %v630, %v630
      %v2673 = vunpack.c.l.s4 1966171168
      %v2674 = vunpack.c.0.s8 %v2673
      %v2675 = vlaneseq
      %v2676 = vshrl.u32 %v2675, 7
      %v2677 = vsub.s32 %v2674, %v2676
      %v2678 = vrot.slane %v630, %v2677
      %v2680 = vunpack.c.l.s4 1966171168
      %v2681 = vunpack.c.0.s8 %v2680
      %v2682 = vlaneseq
      %v2683 = vshrl.u32 %v2682, 7
      %v2684 = vsub.s32 %v2681, %v2683
      %v2685 = vrot.slane %v2671, %v2684
      %v2686 = vcombine.high %v2678, %v2678
      %v2687 = vcombine.high %v2685, %v2685
      %v2689 = vunpack.c.l.s4 1966171168
      %v2690 = vunpack.c.0.s8 %v2689
      %v2691 = vlaneseq
      %v2692 = vshrl.u32 %v2691, 7
      %v2693 = vsub.s32 %v2690, %v2692
      %v2694 = vrot.slane %v2678, %v2693
      %v2696 = vunpack.c.l.s4 1966171168
      %v2697 = vunpack.c.0.s8 %v2696
      %v2698 = vlaneseq
      %v2699 = vshrl.u32 %v2698, 7
      %v2700 = vsub.s32 %v2697, %v2699
      %v2701 = vrot.slane %v2685, %v2700
      %v2703 = vunpack.c.l.s4 1966171168
      %v2704 = vunpack.c.0.s8 %v2703
      %v2705 = vlaneseq
      %v2706 = vshrl.u32 %v2705, 7
      %v2707 = vsub.s32 %v2704, %v2706
      %v2708 = vrot.slane %v2686, %v2707
      %v2710 = vunpack.c.l.s4 1966171168
      %v2711 = vunpack.c.0.s8 %v2710
      %v2712 = vlaneseq
      %v2713 = vshrl.u32 %v2712, 7
      %v2714 = vsub.s32 %v2711, %v2713
      %v2715 = vrot.slane %v2687, %v2714
      %v2716 = vcombine.high %v2694, %v2694
      %v2717 = vcombine.high %v2701, %v2701
      %v2718 = vcombine.high %v2708, %v2708
      %v2719 = vcombine.high %v2715, %v2715
      %v2720 = vlaneseq
      %v2721 = vshrl.u32 %v2720, 7
      %v2722 = vsub.s32 0, %v2721
      %v2723 = vrot.slane %v2351, %v2722
      %v2724 = vlaneseq
      %v2725 = vshrl.u32 %v2724, 7
      %v2726 = vsub.s32 0, %v2725
      %v2727 = vrot.slane %v2365, %v2726
      %v2728 = vlaneseq
      %v2729 = vshrl.u32 %v2728, 7
      %v2730 = vsub.s32 0, %v2729
      %v2731 = vrot.slane %v2373, %v2730
      %v2732 = vlaneseq
      %v2733 = vshrl.u32 %v2732, 7
      %v2734 = vsub.s32 0, %v2733
      %v2735 = vrot.slane %v2375, %v2734
      %v2736 = vlaneseq
      %v2737 = vshrl.u32 %v2736, 7
      %v2738 = vsub.s32 0, %v2737
      %v2739 = vrot.slane %v2358, %v2738
      %v2740 = vlaneseq
      %v2741 = vshrl.u32 %v2740, 7
      %v2742 = vsub.s32 0, %v2741
      %v2743 = vrot.slane %v2372, %v2742
      %v2744 = vlaneseq
      %v2745 = vshrl.u32 %v2744, 7
      %v2746 = vsub.s32 0, %v2745
      %v2747 = vrot.slane %v2374, %v2746
      %v2748 = vlaneseq
      %v2749 = vshrl.u32 %v2748, 7
      %v2750 = vsub.s32 0, %v2749
      %v2751 = vrot.slane %v2376, %v2750
      %v2752 = vlaneseq
      %v2753 = vshrl.u32 %v2752, 7
      %v2754 = vsub.s32 0, %v2753
      %v2755 = vrot.slane %v2400, %v2754
      %v2756 = vlaneseq
      %v2757 = vshrl.u32 %v2756, 7
      %v2758 = vsub.s32 0, %v2757
      %v2759 = vrot.slane %v2414, %v2758
      %v2760 = vlaneseq
      %v2761 = vshrl.u32 %v2760, 7
      %v2762 = vsub.s32 0, %v2761
      %v2763 = vrot.slane %v2422, %v2762
      %v2764 = vlaneseq
      %v2765 = vshrl.u32 %v2764, 7
      %v2766 = vsub.s32 0, %v2765
      %v2767 = vrot.slane %v2424, %v2766
      %v2768 = vlaneseq
      %v2769 = vshrl.u32 %v2768, 7
      %v2770 = vsub.s32 0, %v2769
      %v2771 = vrot.slane %v2407, %v2770
      %v2772 = vlaneseq
      %v2773 = vshrl.u32 %v2772, 7
      %v2774 = vsub.s32 0, %v2773
      %v2775 = vrot.slane %v2421, %v2774
      %v2776 = vlaneseq
      %v2777 = vshrl.u32 %v2776, 7
      %v2778 = vsub.s32 0, %v2777
      %v2779 = vrot.slane %v2423, %v2778
      %v2780 = vlaneseq
      %v2781 = vshrl.u32 %v2780, 7
      %v2782 = vsub.s32 0, %v2781
      %v2783 = vrot.slane %v2425, %v2782
      %v2784 = vlaneseq
      %v2785 = vshrl.u32 %v2784, 7
      %v2786 = vsub.s32 0, %v2785
      %v2787 = vrot.slane %v2449, %v2786
      %v2788 = vlaneseq
      %v2789 = vshrl.u32 %v2788, 7
      %v2790 = vsub.s32 0, %v2789
      %v2791 = vrot.slane %v2463, %v2790
      %v2792 = vlaneseq
      %v2793 = vshrl.u32 %v2792, 7
      %v2794 = vsub.s32 0, %v2793
      %v2795 = vrot.slane %v2471, %v2794
      %v2796 = vlaneseq
      %v2797 = vshrl.u32 %v2796, 7
      %v2798 = vsub.s32 0, %v2797
      %v2799 = vrot.slane %v2473, %v2798
      %v2800 = vlaneseq
      %v2801 = vshrl.u32 %v2800, 7
      %v2802 = vsub.s32 0, %v2801
      %v2803 = vrot.slane %v2456, %v2802
      %v2804 = vlaneseq
      %v2805 = vshrl.u32 %v2804, 7
      %v2806 = vsub.s32 0, %v2805
      %v2807 = vrot.slane %v2470, %v2806
      %v2808 = vlaneseq
      %v2809 = vshrl.u32 %v2808, 7
      %v2810 = vsub.s32 0, %v2809
      %v2811 = vrot.slane %v2472, %v2810
      %v2812 = vlaneseq
      %v2813 = vshrl.u32 %v2812, 7
      %v2814 = vsub.s32 0, %v2813
      %v2815 = vrot.slane %v2474, %v2814
      %v2816 = vlaneseq
      %v2817 = vshrl.u32 %v2816, 7
      %v2818 = vsub.s32 0, %v2817
      %v2819 = vrot.slane %v2498, %v2818
      %v2820 = vlaneseq
      %v2821 = vshrl.u32 %v2820, 7
      %v2822 = vsub.s32 0, %v2821
      %v2823 = vrot.slane %v2512, %v2822
      %v2824 = vlaneseq
      %v2825 = vshrl.u32 %v2824, 7
      %v2826 = vsub.s32 0, %v2825
      %v2827 = vrot.slane %v2520, %v2826
      %v2828 = vlaneseq
      %v2829 = vshrl.u32 %v2828, 7
      %v2830 = vsub.s32 0, %v2829
      %v2831 = vrot.slane %v2522, %v2830
      %v2832 = vlaneseq
      %v2833 = vshrl.u32 %v2832, 7
      %v2834 = vsub.s32 0, %v2833
      %v2835 = vrot.slane %v2505, %v2834
      %v2836 = vlaneseq
      %v2837 = vshrl.u32 %v2836, 7
      %v2838 = vsub.s32 0, %v2837
      %v2839 = vrot.slane %v2519, %v2838
      %v2840 = vlaneseq
      %v2841 = vshrl.u32 %v2840, 7
      %v2842 = vsub.s32 0, %v2841
      %v2843 = vrot.slane %v2521, %v2842
      %v2844 = vlaneseq
      %v2845 = vshrl.u32 %v2844, 7
      %v2846 = vsub.s32 0, %v2845
      %v2847 = vrot.slane %v2523, %v2846
      %v2848 = vlaneseq
      %v2849 = vshrl.u32 %v2848, 7
      %v2850 = vsub.s32 0, %v2849
      %v2851 = vrot.slane %v2547, %v2850
      %v2852 = vlaneseq
      %v2853 = vshrl.u32 %v2852, 7
      %v2854 = vsub.s32 0, %v2853
      %v2855 = vrot.slane %v2561, %v2854
      %v2856 = vlaneseq
      %v2857 = vshrl.u32 %v2856, 7
      %v2858 = vsub.s32 0, %v2857
      %v2859 = vrot.slane %v2569, %v2858
      %v2860 = vlaneseq
      %v2861 = vshrl.u32 %v2860, 7
      %v2862 = vsub.s32 0, %v2861
      %v2863 = vrot.slane %v2571, %v2862
      %v2864 = vlaneseq
      %v2865 = vshrl.u32 %v2864, 7
      %v2866 = vsub.s32 0, %v2865
      %v2867 = vrot.slane %v2554, %v2866
      %v2868 = vlaneseq
      %v2869 = vshrl.u32 %v2868, 7
      %v2870 = vsub.s32 0, %v2869
      %v2871 = vrot.slane %v2568, %v2870
      %v2872 = vlaneseq
      %v2873 = vshrl.u32 %v2872, 7
      %v2874 = vsub.s32 0, %v2873
      %v2875 = vrot.slane %v2570, %v2874
      %v2876 = vlaneseq
      %v2877 = vshrl.u32 %v2876, 7
      %v2878 = vsub.s32 0, %v2877
      %v2879 = vrot.slane %v2572, %v2878
      %v2880 = vlaneseq
      %v2881 = vshrl.u32 %v2880, 7
      %v2882 = vsub.s32 0, %v2881
      %v2883 = vrot.slane %v2596, %v2882
      %v2884 = vlaneseq
      %v2885 = vshrl.u32 %v2884, 7
      %v2886 = vsub.s32 0, %v2885
      %v2887 = vrot.slane %v2610, %v2886
      %v2888 = vlaneseq
      %v2889 = vshrl.u32 %v2888, 7
      %v2890 = vsub.s32 0, %v2889
      %v2891 = vrot.slane %v2618, %v2890
      %v2892 = vlaneseq
      %v2893 = vshrl.u32 %v2892, 7
      %v2894 = vsub.s32 0, %v2893
      %v2895 = vrot.slane %v2620, %v2894
      %v2896 = vlaneseq
      %v2897 = vshrl.u32 %v2896, 7
      %v2898 = vsub.s32 0, %v2897
      %v2899 = vrot.slane %v2603, %v2898
      %v2900 = vlaneseq
      %v2901 = vshrl.u32 %v2900, 7
      %v2902 = vsub.s32 0, %v2901
      %v2903 = vrot.slane %v2617, %v2902
      %v2904 = vlaneseq
      %v2905 = vshrl.u32 %v2904, 7
      %v2906 = vsub.s32 0, %v2905
      %v2907 = vrot.slane %v2619, %v2906
      %v2908 = vlaneseq
      %v2909 = vshrl.u32 %v2908, 7
      %v2910 = vsub.s32 0, %v2909
      %v2911 = vrot.slane %v2621, %v2910
      %v2912 = vlaneseq
      %v2913 = vshrl.u32 %v2912, 7
      %v2914 = vsub.s32 0, %v2913
      %v2915 = vrot.slane %v2645, %v2914
      %v2916 = vlaneseq
      %v2917 = vshrl.u32 %v2916, 7
      %v2918 = vsub.s32 0, %v2917
      %v2919 = vrot.slane %v2659, %v2918
      %v2920 = vlaneseq
      %v2921 = vshrl.u32 %v2920, 7
      %v2922 = vsub.s32 0, %v2921
      %v2923 = vrot.slane %v2667, %v2922
      %v2924 = vlaneseq
      %v2925 = vshrl.u32 %v2924, 7
      %v2926 = vsub.s32 0, %v2925
      %v2927 = vrot.slane %v2669, %v2926
      %v2928 = vlaneseq
      %v2929 = vshrl.u32 %v2928, 7
      %v2930 = vsub.s32 0, %v2929
      %v2931 = vrot.slane %v2652, %v2930
      %v2932 = vlaneseq
      %v2933 = vshrl.u32 %v2932, 7
      %v2934 = vsub.s32 0, %v2933
      %v2935 = vrot.slane %v2666, %v2934
      %v2936 = vlaneseq
      %v2937 = vshrl.u32 %v2936, 7
      %v2938 = vsub.s32 0, %v2937
      %v2939 = vrot.slane %v2668, %v2938
      %v2940 = vlaneseq
      %v2941 = vshrl.u32 %v2940, 7
      %v2942 = vsub.s32 0, %v2941
      %v2943 = vrot.slane %v2670, %v2942
      %v2944 = vlaneseq
      %v2945 = vshrl.u32 %v2944, 7
      %v2946 = vsub.s32 0, %v2945
      %v2947 = vrot.slane %v2694, %v2946
      %v2948 = vlaneseq
      %v2949 = vshrl.u32 %v2948, 7
      %v2950 = vsub.s32 0, %v2949
      %v2951 = vrot.slane %v2708, %v2950
      %v2952 = vlaneseq
      %v2953 = vshrl.u32 %v2952, 7
      %v2954 = vsub.s32 0, %v2953
      %v2955 = vrot.slane %v2716, %v2954
      %v2956 = vlaneseq
      %v2957 = vshrl.u32 %v2956, 7
      %v2958 = vsub.s32 0, %v2957
      %v2959 = vrot.slane %v2718, %v2958
      %v2960 = vlaneseq
      %v2961 = vshrl.u32 %v2960, 7
      %v2962 = vsub.s32 0, %v2961
      %v2963 = vrot.slane %v2701, %v2962
      %v2964 = vlaneseq
      %v2965 = vshrl.u32 %v2964, 7
      %v2966 = vsub.s32 0, %v2965
      %v2967 = vrot.slane %v2715, %v2966
      %v2968 = vlaneseq
      %v2969 = vshrl.u32 %v2968, 7
      %v2970 = vsub.s32 0, %v2969
      %v2971 = vrot.slane %v2717, %v2970
      %v2972 = vlaneseq
      %v2973 = vshrl.u32 %v2972, 7
      %v2974 = vsub.s32 0, %v2973
      %v2975 = vrot.slane %v2719, %v2974
      %v3040 = vadd.f32 %v2723, %v810
      %v3041 = vadd.f32 %v2727, %v810
      %v3042 = vadd.f32 %v2731, %v810
      %v3043 = vadd.f32 %v2735, %v810
      %v3044 = vadd.f32 %v2739, %v810
      %v3045 = vadd.f32 %v2743, %v810
      %v3046 = vadd.f32 %v2747, %v810
      %v3047 = vadd.f32 %v2751, %v810
      %v3048 = vadd.f32 %v2755, %v812
      %v3049 = vadd.f32 %v2759, %v812
      %v3050 = vadd.f32 %v2763, %v812
      %v3051 = vadd.f32 %v2767, %v812
      %v3052 = vadd.f32 %v2771, %v812
      %v3053 = vadd.f32 %v2775, %v812
      %v3054 = vadd.f32 %v2779, %v812
      %v3055 = vadd.f32 %v2783, %v812
      %v3056 = vadd.f32 %v2787, %v814
      %v3057 = vadd.f32 %v2791, %v814
      %v3058 = vadd.f32 %v2795, %v814
      %v3059 = vadd.f32 %v2799, %v814
      %v3060 = vadd.f32 %v2803, %v814
      %v3061 = vadd.f32 %v2807, %v814
      %v3062 = vadd.f32 %v2811, %v814
      %v3063 = vadd.f32 %v2815, %v814
      %v3064 = vadd.f32 %v2819, %v816
      %v3065 = vadd.f32 %v2823, %v816
      %v3066 = vadd.f32 %v2827, %v816
      %v3067 = vadd.f32 %v2831, %v816
      %v3068 = vadd.f32 %v2835, %v816
      %v3069 = vadd.f32 %v2839, %v816
      %v3070 = vadd.f32 %v2843, %v816
      %v3071 = vadd.f32 %v2847, %v816
      %v3072 = vadd.f32 %v2851, %v818
      %v3073 = vadd.f32 %v2855, %v818
      %v3074 = vadd.f32 %v2859, %v818
      %v3075 = vadd.f32 %v2863, %v818
      %v3076 = vadd.f32 %v2867, %v818
      %v3077 = vadd.f32 %v2871, %v818
      %v3078 = vadd.f32 %v2875, %v818
      %v3079 = vadd.f32 %v2879, %v818
      %v3080 = vadd.f32 %v2883, %v820
      %v3081 = vadd.f32 %v2887, %v820
      %v3082 = vadd.f32 %v2891, %v820
      %v3083 = vadd.f32 %v2895, %v820
      %v3084 = vadd.f32 %v2899, %v820
      %v3085 = vadd.f32 %v2903, %v820
      %v3086 = vadd.f32 %v2907, %v820
      %v3087 = vadd.f32 %v2911, %v820
      %v3088 = vadd.f32 %v2915, %v822
      %v3089 = vadd.f32 %v2919, %v822
      %v3090 = vadd.f32 %v2923, %v822
      %v3091 = vadd.f32 %v2927, %v822
      %v3092 = vadd.f32 %v2931, %v822
      %v3093 = vadd.f32 %v2935, %v822
      %v3094 = vadd.f32 %v2939, %v822
      %v3095 = vadd.f32 %v2943, %v822
      %v3096 = vadd.f32 %v2947, %v824
      %v3097 = vadd.f32 %v2951, %v824
      %v3098 = vadd.f32 %v2955, %v824
      %v3099 = vadd.f32 %v2959, %v824
      %v3100 = vadd.f32 %v2963, %v824
      %v3101 = vadd.f32 %v2967, %v824
      %v3102 = vadd.f32 %v2971, %v824
      %v3103 = vadd.f32 %v2975, %v824
      %v3104 = vtanh.pop %v3040
      %v3105 = vtanh.pop %v3041
      %v3106 = vtanh.pop %v3042
      %v3107 = vtanh.pop %v3043
      %v3108 = vtanh.pop %v3044
      %v3109 = vtanh.pop %v3045
      %v3110 = vtanh.pop %v3046
      %v3111 = vtanh.pop %v3047
      %v3112 = vtanh.pop %v3048
      %v3113 = vtanh.pop %v3049
      %v3114 = vtanh.pop %v3050
      %v3115 = vtanh.pop %v3051
      %v3116 = vtanh.pop %v3052
      %v3117 = vtanh.pop %v3053
      %v3118 = vtanh.pop %v3054
      %v3119 = vtanh.pop %v3055
      %v3120 = vtanh.pop %v3056
      %v3121 = vtanh.pop %v3057
      %v3122 = vtanh.pop %v3058
      %v3123 = vtanh.pop %v3059
      %v3124 = vtanh.pop %v3060
      %v3125 = vtanh.pop %v3061
      %v3126 = vtanh.pop %v3062
      %v3127 = vtanh.pop %v3063
      %v3128 = vtanh.pop %v3064
      %v3129 = vtanh.pop %v3065
      %v3130 = vtanh.pop %v3066
      %v3131 = vtanh.pop %v3067
      %v3132 = vtanh.pop %v3068
      %v3133 = vtanh.pop %v3069
      %v3134 = vtanh.pop %v3070
      %v3135 = vtanh.pop %v3071
      %v3136 = vtanh.pop %v3072
      %v3137 = vtanh.pop %v3073
      %v3138 = vtanh.pop %v3074
      %v3139 = vtanh.pop %v3075
      %v3140 = vtanh.pop %v3076
      %v3141 = vtanh.pop %v3077
      %v3142 = vtanh.pop %v3078
      %v3143 = vtanh.pop %v3079
      %v3144 = vtanh.pop %v3080
      %v3145 = vtanh.pop %v3081
      %v3146 = vtanh.pop %v3082
      %v3147 = vtanh.pop %v3083
      %v3148 = vtanh.pop %v3084
      %v3149 = vtanh.pop %v3085
      %v3150 = vtanh.pop %v3086
      %v3151 = vtanh.pop %v3087
      %v3152 = vtanh.pop %v3088
      %v3153 = vtanh.pop %v3089
      %v3154 = vtanh.pop %v3090
      %v3155 = vtanh.pop %v3091
      %v3156 = vtanh.pop %v3092
      %v3157 = vtanh.pop %v3093
      %v3158 = vtanh.pop %v3094
      %v3159 = vtanh.pop %v3095
      %v3160 = vtanh.pop %v3096
      %v3161 = vtanh.pop %v3097
      %v3162 = vtanh.pop %v3098
      %v3163 = vtanh.pop %v3099
      %v3164 = vtanh.pop %v3100
      %v3165 = vtanh.pop %v3101
      %v3166 = vtanh.pop %v3102
      %v3167 = vtanh.pop %v3103
      %v3169 = vlaneseq
      %v3170 = vshrl.u32 %v3169, 7
      %v3171 = vsub.s32 0, %v3170
      %v3172 = vrot.slane %v825, %v3171
      %v3174 = vmul.f32 %v3104, %v3172
      %v3175 = vmul.f32 %v3105, %v3172
      %v3176 = vmul.f32 %v3106, %v3172
      %v3177 = vmul.f32 %v3107, %v3172
      %v3178 = vmul.f32 %v3108, %v3172
      %v3179 = vmul.f32 %v3109, %v3172
      %v3180 = vmul.f32 %v3110, %v3172
      %v3181 = vmul.f32 %v3111, %v3172
      %v3182 = vmul.f32 %v3112, %v3172
      %v3183 = vmul.f32 %v3113, %v3172
      %v3184 = vmul.f32 %v3114, %v3172
      %v3185 = vmul.f32 %v3115, %v3172
      %v3186 = vmul.f32 %v3116, %v3172
      %v3187 = vmul.f32 %v3117, %v3172
      %v3188 = vmul.f32 %v3118, %v3172
      %v3189 = vmul.f32 %v3119, %v3172
      %v3190 = vmul.f32 %v3120, %v3172
      %v3191 = vmul.f32 %v3121, %v3172
      %v3192 = vmul.f32 %v3122, %v3172
      %v3193 = vmul.f32 %v3123, %v3172
      %v3194 = vmul.f32 %v3124, %v3172
      %v3195 = vmul.f32 %v3125, %v3172
      %v3196 = vmul.f32 %v3126, %v3172
      %v3197 = vmul.f32 %v3127, %v3172
      %v3198 = vmul.f32 %v3128, %v3172
      %v3199 = vmul.f32 %v3129, %v3172
      %v3200 = vmul.f32 %v3130, %v3172
      %v3201 = vmul.f32 %v3131, %v3172
      %v3202 = vmul.f32 %v3132, %v3172
      %v3203 = vmul.f32 %v3133, %v3172
      %v3204 = vmul.f32 %v3134, %v3172
      %v3205 = vmul.f32 %v3135, %v3172
      %v3206 = vmul.f32 %v3136, %v3172
      %v3207 = vmul.f32 %v3137, %v3172
      %v3208 = vmul.f32 %v3138, %v3172
      %v3209 = vmul.f32 %v3139, %v3172
      %v3210 = vmul.f32 %v3140, %v3172
      %v3211 = vmul.f32 %v3141, %v3172
      %v3212 = vmul.f32 %v3142, %v3172
      %v3213 = vmul.f32 %v3143, %v3172
      %v3214 = vmul.f32 %v3144, %v3172
      %v3215 = vmul.f32 %v3145, %v3172
      %v3216 = vmul.f32 %v3146, %v3172
      %v3217 = vmul.f32 %v3147, %v3172
      %v3218 = vmul.f32 %v3148, %v3172
      %v3219 = vmul.f32 %v3149, %v3172
      %v3220 = vmul.f32 %v3150, %v3172
      %v3221 = vmul.f32 %v3151, %v3172
      %v3222 = vmul.f32 %v3152, %v3172
      %v3223 = vmul.f32 %v3153, %v3172
      %v3224 = vmul.f32 %v3154, %v3172
      %v3225 = vmul.f32 %v3155, %v3172
      %v3226 = vmul.f32 %v3156, %v3172
      %v3227 = vmul.f32 %v3157, %v3172
      %v3228 = vmul.f32 %v3158, %v3172
      %v3229 = vmul.f32 %v3159, %v3172
      %v3230 = vmul.f32 %v3160, %v3172
      %v3231 = vmul.f32 %v3161, %v3172
      %v3232 = vmul.f32 %v3162, %v3172
      %v3233 = vmul.f32 %v3163, %v3172
      %v3234 = vmul.f32 %v3164, %v3172
      %v3235 = vmul.f32 %v3165, %v3172
      %v3236 = vmul.f32 %v3166, %v3172
      %v3237 = vmul.f32 %v3167, %v3172
      %3238 = vadd.xlane.f32.xlu0 %v3174
      %v3239 = vpop.xlane.xlu0 %3238
      %3240 = vadd.xlane.f32.xlu0 %v3175
      %v3241 = vpop.xlane.xlu0 %3240
      %3242 = vadd.xlane.f32.xlu0 %v3176
      %v3243 = vpop.xlane.xlu0 %3242
      %3244 = vadd.xlane.f32.xlu0 %v3177
      %v3245 = vpop.xlane.xlu0 %3244
      %3246 = vadd.xlane.f32.xlu0 %v3178
      %v3247 = vpop.xlane.xlu0 %3246
      %3248 = vadd.xlane.f32.xlu0 %v3179
      %v3249 = vpop.xlane.xlu0 %3248
      %3250 = vadd.xlane.f32.xlu0 %v3180
      %v3251 = vpop.xlane.xlu0 %3250
      %3252 = vadd.xlane.f32.xlu0 %v3181
      %v3253 = vpop.xlane.xlu0 %3252
      %3254 = vadd.xlane.f32.xlu0 %v3182
      %v3255 = vpop.xlane.xlu0 %3254
      %3256 = vadd.xlane.f32.xlu0 %v3183
      %v3257 = vpop.xlane.xlu0 %3256
      %3258 = vadd.xlane.f32.xlu0 %v3184
      %v3259 = vpop.xlane.xlu0 %3258
      %3260 = vadd.xlane.f32.xlu0 %v3185
      %v3261 = vpop.xlane.xlu0 %3260
      %3262 = vadd.xlane.f32.xlu0 %v3186
      %v3263 = vpop.xlane.xlu0 %3262
      %3264 = vadd.xlane.f32.xlu0 %v3187
      %v3265 = vpop.xlane.xlu0 %3264
      %3266 = vadd.xlane.f32.xlu0 %v3188
      %v3267 = vpop.xlane.xlu0 %3266
      %3268 = vadd.xlane.f32.xlu0 %v3189
      %v3269 = vpop.xlane.xlu0 %3268
      %3270 = vadd.xlane.f32.xlu0 %v3190
      %v3271 = vpop.xlane.xlu0 %3270
      %3272 = vadd.xlane.f32.xlu0 %v3191
      %v3273 = vpop.xlane.xlu0 %3272
      %3274 = vadd.xlane.f32.xlu0 %v3192
      %v3275 = vpop.xlane.xlu0 %3274
      %3276 = vadd.xlane.f32.xlu0 %v3193
      %v3277 = vpop.xlane.xlu0 %3276
      %3278 = vadd.xlane.f32.xlu0 %v3194
      %v3279 = vpop.xlane.xlu0 %3278
      %3280 = vadd.xlane.f32.xlu0 %v3195
      %v3281 = vpop.xlane.xlu0 %3280
      %3282 = vadd.xlane.f32.xlu0 %v3196
      %v3283 = vpop.xlane.xlu0 %3282
      %3284 = vadd.xlane.f32.xlu0 %v3197
      %v3285 = vpop.xlane.xlu0 %3284
      %3286 = vadd.xlane.f32.xlu0 %v3198
      %v3287 = vpop.xlane.xlu0 %3286
      %3288 = vadd.xlane.f32.xlu0 %v3199
      %v3289 = vpop.xlane.xlu0 %3288
      %3290 = vadd.xlane.f32.xlu0 %v3200
      %v3291 = vpop.xlane.xlu0 %3290
      %3292 = vadd.xlane.f32.xlu0 %v3201
      %v3293 = vpop.xlane.xlu0 %3292
      %3294 = vadd.xlane.f32.xlu0 %v3202
      %v3295 = vpop.xlane.xlu0 %3294
      %3296 = vadd.xlane.f32.xlu0 %v3203
      %v3297 = vpop.xlane.xlu0 %3296
      %3298 = vadd.xlane.f32.xlu0 %v3204
      %v3299 = vpop.xlane.xlu0 %3298
      %3300 = vadd.xlane.f32.xlu0 %v3205
      %v3301 = vpop.xlane.xlu0 %3300
      %3302 = vadd.xlane.f32.xlu0 %v3206
      %v3303 = vpop.xlane.xlu0 %3302
      %3304 = vadd.xlane.f32.xlu0 %v3207
      %v3305 = vpop.xlane.xlu0 %3304
      %3306 = vadd.xlane.f32.xlu0 %v3208
      %v3307 = vpop.xlane.xlu0 %3306
      %3308 = vadd.xlane.f32.xlu0 %v3209
      %v3309 = vpop.xlane.xlu0 %3308
      %3310 = vadd.xlane.f32.xlu0 %v3210
      %v3311 = vpop.xlane.xlu0 %3310
      %3312 = vadd.xlane.f32.xlu0 %v3211
      %v3313 = vpop.xlane.xlu0 %3312
      %3314 = vadd.xlane.f32.xlu0 %v3212
      %v3315 = vpop.xlane.xlu0 %3314
      %3316 = vadd.xlane.f32.xlu0 %v3213
      %v3317 = vpop.xlane.xlu0 %3316
      %3318 = vadd.xlane.f32.xlu0 %v3214
      %v3319 = vpop.xlane.xlu0 %3318
      %3320 = vadd.xlane.f32.xlu0 %v3215
      %v3321 = vpop.xlane.xlu0 %3320
      %3322 = vadd.xlane.f32.xlu0 %v3216
      %v3323 = vpop.xlane.xlu0 %3322
      %3324 = vadd.xlane.f32.xlu0 %v3217
      %v3325 = vpop.xlane.xlu0 %3324
      %3326 = vadd.xlane.f32.xlu0 %v3218
      %v3327 = vpop.xlane.xlu0 %3326
      %3328 = vadd.xlane.f32.xlu0 %v3219
      %v3329 = vpop.xlane.xlu0 %3328
      %3330 = vadd.xlane.f32.xlu0 %v3220
      %v3331 = vpop.xlane.xlu0 %3330
      %3332 = vadd.xlane.f32.xlu0 %v3221
      %v3333 = vpop.xlane.xlu0 %3332
      %3334 = vadd.xlane.f32.xlu0 %v3222
      %v3335 = vpop.xlane.xlu0 %3334
      %3336 = vadd.xlane.f32.xlu0 %v3223
      %v3337 = vpop.xlane.xlu0 %3336
      %3338 = vadd.xlane.f32.xlu0 %v3224
      %v3339 = vpop.xlane.xlu0 %3338
      %3340 = vadd.xlane.f32.xlu0 %v3225
      %v3341 = vpop.xlane.xlu0 %3340
      %3342 = vadd.xlane.f32.xlu0 %v3226
      %v3343 = vpop.xlane.xlu0 %3342
      %3344 = vadd.xlane.f32.xlu0 %v3227
      %v3345 = vpop.xlane.xlu0 %3344
      %3346 = vadd.xlane.f32.xlu0 %v3228
      %v3347 = vpop.xlane.xlu0 %3346
      %3348 = vadd.xlane.f32.xlu0 %v3229
      %v3349 = vpop.xlane.xlu0 %3348
      %3350 = vadd.xlane.f32.xlu0 %v3230
      %v3351 = vpop.xlane.xlu0 %3350
      %3352 = vadd.xlane.f32.xlu0 %v3231
      %v3353 = vpop.xlane.xlu0 %3352
      %3354 = vadd.xlane.f32.xlu0 %v3232
      %v3355 = vpop.xlane.xlu0 %3354
      %3356 = vadd.xlane.f32.xlu0 %v3233
      %v3357 = vpop.xlane.xlu0 %3356
      %3358 = vadd.xlane.f32.xlu0 %v3234
      %v3359 = vpop.xlane.xlu0 %3358
      %3360 = vadd.xlane.f32.xlu0 %v3235
      %v3361 = vpop.xlane.xlu0 %3360
      %3362 = vadd.xlane.f32.xlu0 %v3236
      %v3363 = vpop.xlane.xlu0 %3362
      %3364 = vadd.xlane.f32.xlu0 %v3237
      %v3365 = vpop.xlane.xlu0 %3364
      %v3430 = vlaneseq
      %v3431 = vand.u32 %v3430, 127
      %v3432 = vadd.s32 %v3431, 4294967288
      %v3433 = vlaneseq
      %v3434 = vshrl.u32 %v3433, 7
      %v3435 = vsub.s32 %v3432, %v3434
      %v3436 = vrot.slane %v3239, %v3435
      %v3437 = vlaneseq
      %v3438 = vshrl.u32 %v3437, 7
      %v3439 = vsub.s32 %v3432, %v3438
      %v3440 = vrot.slane %v3241, %v3439
      %v3441 = vlaneseq
      %v3442 = vshrl.u32 %v3441, 7
      %v3443 = vsub.s32 %v3432, %v3442
      %v3444 = vrot.slane %v3243, %v3443
      %v3445 = vlaneseq
      %v3446 = vshrl.u32 %v3445, 7
      %v3447 = vsub.s32 %v3432, %v3446
      %v3448 = vrot.slane %v3245, %v3447
      %v3449 = vlaneseq
      %v3450 = vshrl.u32 %v3449, 7
      %v3451 = vsub.s32 %v3432, %v3450
      %v3452 = vrot.slane %v3247, %v3451
      %v3453 = vlaneseq
      %v3454 = vshrl.u32 %v3453, 7
      %v3455 = vsub.s32 %v3432, %v3454
      %v3456 = vrot.slane %v3249, %v3455
      %v3457 = vlaneseq
      %v3458 = vshrl.u32 %v3457, 7
      %v3459 = vsub.s32 %v3432, %v3458
      %v3460 = vrot.slane %v3251, %v3459
      %v3461 = vlaneseq
      %v3462 = vshrl.u32 %v3461, 7
      %v3463 = vsub.s32 %v3432, %v3462
      %v3464 = vrot.slane %v3253, %v3463
      %v3465 = vlaneseq
      %v3466 = vshrl.u32 %v3465, 7
      %v3467 = vsub.s32 %v3432, %v3466
      %v3468 = vrot.slane %v3255, %v3467
      %v3469 = vlaneseq
      %v3470 = vshrl.u32 %v3469, 7
      %v3471 = vsub.s32 %v3432, %v3470
      %v3472 = vrot.slane %v3257, %v3471
      %v3473 = vlaneseq
      %v3474 = vshrl.u32 %v3473, 7
      %v3475 = vsub.s32 %v3432, %v3474
      %v3476 = vrot.slane %v3259, %v3475
      %v3477 = vlaneseq
      %v3478 = vshrl.u32 %v3477, 7
      %v3479 = vsub.s32 %v3432, %v3478
      %v3480 = vrot.slane %v3261, %v3479
      %v3481 = vlaneseq
      %v3482 = vshrl.u32 %v3481, 7
      %v3483 = vsub.s32 %v3432, %v3482
      %v3484 = vrot.slane %v3263, %v3483
      %v3485 = vlaneseq
      %v3486 = vshrl.u32 %v3485, 7
      %v3487 = vsub.s32 %v3432, %v3486
      %v3488 = vrot.slane %v3265, %v3487
      %v3489 = vlaneseq
      %v3490 = vshrl.u32 %v3489, 7
      %v3491 = vsub.s32 %v3432, %v3490
      %v3492 = vrot.slane %v3267, %v3491
      %v3493 = vlaneseq
      %v3494 = vshrl.u32 %v3493, 7
      %v3495 = vsub.s32 %v3432, %v3494
      %v3496 = vrot.slane %v3269, %v3495
      %v3497 = vlaneseq
      %v3498 = vshrl.u32 %v3497, 7
      %v3499 = vsub.s32 %v3432, %v3498
      %v3500 = vrot.slane %v3271, %v3499
      %v3501 = vlaneseq
      %v3502 = vshrl.u32 %v3501, 7
      %v3503 = vsub.s32 %v3432, %v3502
      %v3504 = vrot.slane %v3273, %v3503
      %v3505 = vlaneseq
      %v3506 = vshrl.u32 %v3505, 7
      %v3507 = vsub.s32 %v3432, %v3506
      %v3508 = vrot.slane %v3275, %v3507
      %v3509 = vlaneseq
      %v3510 = vshrl.u32 %v3509, 7
      %v3511 = vsub.s32 %v3432, %v3510
      %v3512 = vrot.slane %v3277, %v3511
      %v3513 = vlaneseq
      %v3514 = vshrl.u32 %v3513, 7
      %v3515 = vsub.s32 %v3432, %v3514
      %v3516 = vrot.slane %v3279, %v3515
      %v3517 = vlaneseq
      %v3518 = vshrl.u32 %v3517, 7
      %v3519 = vsub.s32 %v3432, %v3518
      %v3520 = vrot.slane %v3281, %v3519
      %v3521 = vlaneseq
      %v3522 = vshrl.u32 %v3521, 7
      %v3523 = vsub.s32 %v3432, %v3522
      %v3524 = vrot.slane %v3283, %v3523
      %v3525 = vlaneseq
      %v3526 = vshrl.u32 %v3525, 7
      %v3527 = vsub.s32 %v3432, %v3526
      %v3528 = vrot.slane %v3285, %v3527
      %v3529 = vlaneseq
      %v3530 = vshrl.u32 %v3529, 7
      %v3531 = vsub.s32 %v3432, %v3530
      %v3532 = vrot.slane %v3287, %v3531
      %v3533 = vlaneseq
      %v3534 = vshrl.u32 %v3533, 7
      %v3535 = vsub.s32 %v3432, %v3534
      %v3536 = vrot.slane %v3289, %v3535
      %v3537 = vlaneseq
      %v3538 = vshrl.u32 %v3537, 7
      %v3539 = vsub.s32 %v3432, %v3538
      %v3540 = vrot.slane %v3291, %v3539
      %v3541 = vlaneseq
      %v3542 = vshrl.u32 %v3541, 7
      %v3543 = vsub.s32 %v3432, %v3542
      %v3544 = vrot.slane %v3293, %v3543
      %v3545 = vlaneseq
      %v3546 = vshrl.u32 %v3545, 7
      %v3547 = vsub.s32 %v3432, %v3546
      %v3548 = vrot.slane %v3295, %v3547
      %v3549 = vlaneseq
      %v3550 = vshrl.u32 %v3549, 7
      %v3551 = vsub.s32 %v3432, %v3550
      %v3552 = vrot.slane %v3297, %v3551
      %v3553 = vlaneseq
      %v3554 = vshrl.u32 %v3553, 7
      %v3555 = vsub.s32 %v3432, %v3554
      %v3556 = vrot.slane %v3299, %v3555
      %v3557 = vlaneseq
      %v3558 = vshrl.u32 %v3557, 7
      %v3559 = vsub.s32 %v3432, %v3558
      %v3560 = vrot.slane %v3301, %v3559
      %v3561 = vlaneseq
      %v3562 = vshrl.u32 %v3561, 7
      %v3563 = vsub.s32 %v3432, %v3562
      %v3564 = vrot.slane %v3303, %v3563
      %v3565 = vlaneseq
      %v3566 = vshrl.u32 %v3565, 7
      %v3567 = vsub.s32 %v3432, %v3566
      %v3568 = vrot.slane %v3305, %v3567
      %v3569 = vlaneseq
      %v3570 = vshrl.u32 %v3569, 7
      %v3571 = vsub.s32 %v3432, %v3570
      %v3572 = vrot.slane %v3307, %v3571
      %v3573 = vlaneseq
      %v3574 = vshrl.u32 %v3573, 7
      %v3575 = vsub.s32 %v3432, %v3574
      %v3576 = vrot.slane %v3309, %v3575
      %v3577 = vlaneseq
      %v3578 = vshrl.u32 %v3577, 7
      %v3579 = vsub.s32 %v3432, %v3578
      %v3580 = vrot.slane %v3311, %v3579
      %v3581 = vlaneseq
      %v3582 = vshrl.u32 %v3581, 7
      %v3583 = vsub.s32 %v3432, %v3582
      %v3584 = vrot.slane %v3313, %v3583
      %v3585 = vlaneseq
      %v3586 = vshrl.u32 %v3585, 7
      %v3587 = vsub.s32 %v3432, %v3586
      %v3588 = vrot.slane %v3315, %v3587
      %v3589 = vlaneseq
      %v3590 = vshrl.u32 %v3589, 7
      %v3591 = vsub.s32 %v3432, %v3590
      %v3592 = vrot.slane %v3317, %v3591
      %v3593 = vlaneseq
      %v3594 = vshrl.u32 %v3593, 7
      %v3595 = vsub.s32 %v3432, %v3594
      %v3596 = vrot.slane %v3319, %v3595
      %v3597 = vlaneseq
      %v3598 = vshrl.u32 %v3597, 7
      %v3599 = vsub.s32 %v3432, %v3598
      %v3600 = vrot.slane %v3321, %v3599
      %v3601 = vlaneseq
      %v3602 = vshrl.u32 %v3601, 7
      %v3603 = vsub.s32 %v3432, %v3602
      %v3604 = vrot.slane %v3323, %v3603
      %v3605 = vlaneseq
      %v3606 = vshrl.u32 %v3605, 7
      %v3607 = vsub.s32 %v3432, %v3606
      %v3608 = vrot.slane %v3325, %v3607
      %v3609 = vlaneseq
      %v3610 = vshrl.u32 %v3609, 7
      %v3611 = vsub.s32 %v3432, %v3610
      %v3612 = vrot.slane %v3327, %v3611
      %v3613 = vlaneseq
      %v3614 = vshrl.u32 %v3613, 7
      %v3615 = vsub.s32 %v3432, %v3614
      %v3616 = vrot.slane %v3329, %v3615
      %v3617 = vlaneseq
      %v3618 = vshrl.u32 %v3617, 7
      %v3619 = vsub.s32 %v3432, %v3618
      %v3620 = vrot.slane %v3331, %v3619
      %v3621 = vlaneseq
      %v3622 = vshrl.u32 %v3621, 7
      %v3623 = vsub.s32 %v3432, %v3622
      %v3624 = vrot.slane %v3333, %v3623
      %v3625 = vlaneseq
      %v3626 = vshrl.u32 %v3625, 7
      %v3627 = vsub.s32 %v3432, %v3626
      %v3628 = vrot.slane %v3335, %v3627
      %v3629 = vlaneseq
      %v3630 = vshrl.u32 %v3629, 7
      %v3631 = vsub.s32 %v3432, %v3630
      %v3632 = vrot.slane %v3337, %v3631
      %v3633 = vlaneseq
      %v3634 = vshrl.u32 %v3633, 7
      %v3635 = vsub.s32 %v3432, %v3634
      %v3636 = vrot.slane %v3339, %v3635
      %v3637 = vlaneseq
      %v3638 = vshrl.u32 %v3637, 7
      %v3639 = vsub.s32 %v3432, %v3638
      %v3640 = vrot.slane %v3341, %v3639
      %v3641 = vlaneseq
      %v3642 = vshrl.u32 %v3641, 7
      %v3643 = vsub.s32 %v3432, %v3642
      %v3644 = vrot.slane %v3343, %v3643
      %v3645 = vlaneseq
      %v3646 = vshrl.u32 %v3645, 7
      %v3647 = vsub.s32 %v3432, %v3646
      %v3648 = vrot.slane %v3345, %v3647
      %v3649 = vlaneseq
      %v3650 = vshrl.u32 %v3649, 7
      %v3651 = vsub.s32 %v3432, %v3650
      %v3652 = vrot.slane %v3347, %v3651
      %v3653 = vlaneseq
      %v3654 = vshrl.u32 %v3653, 7
      %v3655 = vsub.s32 %v3432, %v3654
      %v3656 = vrot.slane %v3349, %v3655
      %v3657 = vlaneseq
      %v3658 = vshrl.u32 %v3657, 7
      %v3659 = vsub.s32 %v3432, %v3658
      %v3660 = vrot.slane %v3351, %v3659
      %v3661 = vlaneseq
      %v3662 = vshrl.u32 %v3661, 7
      %v3663 = vsub.s32 %v3432, %v3662
      %v3664 = vrot.slane %v3353, %v3663
      %v3665 = vlaneseq
      %v3666 = vshrl.u32 %v3665, 7
      %v3667 = vsub.s32 %v3432, %v3666
      %v3668 = vrot.slane %v3355, %v3667
      %v3669 = vlaneseq
      %v3670 = vshrl.u32 %v3669, 7
      %v3671 = vsub.s32 %v3432, %v3670
      %v3672 = vrot.slane %v3357, %v3671
      %v3673 = vlaneseq
      %v3674 = vshrl.u32 %v3673, 7
      %v3675 = vsub.s32 %v3432, %v3674
      %v3676 = vrot.slane %v3359, %v3675
      %v3677 = vlaneseq
      %v3678 = vshrl.u32 %v3677, 7
      %v3679 = vsub.s32 %v3432, %v3678
      %v3680 = vrot.slane %v3361, %v3679
      %v3681 = vlaneseq
      %v3682 = vshrl.u32 %v3681, 7
      %v3683 = vsub.s32 %v3432, %v3682
      %v3684 = vrot.slane %v3363, %v3683
      %v3685 = vlaneseq
      %v3686 = vshrl.u32 %v3685, 7
      %v3687 = vsub.s32 %v3432, %v3686
      %v3688 = vrot.slane %v3365, %v3687
      %vm3689 = vcmask 1041409
      %v3690 = vsel %vm3689, %v3440, %v3436
      %vm3691 = vcmask 1042434
      %v3692 = vsel %vm3691, %v3444, %v3690
      %vm3693 = vcmask 1043459
      %v3694 = vsel %vm3693, %v3448, %v3692
      %vm3695 = vcmask 1044484
      %v3696 = vsel %vm3695, %v3452, %v3694
      %vm3697 = vcmask 1045509
      %v3698 = vsel %vm3697, %v3456, %v3696
      %vm3699 = vcmask 1046534
      %v3700 = vsel %vm3699, %v3460, %v3698
      %vm3701 = vcmask 1047559
      %v3702 = vsel %vm3701, %v3464, %v3700
      %v3703 = vsel %vm3689, %v3472, %v3468
      %v3704 = vsel %vm3691, %v3476, %v3703
      %v3705 = vsel %vm3693, %v3480, %v3704
      %v3706 = vsel %vm3695, %v3484, %v3705
      %v3707 = vsel %vm3697, %v3488, %v3706
      %v3708 = vsel %vm3699, %v3492, %v3707
      %v3709 = vsel %vm3701, %v3496, %v3708
      %v3710 = vsel %vm3689, %v3504, %v3500
      %v3711 = vsel %vm3691, %v3508, %v3710
      %v3712 = vsel %vm3693, %v3512, %v3711
      %v3713 = vsel %vm3695, %v3516, %v3712
      %v3714 = vsel %vm3697, %v3520, %v3713
      %v3715 = vsel %vm3699, %v3524, %v3714
      %v3716 = vsel %vm3701, %v3528, %v3715
      %v3717 = vsel %vm3689, %v3536, %v3532
      %v3718 = vsel %vm3691, %v3540, %v3717
      %v3719 = vsel %vm3693, %v3544, %v3718
      %v3720 = vsel %vm3695, %v3548, %v3719
      %v3721 = vsel %vm3697, %v3552, %v3720
      %v3722 = vsel %vm3699, %v3556, %v3721
      %v3723 = vsel %vm3701, %v3560, %v3722
      %v3724 = vsel %vm3689, %v3568, %v3564
      %v3725 = vsel %vm3691, %v3572, %v3724
      %v3726 = vsel %vm3693, %v3576, %v3725
      %v3727 = vsel %vm3695, %v3580, %v3726
      %v3728 = vsel %vm3697, %v3584, %v3727
      %v3729 = vsel %vm3699, %v3588, %v3728
      %v3730 = vsel %vm3701, %v3592, %v3729
      %v3731 = vsel %vm3689, %v3600, %v3596
      %v3732 = vsel %vm3691, %v3604, %v3731
      %v3733 = vsel %vm3693, %v3608, %v3732
      %v3734 = vsel %vm3695, %v3612, %v3733
      %v3735 = vsel %vm3697, %v3616, %v3734
      %v3736 = vsel %vm3699, %v3620, %v3735
      %v3737 = vsel %vm3701, %v3624, %v3736
      %v3738 = vsel %vm3689, %v3632, %v3628
      %v3739 = vsel %vm3691, %v3636, %v3738
      %v3740 = vsel %vm3693, %v3640, %v3739
      %v3741 = vsel %vm3695, %v3644, %v3740
      %v3742 = vsel %vm3697, %v3648, %v3741
      %v3743 = vsel %vm3699, %v3652, %v3742
      %v3744 = vsel %vm3701, %v3656, %v3743
      %v3745 = vsel %vm3689, %v3664, %v3660
      %v3746 = vsel %vm3691, %v3668, %v3745
      %v3747 = vsel %vm3693, %v3672, %v3746
      %v3748 = vsel %vm3695, %v3676, %v3747
      %v3749 = vsel %vm3697, %v3680, %v3748
      %v3750 = vsel %vm3699, %v3684, %v3749
      %v3751 = vsel %vm3701, %v3688, %v3750
      %vm3760 = vcmask 130112
      %3761 = vst.msk [vmem:[#allocation2] sm:$0xff] %vm3760, %v3702
      %3762 = vst.msk [vmem:[#allocation2 + $0x8] sm:$0xff] %vm3760, %v3709
      %3763 = vst.msk [vmem:[#allocation2 + $0x10] sm:$0xff] %vm3760, %v3716
      %3764 = vst.msk [vmem:[#allocation2 + $0x18] sm:$0xff] %vm3760, %v3723
      %3765 = vst.msk [vmem:[#allocation2 + $0x20] sm:$0xff] %vm3760, %v3730
      %3766 = vst.msk [vmem:[#allocation2 + $0x28] sm:$0xff] %vm3760, %v3737
      %3767 = vst.msk [vmem:[#allocation2 + $0x30] sm:$0xff] %vm3760, %v3744
      %3768 = vst.msk [vmem:[#allocation2 + $0x38] sm:$0xff] %vm3760, %v3751
    $region37: #{stage5_forward.3} parent=1 // pred_fallthru
      _
    %v3769 = vld [vmem:[#allocation2] sm:$0xff]
    %v3770 = vld [vmem:[#allocation2 + $0x8] sm:$0xff]
    %v3771 = vld [vmem:[#allocation2 + $0x10] sm:$0xff]
    %v3772 = vld [vmem:[#allocation2 + $0x18] sm:$0xff]
    %v3773 = vld [vmem:[#allocation2 + $0x20] sm:$0xff]
    %v3774 = vld [vmem:[#allocation2 + $0x28] sm:$0xff]
    %v3775 = vld [vmem:[#allocation2 + $0x30] sm:$0xff]
    %v3776 = vld [vmem:[#allocation2 + $0x38] sm:$0xff]
    %s3777 = sld [smem:[#allocation4 + %s35]]
    %v3778 = vstv %s3777
    %s3779 = sld [smem:[#allocation4 + %s827]]
    %v3780 = vstv %s3779
    %s3781 = sld [smem:[#allocation4 + %s831]]
    %v3782 = vstv %s3781
    %s3783 = sld [smem:[#allocation4 + %s835]]
    %v3784 = vstv %s3783
    %s3785 = sld [smem:[#allocation4 + %s839]]
    %v3786 = vstv %s3785
    %s3787 = sld [smem:[#allocation4 + %s843]]
    %v3788 = vstv %s3787
    %s3789 = sld [smem:[#allocation4 + %s847]]
    %v3790 = vstv %s3789
    %s3791 = sld [smem:[#allocation4 + %s851]]
    %v3792 = vstv %s3791
    %v3793 = vlaneseq
    %v3794 = vand.u32 %v3793, 127
    %vm3795 = vcmp.ge.s32.totalorder %v3794, %v3778
    %vm3796 = vcmp.ge.s32.totalorder %v3794, %v3780
    %vm3797 = vcmp.ge.s32.totalorder %v3794, %v3782
    %vm3798 = vcmp.ge.s32.totalorder %v3794, %v3784
    %vm3799 = vcmp.ge.s32.totalorder %v3794, %v3786
    %vm3800 = vcmp.ge.s32.totalorder %v3794, %v3788
    %vm3801 = vcmp.ge.s32.totalorder %v3794, %v3790
    %vm3802 = vcmp.ge.s32.totalorder %v3794, %v3792
    %v3803 = vsel %vm3795, -65504.0, %v3769
    %v3804 = vsel %vm3796, -65504.0, %v3770
    %v3805 = vsel %vm3797, -65504.0, %v3771
    %v3806 = vsel %vm3798, -65504.0, %v3772
    %v3807 = vsel %vm3799, -65504.0, %v3773
    %v3808 = vsel %vm3800, -65504.0, %v3774
    %v3809 = vsel %vm3801, -65504.0, %v3775
    %v3810 = vsel %vm3802, -65504.0, %v3776
    %v3811 = vsel %vm855, %v3803, -inf
    %3812 = vmax.xlane.f32.xlu0 %v3811
    %v3813 = vpop.xlane.xlu0 %3812
    %v3814 = vsel %vm855, %v3804, -inf
    %3815 = vmax.xlane.f32.xlu0 %v3814
    %v3816 = vpop.xlane.xlu0 %3815
    %v3817 = vsel %vm855, %v3805, -inf
    %3818 = vmax.xlane.f32.xlu0 %v3817
    %v3819 = vpop.xlane.xlu0 %3818
    %v3820 = vsel %vm855, %v3806, -inf
    %3821 = vmax.xlane.f32.xlu0 %v3820
    %v3822 = vpop.xlane.xlu0 %3821
    %v3823 = vsel %vm855, %v3807, -inf
    %3824 = vmax.xlane.f32.xlu0 %v3823
    %v3825 = vpop.xlane.xlu0 %3824
    %v3826 = vsel %vm855, %v3808, -inf
    %3827 = vmax.xlane.f32.xlu0 %v3826
    %v3828 = vpop.xlane.xlu0 %3827
    %v3829 = vsel %vm855, %v3809, -inf
    %3830 = vmax.xlane.f32.xlu0 %v3829
    %v3831 = vpop.xlane.xlu0 %3830
    %v3832 = vsel %vm855, %v3810, -inf
    %3833 = vmax.xlane.f32.xlu0 %v3832
    %v3834 = vpop.xlane.xlu0 %3833
    %v3835 = vsub.f32 %v3803, %v3813
    %v3836 = vsub.f32 %v3804, %v3816
    %v3837 = vsub.f32 %v3805, %v3819
    %v3838 = vsub.f32 %v3806, %v3822
    %v3839 = vsub.f32 %v3807, %v3825
    %v3840 = vsub.f32 %v3808, %v3828
    %v3841 = vsub.f32 %v3809, %v3831
    %v3842 = vsub.f32 %v3810, %v3834
    %v3843 = vmul.f32 %v3835, 1.442695
    %v3844 = vpow.pop %v3843
    %v3845 = vmul.f32 %v3836, 1.442695
    %v3846 = vpow.pop %v3845
    %v3847 = vmul.f32 %v3837, 1.442695
    %v3848 = vpow.pop %v3847
    %v3849 = vmul.f32 %v3838, 1.442695
    %v3850 = vpow.pop %v3849
    %v3851 = vmul.f32 %v3839, 1.442695
    %v3852 = vpow.pop %v3851
    %v3853 = vmul.f32 %v3840, 1.442695
    %v3854 = vpow.pop %v3853
    %v3855 = vmul.f32 %v3841, 1.442695
    %v3856 = vpow.pop %v3855
    %v3857 = vmul.f32 %v3842, 1.442695
    %v3858 = vpow.pop %v3857
    %v3859 = vsel %vm855, %v3844, 0.0
    %3860 = vadd.xlane.f32.xlu0 %v3859
    %v3861 = vpop.xlane.xlu0 %3860
    %v3862 = vsel %vm855, %v3846, 0.0
    %3863 = vadd.xlane.f32.xlu0 %v3862
    %v3864 = vpop.xlane.xlu0 %3863
    %v3865 = vsel %vm855, %v3848, 0.0
    %3866 = vadd.xlane.f32.xlu0 %v3865
    %v3867 = vpop.xlane.xlu0 %3866
    %v3868 = vsel %vm855, %v3850, 0.0
    %3869 = vadd.xlane.f32.xlu0 %v3868
    %v3870 = vpop.xlane.xlu0 %3869
    %v3871 = vsel %vm855, %v3852, 0.0
    %3872 = vadd.xlane.f32.xlu0 %v3871
    %v3873 = vpop.xlane.xlu0 %3872
    %v3874 = vsel %vm855, %v3854, 0.0
    %3875 = vadd.xlane.f32.xlu0 %v3874
    %v3876 = vpop.xlane.xlu0 %3875
    %v3877 = vsel %vm855, %v3856, 0.0
    %3878 = vadd.xlane.f32.xlu0 %v3877
    %v3879 = vpop.xlane.xlu0 %3878
    %v3880 = vsel %vm855, %v3858, 0.0
    %3881 = vadd.xlane.f32.xlu0 %v3880
    %v3882 = vpop.xlane.xlu0 %3881
    %v3883 = vrcp.pop %v3861
    %v3884 = vmul.f32 %v3844, %v3883
    %v3885 = vrcp.pop %v3864
    %v3886 = vmul.f32 %v3846, %v3885
    %v3887 = vrcp.pop %v3867
    %v3888 = vmul.f32 %v3848, %v3887
    %v3889 = vrcp.pop %v3870
    %v3890 = vmul.f32 %v3850, %v3889
    %v3891 = vrcp.pop %v3873
    %v3892 = vmul.f32 %v3852, %v3891
    %v3893 = vrcp.pop %v3876
    %v3894 = vmul.f32 %v3854, %v3893
    %v3895 = vrcp.pop %v3879
    %v3896 = vmul.f32 %v3856, %v3895
    %v3897 = vrcp.pop %v3882
    %v3898 = vmul.f32 %v3858, %v3897
    %v3899 = vpack.c.bf16 %v3884, %v3884
    %v3900 = vpack.c.bf16 %v3886, %v3886
    %v3901 = vpack.c.bf16 %v3888, %v3888
    %v3902 = vpack.c.bf16 %v3890, %v3890
    %v3903 = vpack.c.bf16 %v3892, %v3892
    %v3904 = vpack.c.bf16 %v3894, %v3894
    %v3905 = vpack.c.bf16 %v3896, %v3896
    %v3906 = vpack.c.bf16 %v3898, %v3898
    %v3908 = vsel %vm855, %v3899, 0
    %3910 = vmatprep.subr.bf16.mxu0 0
    %3911 = vmatpush1.bf16.msra.mxu0 %v633
    %3912 = vmatprep.subr.bf16.mxu0 0
    %3913 = vmatpush1.bf16.msra.mxu0 0
    %3914 = vmatprep.subr.bf16.mxu0 0
    %3915 = vmatpush1.bf16.msra.mxu0 0
    %3916 = vmatprep.subr.bf16.mxu0 0
    %3917 = vmatpush1.bf16.msra.mxu0 0
    %3918 = vmatprep.subr.bf16.mxu0 0
    %3919 = vmatpush1.bf16.msra.mxu0 0
    %3920 = vmatprep.subr.bf16.mxu0 0
    %3921 = vmatpush1.bf16.msra.mxu0 0
    %3922 = vmatprep.subr.bf16.mxu0 0
    %3923 = vmatpush1.bf16.msra.mxu0 0
    %3924 = vmatprep.subr.bf16.mxu0 0
    %3925 = vmatpush1.bf16.msra.mxu0 0
    %3926 = vmatprep.subr.bf16.mxu0 0
    %3927 = vmatpush1.bf16.msra.mxu0 0
    %3928 = vmatprep.subr.bf16.mxu0 0
    %3929 = vmatpush1.bf16.msra.mxu0 0
    %3930 = vmatprep.subr.bf16.mxu0 0
    %3931 = vmatpush1.bf16.msra.mxu0 0
    %3932 = vmatprep.subr.bf16.mxu0 0
    %3933 = vmatpush1.bf16.msra.mxu0 0
    %3934 = vmatprep.subr.bf16.mxu0 0
    %3935 = vmatpush1.bf16.msra.mxu0 0
    %3936 = vmatprep.subr.bf16.mxu0 0
    %3937 = vmatpush1.bf16.msra.mxu0 0
    %3938 = vmatprep.subr.bf16.mxu0 0
    %3939 = vmatpush1.bf16.msra.mxu0 0
    %3940 = vmatprep.subr.bf16.mxu0 0
    %3941 = vmatpush1.bf16.msra.mxu0 0
    %3942 = vmatprep.mubr.bf16.mxu0 0
    %3943 = vmatmul.mubr.bf16.gmra.mrb[0].mxu0 %v3908
    %v3944 = vpop.f32.mrb[0].mxu0
    %v3945 = vadd.f32 0.0, %v3944
    %v3946 = vpop.f32.mrb[0].mxu0
    %v3947 = vpop.f32.mrb[0].mxu0
    %v3948 = vpop.f32.mrb[0].mxu0
    %3949 = vdwg.mxu0
    %v3951 = vsel %vm855, %v3900, 0
    %3953 = vmatprep.subr.bf16.mxu0 0
    %3954 = vmatpush1.bf16.msra.mxu0 %v634
    %3955 = vmatprep.subr.bf16.mxu0 0
    %3956 = vmatpush1.bf16.msra.mxu0 0
    %3957 = vmatprep.subr.bf16.mxu0 0
    %3958 = vmatpush1.bf16.msra.mxu0 0
    %3959 = vmatprep.subr.bf16.mxu0 0
    %3960 = vmatpush1.bf16.msra.mxu0 0
    %3961 = vmatprep.subr.bf16.mxu0 0
    %3962 = vmatpush1.bf16.msra.mxu0 0
    %3963 = vmatprep.subr.bf16.mxu0 0
    %3964 = vmatpush1.bf16.msra.mxu0 0
    %3965 = vmatprep.subr.bf16.mxu0 0
    %3966 = vmatpush1.bf16.msra.mxu0 0
    %3967 = vmatprep.subr.bf16.mxu0 0
    %3968 = vmatpush1.bf16.msra.mxu0 0
    %3969 = vmatprep.subr.bf16.mxu0 0
    %3970 = vmatpush1.bf16.msra.mxu0 0
    %3971 = vmatprep.subr.bf16.mxu0 0
    %3972 = vmatpush1.bf16.msra.mxu0 0
    %3973 = vmatprep.subr.bf16.mxu0 0
    %3974 = vmatpush1.bf16.msra.mxu0 0
    %3975 = vmatprep.subr.bf16.mxu0 0
    %3976 = vmatpush1.bf16.msra.mxu0 0
    %3977 = vmatprep.subr.bf16.mxu0 0
    %3978 = vmatpush1.bf16.msra.mxu0 0
    %3979 = vmatprep.subr.bf16.mxu0 0
    %3980 = vmatpush1.bf16.msra.mxu0 0
    %3981 = vmatprep.subr.bf16.mxu0 0
    %3982 = vmatpush1.bf16.msra.mxu0 0
    %3983 = vmatprep.subr.bf16.mxu0 0
    %3984 = vmatpush1.bf16.msra.mxu0 0
    %3985 = vmatprep.mubr.bf16.mxu0 0
    %3986 = vmatmul.mubr.bf16.gmra.mrb[0].mxu0 %v3951
    %v3987 = vpop.f32.mrb[0].mxu0
    %v3988 = vadd.f32 0.0, %v3987
    %v3989 = vpop.f32.mrb[0].mxu0
    %v3990 = vpop.f32.mrb[0].mxu0
    %v3991 = vpop.f32.mrb[0].mxu0
    %3992 = vdwg.mxu0
    %v3994 = vsel %vm855, %v3901, 0
    %3996 = vmatprep.subr.bf16.mxu0 0
    %3997 = vmatpush1.bf16.msra.mxu0 %v635
    %3998 = vmatprep.subr.bf16.mxu0 0
    %3999 = vmatpush1.bf16.msra.mxu0 0
    %4000 = vmatprep.subr.bf16.mxu0 0
    %4001 = vmatpush1.bf16.msra.mxu0 0
    %4002 = vmatprep.subr.bf16.mxu0 0
    %4003 = vmatpush1.bf16.msra.mxu0 0
    %4004 = vmatprep.subr.bf16.mxu0 0
    %4005 = vmatpush1.bf16.msra.mxu0 0
    %4006 = vmatprep.subr.bf16.mxu0 0
    %4007 = vmatpush1.bf16.msra.mxu0 0
    %4008 = vmatprep.subr.bf16.mxu0 0
    %4009 = vmatpush1.bf16.msra.mxu0 0
    %4010 = vmatprep.subr.bf16.mxu0 0
    %4011 = vmatpush1.bf16.msra.mxu0 0
    %4012 = vmatprep.subr.bf16.mxu0 0
    %4013 = vmatpush1.bf16.msra.mxu0 0
    %4014 = vmatprep.subr.bf16.mxu0 0
    %4015 = vmatpush1.bf16.msra.mxu0 0
    %4016 = vmatprep.subr.bf16.mxu0 0
    %4017 = vmatpush1.bf16.msra.mxu0 0
    %4018 = vmatprep.subr.bf16.mxu0 0
    %4019 = vmatpush1.bf16.msra.mxu0 0
    %4020 = vmatprep.subr.bf16.mxu0 0
    %4021 = vmatpush1.bf16.msra.mxu0 0
    %4022 = vmatprep.subr.bf16.mxu0 0
    %4023 = vmatpush1.bf16.msra.mxu0 0
    %4024 = vmatprep.subr.bf16.mxu0 0
    %4025 = vmatpush1.bf16.msra.mxu0 0
    %4026 = vmatprep.subr.bf16.mxu0 0
    %4027 = vmatpush1.bf16.msra.mxu0 0
    %4028 = vmatprep.mubr.bf16.mxu0 0
    %4029 = vmatmul.mubr.bf16.gmra.mrb[0].mxu0 %v3994
    %v4030 = vpop.f32.mrb[0].mxu0
    %v4031 = vadd.f32 0.0, %v4030
    %v4032 = vpop.f32.mrb[0].mxu0
    %v4033 = vpop.f32.mrb[0].mxu0
    %v4034 = vpop.f32.mrb[0].mxu0
    %4035 = vdwg.mxu0
    %v4037 = vsel %vm855, %v3902, 0
    %4039 = vmatprep.subr.bf16.mxu0 0
    %4040 = vmatpush1.bf16.msra.mxu0 %v636
    %4041 = vmatprep.subr.bf16.mxu0 0
    %4042 = vmatpush1.bf16.msra.mxu0 0
    %4043 = vmatprep.subr.bf16.mxu0 0
    %4044 = vmatpush1.bf16.msra.mxu0 0
    %4045 = vmatprep.subr.bf16.mxu0 0
    %4046 = vmatpush1.bf16.msra.mxu0 0
    %4047 = vmatprep.subr.bf16.mxu0 0
    %4048 = vmatpush1.bf16.msra.mxu0 0
    %4049 = vmatprep.subr.bf16.mxu0 0
    %4050 = vmatpush1.bf16.msra.mxu0 0
    %4051 = vmatprep.subr.bf16.mxu0 0
    %4052 = vmatpush1.bf16.msra.mxu0 0
    %4053 = vmatprep.subr.bf16.mxu0 0
    %4054 = vmatpush1.bf16.msra.mxu0 0
    %4055 = vmatprep.subr.bf16.mxu0 0
    %4056 = vmatpush1.bf16.msra.mxu0 0
    %4057 = vmatprep.subr.bf16.mxu0 0
    %4058 = vmatpush1.bf16.msra.mxu0 0
    %4059 = vmatprep.subr.bf16.mxu0 0
    %4060 = vmatpush1.bf16.msra.mxu0 0
    %4061 = vmatprep.subr.bf16.mxu0 0
    %4062 = vmatpush1.bf16.msra.mxu0 0
    %4063 = vmatprep.subr.bf16.mxu0 0
    %4064 = vmatpush1.bf16.msra.mxu0 0
    %4065 = vmatprep.subr.bf16.mxu0 0
    %4066 = vmatpush1.bf16.msra.mxu0 0
    %4067 = vmatprep.subr.bf16.mxu0 0
    %4068 = vmatpush1.bf16.msra.mxu0 0
    %4069 = vmatprep.subr.bf16.mxu0 0
    %4070 = vmatpush1.bf16.msra.mxu0 0
    %4071 = vmatprep.mubr.bf16.mxu0 0
    %4072 = vmatmul.mubr.bf16.gmra.mrb[0].mxu0 %v4037
    %v4073 = vpop.f32.mrb[0].mxu0
    %v4074 = vadd.f32 0.0, %v4073
    %v4075 = vpop.f32.mrb[0].mxu0
    %v4076 = vpop.f32.mrb[0].mxu0
    %v4077 = vpop.f32.mrb[0].mxu0
    %4078 = vdwg.mxu0
    %v4080 = vsel %vm855, %v3903, 0
    %4082 = vmatprep.subr.bf16.mxu0 0
    %4083 = vmatpush1.bf16.msra.mxu0 %v637
    %4084 = vmatprep.subr.bf16.mxu0 0
    %4085 = vmatpush1.bf16.msra.mxu0 0
    %4086 = vmatprep.subr.bf16.mxu0 0
    %4087 = vmatpush1.bf16.msra.mxu0 0
    %4088 = vmatprep.subr.bf16.mxu0 0
    %4089 = vmatpush1.bf16.msra.mxu0 0
    %4090 = vmatprep.subr.bf16.mxu0 0
    %4091 = vmatpush1.bf16.msra.mxu0 0
    %4092 = vmatprep.subr.bf16.mxu0 0
    %4093 = vmatpush1.bf16.msra.mxu0 0
    %4094 = vmatprep.subr.bf16.mxu0 0
    %4095 = vmatpush1.bf16.msra.mxu0 0
    %4096 = vmatprep.subr.bf16.mxu0 0
    %4097 = vmatpush1.bf16.msra.mxu0 0
    %4098 = vmatprep.subr.bf16.mxu0 0
    %4099 = vmatpush1.bf16.msra.mxu0 0
    %4100 = vmatprep.subr.bf16.mxu0 0
    %4101 = vmatpush1.bf16.msra.mxu0 0
    %4102 = vmatprep.subr.bf16.mxu0 0
    %4103 = vmatpush1.bf16.msra.mxu0 0
    %4104 = vmatprep.subr.bf16.mxu0 0
    %4105 = vmatpush1.bf16.msra.mxu0 0
    %4106 = vmatprep.subr.bf16.mxu0 0
    %4107 = vmatpush1.bf16.msra.mxu0 0
    %4108 = vmatprep.subr.bf16.mxu0 0
    %4109 = vmatpush1.bf16.msra.mxu0 0
    %4110 = vmatprep.subr.bf16.mxu0 0
    %4111 = vmatpush1.bf16.msra.mxu0 0
    %4112 = vmatprep.subr.bf16.mxu0 0
    %4113 = vmatpush1.bf16.msra.mxu0 0
    %4114 = vmatprep.mubr.bf16.mxu0 0
    %4115 = vmatmul.mubr.bf16.gmra.mrb[0].mxu0 %v4080
    %v4116 = vpop.f32.mrb[0].mxu0
    %v4117 = vadd.f32 0.0, %v4116
    %v4118 = vpop.f32.mrb[0].mxu0
    %v4119 = vpop.f32.mrb[0].mxu0
    %v4120 = vpop.f32.mrb[0].mxu0
    %4121 = vdwg.mxu0
    %v4123 = vsel %vm855, %v3904, 0
    %4125 = vmatprep.subr.bf16.mxu0 0
    %4126 = vmatpush1.bf16.msra.mxu0 %v638
    %4127 = vmatprep.subr.bf16.mxu0 0
    %4128 = vmatpush1.bf16.msra.mxu0 0
    %4129 = vmatprep.subr.bf16.mxu0 0
    %4130 = vmatpush1.bf16.msra.mxu0 0
    %4131 = vmatprep.subr.bf16.mxu0 0
    %4132 = vmatpush1.bf16.msra.mxu0 0
    %4133 = vmatprep.subr.bf16.mxu0 0
    %4134 = vmatpush1.bf16.msra.mxu0 0
    %4135 = vmatprep.subr.bf16.mxu0 0
    %4136 = vmatpush1.bf16.msra.mxu0 0
    %4137 = vmatprep.subr.bf16.mxu0 0
    %4138 = vmatpush1.bf16.msra.mxu0 0
    %4139 = vmatprep.subr.bf16.mxu0 0
    %4140 = vmatpush1.bf16.msra.mxu0 0
    %4141 = vmatprep.subr.bf16.mxu0 0
    %4142 = vmatpush1.bf16.msra.mxu0 0
    %4143 = vmatprep.subr.bf16.mxu0 0
    %4144 = vmatpush1.bf16.msra.mxu0 0
    %4145 = vmatprep.subr.bf16.mxu0 0
    %4146 = vmatpush1.bf16.msra.mxu0 0
    %4147 = vmatprep.subr.bf16.mxu0 0
    %4148 = vmatpush1.bf16.msra.mxu0 0
    %4149 = vmatprep.subr.bf16.mxu0 0
    %4150 = vmatpush1.bf16.msra.mxu0 0
    %4151 = vmatprep.subr.bf16.mxu0 0
    %4152 = vmatpush1.bf16.msra.mxu0 0
    %4153 = vmatprep.subr.bf16.mxu0 0
    %4154 = vmatpush1.bf16.msra.mxu0 0
    %4155 = vmatprep.subr.bf16.mxu0 0
    %4156 = vmatpush1.bf16.msra.mxu0 0
    %4157 = vmatprep.mubr.bf16.mxu0 0
    %4158 = vmatmul.mubr.bf16.gmra.mrb[0].mxu0 %v4123
    %v4159 = vpop.f32.mrb[0].mxu0
    %v4160 = vadd.f32 0.0, %v4159
    %v4161 = vpop.f32.mrb[0].mxu0
    %v4162 = vpop.f32.mrb[0].mxu0
    %v4163 = vpop.f32.mrb[0].mxu0
    %4164 = vdwg.mxu0
    %v4166 = vsel %vm855, %v3905, 0
    %4168 = vmatprep.subr.bf16.mxu0 0
    %4169 = vmatpush1.bf16.msra.mxu0 %v639
    %4170 = vmatprep.subr.bf16.mxu0 0
    %4171 = vmatpush1.bf16.msra.mxu0 0
    %4172 = vmatprep.subr.bf16.mxu0 0
    %4173 = vmatpush1.bf16.msra.mxu0 0
    %4174 = vmatprep.subr.bf16.mxu0 0
    %4175 = vmatpush1.bf16.msra.mxu0 0
    %4176 = vmatprep.subr.bf16.mxu0 0
    %4177 = vmatpush1.bf16.msra.mxu0 0
    %4178 = vmatprep.subr.bf16.mxu0 0
    %4179 = vmatpush1.bf16.msra.mxu0 0
    %4180 = vmatprep.subr.bf16.mxu0 0
    %4181 = vmatpush1.bf16.msra.mxu0 0
    %4182 = vmatprep.subr.bf16.mxu0 0
    %4183 = vmatpush1.bf16.msra.mxu0 0
    %4184 = vmatprep.subr.bf16.mxu0 0
    %4185 = vmatpush1.bf16.msra.mxu0 0
    %4186 = vmatprep.subr.bf16.mxu0 0
    %4187 = vmatpush1.bf16.msra.mxu0 0
    %4188 = vmatprep.subr.bf16.mxu0 0
    %4189 = vmatpush1.bf16.msra.mxu0 0
    %4190 = vmatprep.subr.bf16.mxu0 0
    %4191 = vmatpush1.bf16.msra.mxu0 0
    %4192 = vmatprep.subr.bf16.mxu0 0
    %4193 = vmatpush1.bf16.msra.mxu0 0
    %4194 = vmatprep.subr.bf16.mxu0 0
    %4195 = vmatpush1.bf16.msra.mxu0 0
    %4196 = vmatprep.subr.bf16.mxu0 0
    %4197 = vmatpush1.bf16.msra.mxu0 0
    %4198 = vmatprep.subr.bf16.mxu0 0
    %4199 = vmatpush1.bf16.msra.mxu0 0
    %4200 = vmatprep.mubr.bf16.mxu0 0
    %4201 = vmatmul.mubr.bf16.gmra.mrb[0].mxu0 %v4166
    %v4202 = vpop.f32.mrb[0].mxu0
    %v4203 = vadd.f32 0.0, %v4202
    %v4204 = vpop.f32.mrb[0].mxu0
    %v4205 = vpop.f32.mrb[0].mxu0
    %v4206 = vpop.f32.mrb[0].mxu0
    %4207 = vdwg.mxu0
    %v4209 = vsel %vm855, %v3906, 0
    %4211 = vmatprep.subr.bf16.mxu0 0
    %4212 = vmatpush1.bf16.msra.mxu0 %v640
    %4213 = vmatprep.subr.bf16.mxu0 0
    %4214 = vmatpush1.bf16.msra.mxu0 0
    %4215 = vmatprep.subr.bf16.mxu0 0
    %4216 = vmatpush1.bf16.msra.mxu0 0
    %4217 = vmatprep.subr.bf16.mxu0 0
    %4218 = vmatpush1.bf16.msra.mxu0 0
    %4219 = vmatprep.subr.bf16.mxu0 0
    %4220 = vmatpush1.bf16.msra.mxu0 0
    %4221 = vmatprep.subr.bf16.mxu0 0
    %4222 = vmatpush1.bf16.msra.mxu0 0
    %4223 = vmatprep.subr.bf16.mxu0 0
    %4224 = vmatpush1.bf16.msra.mxu0 0
    %4225 = vmatprep.subr.bf16.mxu0 0
    %4226 = vmatpush1.bf16.msra.mxu0 0
    %4227 = vmatprep.subr.bf16.mxu0 0
    %4228 = vmatpush1.bf16.msra.mxu0 0
    %4229 = vmatprep.subr.bf16.mxu0 0
    %4230 = vmatpush1.bf16.msra.mxu0 0
    %4231 = vmatprep.subr.bf16.mxu0 0
    %4232 = vmatpush1.bf16.msra.mxu0 0
    %4233 = vmatprep.subr.bf16.mxu0 0
    %4234 = vmatpush1.bf16.msra.mxu0 0
    %4235 = vmatprep.subr.bf16.mxu0 0
    %4236 = vmatpush1.bf16.msra.mxu0 0
    %4237 = vmatprep.subr.bf16.mxu0 0
    %4238 = vmatpush1.bf16.msra.mxu0 0
    %4239 = vmatprep.subr.bf16.mxu0 0
    %4240 = vmatpush1.bf16.msra.mxu0 0
    %4241 = vmatprep.subr.bf16.mxu0 0
    %4242 = vmatpush1.bf16.msra.mxu0 0
    %4243 = vmatprep.mubr.bf16.mxu0 0
    %4244 = vmatmul.mubr.bf16.gmra.mrb[0].mxu0 %v4209
    %v4245 = vpop.f32.mrb[0].mxu0
    %v4246 = vadd.f32 0.0, %v4245
    %v4247 = vpop.f32.mrb[0].mxu0
    %v4248 = vpop.f32.mrb[0].mxu0
    %v4249 = vpop.f32.mrb[0].mxu0
    %4250 = vdwg.mxu0
    %v4251 = vcombine.low %v3945, %v4031
    %v4252 = vcombine.high %v3945, %v4031
    %v4254 = vunpack.c.l.s4 1983009808
    %v4255 = vunpack.c.0.s8 %v4254
    %v4256 = vlaneseq
    %v4257 = vshrl.u32 %v4256, 7
    %v4258 = vsub.s32 %v4255, %v4257
    %v4259 = vrot.slane %v4251, %v4258
    %v4261 = vunpack.c.l.s4 1983009808
    %v4262 = vunpack.c.0.s8 %v4261
    %v4263 = vlaneseq
    %v4264 = vshrl.u32 %v4263, 7
    %v4265 = vsub.s32 %v4262, %v4264
    %v4266 = vrot.slane %v4252, %v4265
    %v4267 = vcombine.low %v3988, %v4074
    %v4268 = vcombine.high %v3988, %v4074
    %v4270 = vunpack.c.l.s4 1983009808
    %v4271 = vunpack.c.0.s8 %v4270
    %v4272 = vlaneseq
    %v4273 = vshrl.u32 %v4272, 7
    %v4274 = vsub.s32 %v4271, %v4273
    %v4275 = vrot.slane %v4267, %v4274
    %v4277 = vunpack.c.l.s4 1983009808
    %v4278 = vunpack.c.0.s8 %v4277
    %v4279 = vlaneseq
    %v4280 = vshrl.u32 %v4279, 7
    %v4281 = vsub.s32 %v4278, %v4280
    %v4282 = vrot.slane %v4268, %v4281
    %v4283 = vcombine.low %v4117, %v4203
    %v4284 = vcombine.high %v4117, %v4203
    %v4286 = vunpack.c.l.s4 1983009808
    %v4287 = vunpack.c.0.s8 %v4286
    %v4288 = vlaneseq
    %v4289 = vshrl.u32 %v4288, 7
    %v4290 = vsub.s32 %v4287, %v4289
    %v4291 = vrot.slane %v4283, %v4290
    %v4293 = vunpack.c.l.s4 1983009808
    %v4294 = vunpack.c.0.s8 %v4293
    %v4295 = vlaneseq
    %v4296 = vshrl.u32 %v4295, 7
    %v4297 = vsub.s32 %v4294, %v4296
    %v4298 = vrot.slane %v4284, %v4297
    %v4299 = vcombine.low %v4160, %v4246
    %v4300 = vcombine.high %v4160, %v4246
    %v4302 = vunpack.c.l.s4 1983009808
    %v4303 = vunpack.c.0.s8 %v4302
    %v4304 = vlaneseq
    %v4305 = vshrl.u32 %v4304, 7
    %v4306 = vsub.s32 %v4303, %v4305
    %v4307 = vrot.slane %v4299, %v4306
    %v4309 = vunpack.c.l.s4 1983009808
    %v4310 = vunpack.c.0.s8 %v4309
    %v4311 = vlaneseq
    %v4312 = vshrl.u32 %v4311, 7
    %v4313 = vsub.s32 %v4310, %v4312
    %v4314 = vrot.slane %v4300, %v4313
    %v4315 = vcombine.low %v4259, %v4275
    %v4316 = vcombine.high %v4259, %v4275
    %v4318 = vunpack.c.l.s4 1934713408
    %v4319 = vunpack.c.0.s8 %v4318
    %v4320 = vlaneseq
    %v4321 = vshrl.u32 %v4320, 7
    %v4322 = vsub.s32 %v4319, %v4321
    %v4323 = vrot.slane %v4315, %v4322
    %v4325 = vunpack.c.l.s4 1934713408
    %v4326 = vunpack.c.0.s8 %v4325
    %v4327 = vlaneseq
    %v4328 = vshrl.u32 %v4327, 7
    %v4329 = vsub.s32 %v4326, %v4328
    %v4330 = vrot.slane %v4316, %v4329
    %v4331 = vcombine.low %v4266, %v4282
    %v4332 = vcombine.high %v4266, %v4282
    %v4334 = vunpack.c.l.s4 1934713408
    %v4335 = vunpack.c.0.s8 %v4334
    %v4336 = vlaneseq
    %v4337 = vshrl.u32 %v4336, 7
    %v4338 = vsub.s32 %v4335, %v4337
    %v4339 = vrot.slane %v4331, %v4338
    %v4341 = vunpack.c.l.s4 1934713408
    %v4342 = vunpack.c.0.s8 %v4341
    %v4343 = vlaneseq
    %v4344 = vshrl.u32 %v4343, 7
    %v4345 = vsub.s32 %v4342, %v4344
    %v4346 = vrot.slane %v4332, %v4345
    %v4347 = vcombine.low %v4291, %v4307
    %v4348 = vcombine.high %v4291, %v4307
    %v4350 = vunpack.c.l.s4 1934713408
    %v4351 = vunpack.c.0.s8 %v4350
    %v4352 = vlaneseq
    %v4353 = vshrl.u32 %v4352, 7
    %v4354 = vsub.s32 %v4351, %v4353
    %v4355 = vrot.slane %v4347, %v4354
    %v4357 = vunpack.c.l.s4 1934713408
    %v4358 = vunpack.c.0.s8 %v4357
    %v4359 = vlaneseq
    %v4360 = vshrl.u32 %v4359, 7
    %v4361 = vsub.s32 %v4358, %v4360
    %v4362 = vrot.slane %v4348, %v4361
    %v4363 = vcombine.low %v4298, %v4314
    %v4364 = vcombine.high %v4298, %v4314
    %v4366 = vunpack.c.l.s4 1934713408
    %v4367 = vunpack.c.0.s8 %v4366
    %v4368 = vlaneseq
    %v4369 = vshrl.u32 %v4368, 7
    %v4370 = vsub.s32 %v4367, %v4369
    %v4371 = vrot.slane %v4363, %v4370
    %v4373 = vunpack.c.l.s4 1934713408
    %v4374 = vunpack.c.0.s8 %v4373
    %v4375 = vlaneseq
    %v4376 = vshrl.u32 %v4375, 7
    %v4377 = vsub.s32 %v4374, %v4376
    %v4378 = vrot.slane %v4364, %v4377
    %v4379 = vcombine.low %v4323, %v4355
    %v4380 = vcombine.high %v4323, %v4355
    %v4381 = vcombine.low %v4330, %v4362
    %v4382 = vcombine.high %v4330, %v4362
    %v4383 = vcombine.low %v4339, %v4371
    %v4384 = vcombine.high %v4339, %v4371
    %v4385 = vcombine.low %v4346, %v4378
    %v4386 = vcombine.high %v4346, %v4378
    %4387 = vst [vmem:[#allocation5] sm:$0xff] %v4379
    %4388 = vst [vmem:[#allocation5 + $0x8] sm:$0xff] %v4380
    %4389 = vst [vmem:[#allocation5 + $0x10] sm:$0xff] %v4381
    %4390 = vst [vmem:[#allocation5 + $0x18] sm:$0xff] %v4382
    %4391 = vst [vmem:[#allocation5 + $0x20] sm:$0xff] %v4383
    %4392 = vst [vmem:[#allocation5 + $0x28] sm:$0xff] %v4384
    %4393 = vst [vmem:[#allocation5 + $0x30] sm:$0xff] %v4385
    %4394 = vst [vmem:[#allocation5 + $0x38] sm:$0xff] %v4386
    // Predicated region
    $region38: #{stage5_forward.3} parent=1 // pred_check
      _
    $region39: #{stage5_forward.3} parent=1 // pred_check_branch
      %4396 = sbr.rel (0) target = $region41
    $region40: #{stage5_forward.3} parent=1 // pred_region
      %s4398 = ssub.s32 1024, 1024
      %4399 = vsyncadd [#allocation6], %s4398
      %s4400 = sshll.u32 [#allocation5], 4
      %s4401 = int_to_ptr.vmem [resolvable:$true] %s4400
      %4406 = dma.vmem_to_hbm [thread:$0]  %s4401, 1024, %s8, [#allocation6], 128, 128, 8
    $region41: #{stage5_forward.3} parent=1 // pred_fallthru
      _
    // Predicated region
    $region42: #{stage5_forward.3} parent=1 // pred_check
      _
    $region43: #{stage5_forward.3} parent=1 // pred_check_branch
      %4408 = sbr.rel (0) target = $region45
    $region44: #{stage5_forward.3} parent=1 // pred_region
      %4409 = dma.done [#allocation6], 1024
    $region45: #{stage5_forward.3} parent=1 // pred_fallthru
      _
    %4410 = vsyncpa [#allocation6], 1

</llo_original>
